<compile_context>
chip_gen: v7x
topology: tpu7x:2x2x1
jax: 0.10.0
libtpu: 0.0.40
codegen_flags: <defaults>
</compile_context>

<pallas_src>
import functools

import numpy as np
import jax
import jax.numpy as jnp
from jax.experimental import pallas as pl
from jax.experimental.pallas import tpu as pltpu

KSIZE = 7
PAD = (KSIZE - 1) // 2
BN_EPS = 1e-5          # PyTorch BatchNorm2d default
POOL_CHUNK = 8         # channels per streaming-pool step (one sublane group)


def spatial_gate_kernel(w_ref, bn_ref, rmask_ref, cmask_ref, x_ref, out_ref,
                        *, width):
    # w_ref     : SMEM (2*7*7,) f32  conv weight, flattened [ci, ki, kj]
    # bn_ref    : SMEM (2,)     f32  folded eval-mode BN (scale, shift)
    # rmask_ref : VMEM (7, HW)  f32  row-validity mask per ki (1.0 / 0.0)
    # cmask_ref : VMEM (7, HW)  f32  col-validity mask per kj (1.0 / 0.0)
    # x_ref     : VMEM (1, C, HW)    one batch element, lane-dense
    # out_ref   : VMEM (1, C, HW)
    C = x_ref.shape[1]
    HW = x_ref.shape[2]

    # ---- ChannelPool: fused streaming max + sum over channels (one pass) ----
    chunk = x_ref[0, 0:min(POOL_CHUNK, C), :].astype(jnp.float32)
    cmax = jnp.max(chunk, axis=0, keepdims=True)            # (1, HW)
    csum = jnp.sum(chunk, axis=0, keepdims=True)            # (1, HW)
    for c0 in range(POOL_CHUNK, C, POOL_CHUNK):
        c1 = min(c0 + POOL_CHUNK, C)
        chunk = x_ref[0, c0:c1, :].astype(jnp.float32)
        cmax = jnp.maximum(cmax, jnp.max(chunk, axis=0, keepdims=True))
        csum = csum + jnp.sum(chunk, axis=0, keepdims=True)
    cmean = csum * (1.0 / C)

    # ---- Conv2d(2 -> 1, 7x7, pad=3, no bias) on the flat pooled maps ----
    # For output p = h*W + w, tap (ki, kj) needs pooled[(p + off) mod HW] with
    # off = (ki-3)*W + (kj-3); a cyclic lane shift gives exactly that value for
    # every in-range position, and the precomputed row/col masks zero the
    # positions that fall into the implicit zero padding.
    acc = jnp.zeros((1, HW), jnp.float32)
    for ki in range(KSIZE):
        acc_k = jnp.zeros((1, HW), jnp.float32)              # short MAC chain
        for kj in range(KSIZE):
            off = (ki - PAD) * width + (kj - PAD)
            sh = (-off) % HW                                  # jnp.roll shift
            if sh == 0:
                rmax, rmean = cmax, cmean
            else:
                rmax = pltpu.roll(cmax, sh, axis=1)           # XLU lane shift
                rmean = pltpu.roll(cmean, sh, axis=1)
            w_max = w_ref[ki * KSIZE + kj]                    # SMEM scalars
            w_mean = w_ref[KSIZE * KSIZE + ki * KSIZE + kj]
            tap = rmax * w_max + rmean * w_mean
            acc_k = acc_k + tap * cmask_ref[kj:kj + 1, :]
        acc = acc + acc_k * rmask_ref[ki:ki + 1, :]

    # ---- BatchNorm2d(1) eval mode (folded) + sigmoid gate ----
    y = acc * bn_ref[0] + bn_ref[1]
    gate = pl.reciprocal(1.0 + jnp.exp(-y), approx=False)    # (1, HW), exact

    # ---- Apply: re-read x from VMEM (cheap) and store lane-dense ----
    # Multiply in x's dtype: bf16 apply on v6e/v7x when x is bf16, f32 here.
    out_ref[0] = x_ref[0] * gate.astype(x_ref.dtype)


def spatial_gate(x, conv_w, bn_gamma, bn_beta, bn_mean, bn_var):
    """x: [B, C, H, W]; conv_w: [1, 2, 7, 7]; bn_*: [1] (single BN channel)."""
    B, C, H, W = x.shape
    assert conv_w.shape == (1, 2, KSIZE, KSIZE)
    HW = H * W

    # Lane-dense layout: flatten H*W into the last (lane) dimension. Free.
    x_flat = x.reshape(B, C, HW)

    # Fold eval-mode BatchNorm into one scale + shift scalar (exact).
    inv_std = 1.0 / jnp.sqrt(bn_var.astype(jnp.float32) + BN_EPS)
    bn_scale = bn_gamma.astype(jnp.float32) * inv_std
    bn_shift = bn_beta.astype(jnp.float32) - bn_mean.astype(jnp.float32) * bn_scale
    bn_params = jnp.concatenate([bn_scale.reshape(1), bn_shift.reshape(1)])

    w_flat = conv_w.reshape(-1).astype(jnp.float32)           # (98,)

    # Border-validity masks of the implicit zero padding, one per kernel row /
    # column offset, built host-side (avoids in-kernel vector div/mod).
    pos = np.arange(HW)
    row = pos // W
    col = pos % W
    row_ok = np.stack(
        [((row + ki - PAD) >= 0) & ((row + ki - PAD) < H) for ki in range(KSIZE)]
    ).astype(np.float32)                                      # (7, HW)
    col_ok = np.stack(
        [((col + kj - PAD) >= 0) & ((col + kj - PAD) < W) for kj in range(KSIZE)]
    ).astype(np.float32)                                      # (7, HW)
    row_ok = jnp.asarray(row_ok)
    col_ok = jnp.asarray(col_ok)

    smem_spec = pl.BlockSpec(memory_space=pltpu.MemorySpace.SMEM)
    mask_spec = pl.BlockSpec((KSIZE, HW), lambda b: (0, 0))
    x_spec = pl.BlockSpec((1, C, HW), lambda b: (b, 0, 0))

    # VMEM budget: double-buffered (1, C, HW) blocks for x and out + masks.
    block_bytes = C * HW * x.dtype.itemsize
    vmem_limit = int(min(max(4 * block_bytes + 2 * 8 * HW * 4 + (1 << 20),
                             32 << 20), 128 << 20))

    out_flat = pl.pallas_call(
        functools.partial(spatial_gate_kernel, width=W),
        out_shape=jax.ShapeDtypeStruct((B, C, HW), x.dtype),
        grid_spec=pltpu.PrefetchScalarGridSpec(
            num_scalar_prefetch=0,
            grid=(B,),
            in_specs=[smem_spec, smem_spec, mask_spec, mask_spec, x_spec],
            out_specs=x_spec,
        ),
        compiler_params=pltpu.CompilerParams(
            dimension_semantics=("parallel",),
            vmem_limit_bytes=vmem_limit),
    )(w_flat, bn_params, row_ok, col_ok, x_flat)

    return out_flat.reshape(B, C, H, W)


def reference(x, conv_w, bn_gamma, bn_beta, bn_mean, bn_var):
    """Pure-JAX reference mirroring the PyTorch forward (eval-mode BN)."""
    pooled = jnp.concatenate(
        [jnp.max(x, axis=1, keepdims=True),
         jnp.mean(x, axis=1, keepdims=True)], axis=1)              # (B,2,H,W)
    y = jax.lax.conv_general_dilated(
        pooled.astype(jnp.float32), conv_w.astype(jnp.float32),
        window_strides=(1, 1), padding=((PAD, PAD), (PAD, PAD)),
        dimension_numbers=("NCHW", "OIHW", "NCHW"),
        precision=jax.lax.Precision.HIGHEST)                       # (B,1,H,W)
    y = (y - bn_mean.reshape(1, -1, 1, 1)) * jax.lax.rsqrt(
        bn_var.reshape(1, -1, 1, 1) + BN_EPS) * bn_gamma.reshape(1, -1, 1, 1) \
        + bn_beta.reshape(1, -1, 1, 1)
    return x * jax.nn.sigmoid(y)


if __name__ == "__main__":
    B, C, H, W = 2, 32, 16, 16
    key = jax.random.PRNGKey(0)
    kx, kw, kg, kb, km, kv = jax.random.split(key, 6)
    x = jax.random.normal(kx, (B, C, H, W), jnp.float32)
    conv_w = jax.random.normal(kw, (1, 2, KSIZE, KSIZE), jnp.float32) * 0.1
    bn_gamma = 1.0 + 0.1 * jax.random.normal(kg, (1,), jnp.float32)
    bn_beta = 0.1 * jax.random.normal(kb, (1,), jnp.float32)
    bn_mean = 0.1 * jax.random.normal(km, (1,), jnp.float32)
    bn_var = jax.random.uniform(kv, (1,), jnp.float32, minval=0.5, maxval=1.5)

    out = spatial_gate(x, conv_w, bn_gamma, bn_beta, bn_mean, bn_var)
    out = jax.block_until_ready(out)

    ref = reference(x, conv_w, bn_gamma, bn_beta, bn_mean, bn_var)
    assert out.shape == (B, C, H, W)
    max_err = float(jnp.max(jnp.abs(out - ref)))
    assert jnp.allclose(out, ref, atol=1e-4, rtol=1e-4), max_err
    print("KERNEL_OK")
</pallas_src>

<mosaic_0001>
module attributes {stable_mosaic.version = 11 : i64} {
  func.func @spatial_gate_kernel(%arg0: i32, %arg1: memref<98xf32, #tpu.memory_space<smem>>, %arg2: memref<2xf32, #tpu.memory_space<smem>>, %arg3: memref<7x256xf32, #tpu.memory_space<vmem>>, %arg4: memref<7x256xf32, #tpu.memory_space<vmem>>, %arg5: memref<1x32x256xf32, #tpu.memory_space<vmem>>, %arg6: memref<1x32x256xf32, #tpu.memory_space<vmem>>) attributes {dimension_semantics = [#tpu.dimension_semantics<parallel>], iteration_bounds = array<i64: 2>, scalar_prefetch = 0 : i64, scratch_operands = 0 : i64, tpu.core_type = #tpu.core_type<tc>, window_params = [{transform_indices = @transform_0, window_bounds = array<i64: 98>}, {transform_indices = @transform_1, window_bounds = array<i64: 2>}, {pipeline_mode = #tpu.pipeline_mode<synchronous>, transform_indices = @transform_2, window_bounds = array<i64: 7, 256>}, {pipeline_mode = #tpu.pipeline_mode<synchronous>, transform_indices = @transform_3, window_bounds = array<i64: 7, 256>}, {transform_indices = @transform_4, window_bounds = array<i64: 1, 32, 256>}, {transform_indices = @transform_5, window_bounds = array<i64: 1, 32, 256>}]} {
    %c0 = arith.constant 0 : index
    %c0_0 = arith.constant 0 : index
    %c0_1 = arith.constant 0 : index
    %0 = vector.load %arg5[%c0, %c0_0, %c0_1] : memref<1x32x256xf32, #tpu.memory_space<vmem>>, vector<1x8x256xf32>
    %1 = vector.shape_cast %0 : vector<1x8x256xf32> to vector<8x256xf32>
    %cst = arith.constant dense<0xFF800000> : vector<256xf32>
    %2 = vector.multi_reduction <maximumf>, %1, %cst [0] : vector<8x256xf32> to vector<256xf32>
    %3 = vector.shape_cast %2 : vector<256xf32> to vector<1x256xf32>
    %cst_2 = arith.constant dense<0.000000e+00> : vector<256xf32>
    %4 = vector.multi_reduction <add>, %1, %cst_2 [0] : vector<8x256xf32> to vector<256xf32>
    %5 = vector.shape_cast %4 : vector<256xf32> to vector<1x256xf32>
    %c0_3 = arith.constant 0 : index
    %c8 = arith.constant 8 : index
    %c0_4 = arith.constant 0 : index
    %6 = vector.load %arg5[%c0_3, %c8, %c0_4] : memref<1x32x256xf32, #tpu.memory_space<vmem>>, vector<1x8x256xf32>
    %7 = vector.shape_cast %6 : vector<1x8x256xf32> to vector<8x256xf32>
    %cst_5 = arith.constant dense<0xFF800000> : vector<256xf32>
    %8 = vector.multi_reduction <maximumf>, %7, %cst_5 [0] : vector<8x256xf32> to vector<256xf32>
    %9 = vector.shape_cast %8 : vector<256xf32> to vector<1x256xf32>
    %10 = arith.maximumf %3, %9 : vector<1x256xf32>
    %cst_6 = arith.constant dense<0.000000e+00> : vector<256xf32>
    %11 = vector.multi_reduction <add>, %7, %cst_6 [0] : vector<8x256xf32> to vector<256xf32>
    %12 = vector.shape_cast %11 : vector<256xf32> to vector<1x256xf32>
    %13 = arith.addf %5, %12 : vector<1x256xf32>
    %c0_7 = arith.constant 0 : index
    %c16 = arith.constant 16 : index
    %c0_8 = arith.constant 0 : index
    %14 = vector.load %arg5[%c0_7, %c16, %c0_8] : memref<1x32x256xf32, #tpu.memory_space<vmem>>, vector<1x8x256xf32>
    %15 = vector.shape_cast %14 : vector<1x8x256xf32> to vector<8x256xf32>
    %cst_9 = arith.constant dense<0xFF800000> : vector<256xf32>
    %16 = vector.multi_reduction <maximumf>, %15, %cst_9 [0] : vector<8x256xf32> to vector<256xf32>
    %17 = vector.shape_cast %16 : vector<256xf32> to vector<1x256xf32>
    %18 = arith.maximumf %10, %17 : vector<1x256xf32>
    %cst_10 = arith.constant dense<0.000000e+00> : vector<256xf32>
    %19 = vector.multi_reduction <add>, %15, %cst_10 [0] : vector<8x256xf32> to vector<256xf32>
    %20 = vector.shape_cast %19 : vector<256xf32> to vector<1x256xf32>
    %21 = arith.addf %13, %20 : vector<1x256xf32>
    %c0_11 = arith.constant 0 : index
    %c24 = arith.constant 24 : index
    %c0_12 = arith.constant 0 : index
    %22 = vector.load %arg5[%c0_11, %c24, %c0_12] : memref<1x32x256xf32, #tpu.memory_space<vmem>>, vector<1x8x256xf32>
    %23 = vector.shape_cast %22 : vector<1x8x256xf32> to vector<8x256xf32>
    %cst_13 = arith.constant dense<0xFF800000> : vector<256xf32>
    %24 = vector.multi_reduction <maximumf>, %23, %cst_13 [0] : vector<8x256xf32> to vector<256xf32>
    %25 = vector.shape_cast %24 : vector<256xf32> to vector<1x256xf32>
    %26 = arith.maximumf %18, %25 : vector<1x256xf32>
    %cst_14 = arith.constant dense<0.000000e+00> : vector<256xf32>
    %27 = vector.multi_reduction <add>, %23, %cst_14 [0] : vector<8x256xf32> to vector<256xf32>
    %28 = vector.shape_cast %27 : vector<256xf32> to vector<1x256xf32>
    %29 = arith.addf %21, %28 : vector<1x256xf32>
    %cst_15 = arith.constant 3.125000e-02 : f32
    %30 = vector.broadcast %cst_15 : f32 to vector<1x256xf32>
    %31 = arith.mulf %29, %30 : vector<1x256xf32>
    %cst_16 = arith.constant 0.000000e+00 : f32
    %32 = vector.broadcast %cst_16 : f32 to vector<1x256xf32>
    %cst_17 = arith.constant 0.000000e+00 : f32
    %33 = vector.broadcast %cst_17 : f32 to vector<1x256xf32>
    %c51_i32 = arith.constant 51 : i32
    %34 = tpu.dynamic_rotate %26 by %c51_i32 dim 1 : vector<1x256xf32>, i32 -> vector<1x256xf32>
    %c51_i32_18 = arith.constant 51 : i32
    %35 = tpu.dynamic_rotate %31 by %c51_i32_18 dim 1 : vector<1x256xf32>, i32 -> vector<1x256xf32>
    %c0_19 = arith.constant 0 : index
    %36 = memref.load %arg1[%c0_19] : memref<98xf32, #tpu.memory_space<smem>>
    %c49 = arith.constant 49 : index
    %37 = memref.load %arg1[%c49] : memref<98xf32, #tpu.memory_space<smem>>
    %38 = vector.broadcast %36 : f32 to vector<1x256xf32>
    %39 = arith.mulf %34, %38 : vector<1x256xf32>
    %40 = vector.broadcast %37 : f32 to vector<1x256xf32>
    %41 = arith.mulf %35, %40 : vector<1x256xf32>
    %42 = arith.addf %39, %41 : vector<1x256xf32>
    %c0_20 = arith.constant 0 : index
    %c0_21 = arith.constant 0 : index
    %43 = vector.load %arg4[%c0_20, %c0_21] : memref<7x256xf32, #tpu.memory_space<vmem>>, vector<1x256xf32>
    %44 = arith.mulf %42, %43 : vector<1x256xf32>
    %45 = arith.addf %33, %44 : vector<1x256xf32>
    %c50_i32 = arith.constant 50 : i32
    %46 = tpu.dynamic_rotate %26 by %c50_i32 dim 1 : vector<1x256xf32>, i32 -> vector<1x256xf32>
    %c50_i32_22 = arith.constant 50 : i32
    %47 = tpu.dynamic_rotate %31 by %c50_i32_22 dim 1 : vector<1x256xf32>, i32 -> vector<1x256xf32>
    %c1 = arith.constant 1 : index
    %48 = memref.load %arg1[%c1] : memref<98xf32, #tpu.memory_space<smem>>
    %c50 = arith.constant 50 : index
    %49 = memref.load %arg1[%c50] : memref<98xf32, #tpu.memory_space<smem>>
    %50 = vector.broadcast %48 : f32 to vector<1x256xf32>
    %51 = arith.mulf %46, %50 : vector<1x256xf32>
    %52 = vector.broadcast %49 : f32 to vector<1x256xf32>
    %53 = arith.mulf %47, %52 : vector<1x256xf32>
    %54 = arith.addf %51, %53 : vector<1x256xf32>
    %c1_23 = arith.constant 1 : index
    %c0_24 = arith.constant 0 : index
    %55 = vector.load %arg4[%c1_23, %c0_24] : memref<7x256xf32, #tpu.memory_space<vmem>>, vector<1x256xf32>
    %56 = arith.mulf %54, %55 : vector<1x256xf32>
    %57 = arith.addf %45, %56 : vector<1x256xf32>
    %c49_i32 = arith.constant 49 : i32
    %58 = tpu.dynamic_rotate %26 by %c49_i32 dim 1 : vector<1x256xf32>, i32 -> vector<1x256xf32>
    %c49_i32_25 = arith.constant 49 : i32
    %59 = tpu.dynamic_rotate %31 by %c49_i32_25 dim 1 : vector<1x256xf32>, i32 -> vector<1x256xf32>
    %c2 = arith.constant 2 : index
    %60 = memref.load %arg1[%c2] : memref<98xf32, #tpu.memory_space<smem>>
    %c51 = arith.constant 51 : index
    %61 = memref.load %arg1[%c51] : memref<98xf32, #tpu.memory_space<smem>>
    %62 = vector.broadcast %60 : f32 to vector<1x256xf32>
    %63 = arith.mulf %58, %62 : vector<1x256xf32>
    %64 = vector.broadcast %61 : f32 to vector<1x256xf32>
    %65 = arith.mulf %59, %64 : vector<1x256xf32>
    %66 = arith.addf %63, %65 : vector<1x256xf32>
    %c2_26 = arith.constant 2 : index
    %c0_27 = arith.constant 0 : index
    %67 = vector.load %arg4[%c2_26, %c0_27] : memref<7x256xf32, #tpu.memory_space<vmem>>, vector<1x256xf32>
    %68 = arith.mulf %66, %67 : vector<1x256xf32>
    %69 = arith.addf %57, %68 : vector<1x256xf32>
    %c48_i32 = arith.constant 48 : i32
    %70 = tpu.dynamic_rotate %26 by %c48_i32 dim 1 : vector<1x256xf32>, i32 -> vector<1x256xf32>
    %c48_i32_28 = arith.constant 48 : i32
    %71 = tpu.dynamic_rotate %31 by %c48_i32_28 dim 1 : vector<1x256xf32>, i32 -> vector<1x256xf32>
    %c3 = arith.constant 3 : index
    %72 = memref.load %arg1[%c3] : memref<98xf32, #tpu.memory_space<smem>>
    %c52 = arith.constant 52 : index
    %73 = memref.load %arg1[%c52] : memref<98xf32, #tpu.memory_space<smem>>
    %74 = vector.broadcast %72 : f32 to vector<1x256xf32>
    %75 = arith.mulf %70, %74 : vector<1x256xf32>
    %76 = vector.broadcast %73 : f32 to vector<1x256xf32>
    %77 = arith.mulf %71, %76 : vector<1x256xf32>
    %78 = arith.addf %75, %77 : vector<1x256xf32>
    %c3_29 = arith.constant 3 : index
    %c0_30 = arith.constant 0 : index
    %79 = vector.load %arg4[%c3_29, %c0_30] : memref<7x256xf32, #tpu.memory_space<vmem>>, vector<1x256xf32>
    %80 = arith.mulf %78, %79 : vector<1x256xf32>
    %81 = arith.addf %69, %80 : vector<1x256xf32>
    %c47_i32 = arith.constant 47 : i32
    %82 = tpu.dynamic_rotate %26 by %c47_i32 dim 1 : vector<1x256xf32>, i32 -> vector<1x256xf32>
    %c47_i32_31 = arith.constant 47 : i32
    %83 = tpu.dynamic_rotate %31 by %c47_i32_31 dim 1 : vector<1x256xf32>, i32 -> vector<1x256xf32>
    %c4 = arith.constant 4 : index
    %84 = memref.load %arg1[%c4] : memref<98xf32, #tpu.memory_space<smem>>
    %c53 = arith.constant 53 : index
    %85 = memref.load %arg1[%c53] : memref<98xf32, #tpu.memory_space<smem>>
    %86 = vector.broadcast %84 : f32 to vector<1x256xf32>
    %87 = arith.mulf %82, %86 : vector<1x256xf32>
    %88 = vector.broadcast %85 : f32 to vector<1x256xf32>
    %89 = arith.mulf %83, %88 : vector<1x256xf32>
    %90 = arith.addf %87, %89 : vector<1x256xf32>
    %c4_32 = arith.constant 4 : index
    %c0_33 = arith.constant 0 : index
    %91 = vector.load %arg4[%c4_32, %c0_33] : memref<7x256xf32, #tpu.memory_space<vmem>>, vector<1x256xf32>
    %92 = arith.mulf %90, %91 : vector<1x256xf32>
    %93 = arith.addf %81, %92 : vector<1x256xf32>
    %c46_i32 = arith.constant 46 : i32
    %94 = tpu.dynamic_rotate %26 by %c46_i32 dim 1 : vector<1x256xf32>, i32 -> vector<1x256xf32>
    %c46_i32_34 = arith.constant 46 : i32
    %95 = tpu.dynamic_rotate %31 by %c46_i32_34 dim 1 : vector<1x256xf32>, i32 -> vector<1x256xf32>
    %c5 = arith.constant 5 : index
    %96 = memref.load %arg1[%c5] : memref<98xf32, #tpu.memory_space<smem>>
    %c54 = arith.constant 54 : index
    %97 = memref.load %arg1[%c54] : memref<98xf32, #tpu.memory_space<smem>>
    %98 = vector.broadcast %96 : f32 to vector<1x256xf32>
    %99 = arith.mulf %94, %98 : vector<1x256xf32>
    %100 = vector.broadcast %97 : f32 to vector<1x256xf32>
    %101 = arith.mulf %95, %100 : vector<1x256xf32>
    %102 = arith.addf %99, %101 : vector<1x256xf32>
    %c5_35 = arith.constant 5 : index
    %c0_36 = arith.constant 0 : index
    %103 = vector.load %arg4[%c5_35, %c0_36] : memref<7x256xf32, #tpu.memory_space<vmem>>, vector<1x256xf32>
    %104 = arith.mulf %102, %103 : vector<1x256xf32>
    %105 = arith.addf %93, %104 : vector<1x256xf32>
    %c45_i32 = arith.constant 45 : i32
    %106 = tpu.dynamic_rotate %26 by %c45_i32 dim 1 : vector<1x256xf32>, i32 -> vector<1x256xf32>
    %c45_i32_37 = arith.constant 45 : i32
    %107 = tpu.dynamic_rotate %31 by %c45_i32_37 dim 1 : vector<1x256xf32>, i32 -> vector<1x256xf32>
    %c6 = arith.constant 6 : index
    %108 = memref.load %arg1[%c6] : memref<98xf32, #tpu.memory_space<smem>>
    %c55 = arith.constant 55 : index
    %109 = memref.load %arg1[%c55] : memref<98xf32, #tpu.memory_space<smem>>
    %110 = vector.broadcast %108 : f32 to vector<1x256xf32>
    %111 = arith.mulf %106, %110 : vector<1x256xf32>
    %112 = vector.broadcast %109 : f32 to vector<1x256xf32>
    %113 = arith.mulf %107, %112 : vector<1x256xf32>
    %114 = arith.addf %111, %113 : vector<1x256xf32>
    %c6_38 = arith.constant 6 : index
    %c0_39 = arith.constant 0 : index
    %115 = vector.load %arg4[%c6_38, %c0_39] : memref<7x256xf32, #tpu.memory_space<vmem>>, vector<1x256xf32>
    %116 = arith.mulf %114, %115 : vector<1x256xf32>
    %117 = arith.addf %105, %116 : vector<1x256xf32>
    %c0_40 = arith.constant 0 : index
    %c0_41 = arith.constant 0 : index
    %118 = vector.load %arg3[%c0_40, %c0_41] : memref<7x256xf32, #tpu.memory_space<vmem>>, vector<1x256xf32>
    %119 = arith.mulf %117, %118 : vector<1x256xf32>
    %120 = arith.addf %32, %119 : vector<1x256xf32>
    %cst_42 = arith.constant 0.000000e+00 : f32
    %121 = vector.broadcast %cst_42 : f32 to vector<1x256xf32>
    %c35_i32 = arith.constant 35 : i32
    %122 = tpu.dynamic_rotate %26 by %c35_i32 dim 1 : vector<1x256xf32>, i32 -> vector<1x256xf32>
    %c35_i32_43 = arith.constant 35 : i32
    %123 = tpu.dynamic_rotate %31 by %c35_i32_43 dim 1 : vector<1x256xf32>, i32 -> vector<1x256xf32>
    %c7 = arith.constant 7 : index
    %124 = memref.load %arg1[%c7] : memref<98xf32, #tpu.memory_space<smem>>
    %c56 = arith.constant 56 : index
    %125 = memref.load %arg1[%c56] : memref<98xf32, #tpu.memory_space<smem>>
    %126 = vector.broadcast %124 : f32 to vector<1x256xf32>
    %127 = arith.mulf %122, %126 : vector<1x256xf32>
    %128 = vector.broadcast %125 : f32 to vector<1x256xf32>
    %129 = arith.mulf %123, %128 : vector<1x256xf32>
    %130 = arith.addf %127, %129 : vector<1x256xf32>
    %c0_44 = arith.constant 0 : index
    %c0_45 = arith.constant 0 : index
    %131 = vector.load %arg4[%c0_44, %c0_45] : memref<7x256xf32, #tpu.memory_space<vmem>>, vector<1x256xf32>
    %132 = arith.mulf %130, %131 : vector<1x256xf32>
    %133 = arith.addf %121, %132 : vector<1x256xf32>
    %c34_i32 = arith.constant 34 : i32
    %134 = tpu.dynamic_rotate %26 by %c34_i32 dim 1 : vector<1x256xf32>, i32 -> vector<1x256xf32>
    %c34_i32_46 = arith.constant 34 : i32
    %135 = tpu.dynamic_rotate %31 by %c34_i32_46 dim 1 : vector<1x256xf32>, i32 -> vector<1x256xf32>
    %c8_47 = arith.constant 8 : index
    %136 = memref.load %arg1[%c8_47] : memref<98xf32, #tpu.memory_space<smem>>
    %c57 = arith.constant 57 : index
    %137 = memref.load %arg1[%c57] : memref<98xf32, #tpu.memory_space<smem>>
    %138 = vector.broadcast %136 : f32 to vector<1x256xf32>
    %139 = arith.mulf %134, %138 : vector<1x256xf32>
    %140 = vector.broadcast %137 : f32 to vector<1x256xf32>
    %141 = arith.mulf %135, %140 : vector<1x256xf32>
    %142 = arith.addf %139, %141 : vector<1x256xf32>
    %c1_48 = arith.constant 1 : index
    %c0_49 = arith.constant 0 : index
    %143 = vector.load %arg4[%c1_48, %c0_49] : memref<7x256xf32, #tpu.memory_space<vmem>>, vector<1x256xf32>
    %144 = arith.mulf %142, %143 : vector<1x256xf32>
    %145 = arith.addf %133, %144 : vector<1x256xf32>
    %c33_i32 = arith.constant 33 : i32
    %146 = tpu.dynamic_rotate %26 by %c33_i32 dim 1 : vector<1x256xf32>, i32 -> vector<1x256xf32>
    %c33_i32_50 = arith.constant 33 : i32
    %147 = tpu.dynamic_rotate %31 by %c33_i32_50 dim 1 : vector<1x256xf32>, i32 -> vector<1x256xf32>
    %c9 = arith.constant 9 : index
    %148 = memref.load %arg1[%c9] : memref<98xf32, #tpu.memory_space<smem>>
    %c58 = arith.constant 58 : index
    %149 = memref.load %arg1[%c58] : memref<98xf32, #tpu.memory_space<smem>>
    %150 = vector.broadcast %148 : f32 to vector<1x256xf32>
    %151 = arith.mulf %146, %150 : vector<1x256xf32>
    %152 = vector.broadcast %149 : f32 to vector<1x256xf32>
    %153 = arith.mulf %147, %152 : vector<1x256xf32>
    %154 = arith.addf %151, %153 : vector<1x256xf32>
    %c2_51 = arith.constant 2 : index
    %c0_52 = arith.constant 0 : index
    %155 = vector.load %arg4[%c2_51, %c0_52] : memref<7x256xf32, #tpu.memory_space<vmem>>, vector<1x256xf32>
    %156 = arith.mulf %154, %155 : vector<1x256xf32>
    %157 = arith.addf %145, %156 : vector<1x256xf32>
    %c32_i32 = arith.constant 32 : i32
    %158 = tpu.dynamic_rotate %26 by %c32_i32 dim 1 : vector<1x256xf32>, i32 -> vector<1x256xf32>
    %c32_i32_53 = arith.constant 32 : i32
    %159 = tpu.dynamic_rotate %31 by %c32_i32_53 dim 1 : vector<1x256xf32>, i32 -> vector<1x256xf32>
    %c10 = arith.constant 10 : index
    %160 = memref.load %arg1[%c10] : memref<98xf32, #tpu.memory_space<smem>>
    %c59 = arith.constant 59 : index
    %161 = memref.load %arg1[%c59] : memref<98xf32, #tpu.memory_space<smem>>
    %162 = vector.broadcast %160 : f32 to vector<1x256xf32>
    %163 = arith.mulf %158, %162 : vector<1x256xf32>
    %164 = vector.broadcast %161 : f32 to vector<1x256xf32>
    %165 = arith.mulf %159, %164 : vector<1x256xf32>
    %166 = arith.addf %163, %165 : vector<1x256xf32>
    %c3_54 = arith.constant 3 : index
    %c0_55 = arith.constant 0 : index
    %167 = vector.load %arg4[%c3_54, %c0_55] : memref<7x256xf32, #tpu.memory_space<vmem>>, vector<1x256xf32>
    %168 = arith.mulf %166, %167 : vector<1x256xf32>
    %169 = arith.addf %157, %168 : vector<1x256xf32>
    %c31_i32 = arith.constant 31 : i32
    %170 = tpu.dynamic_rotate %26 by %c31_i32 dim 1 : vector<1x256xf32>, i32 -> vector<1x256xf32>
    %c31_i32_56 = arith.constant 31 : i32
    %171 = tpu.dynamic_rotate %31 by %c31_i32_56 dim 1 : vector<1x256xf32>, i32 -> vector<1x256xf32>
    %c11 = arith.constant 11 : index
    %172 = memref.load %arg1[%c11] : memref<98xf32, #tpu.memory_space<smem>>
    %c60 = arith.constant 60 : index
    %173 = memref.load %arg1[%c60] : memref<98xf32, #tpu.memory_space<smem>>
    %174 = vector.broadcast %172 : f32 to vector<1x256xf32>
    %175 = arith.mulf %170, %174 : vector<1x256xf32>
    %176 = vector.broadcast %173 : f32 to vector<1x256xf32>
    %177 = arith.mulf %171, %176 : vector<1x256xf32>
    %178 = arith.addf %175, %177 : vector<1x256xf32>
    %c4_57 = arith.constant 4 : index
    %c0_58 = arith.constant 0 : index
    %179 = vector.load %arg4[%c4_57, %c0_58] : memref<7x256xf32, #tpu.memory_space<vmem>>, vector<1x256xf32>
    %180 = arith.mulf %178, %179 : vector<1x256xf32>
    %181 = arith.addf %169, %180 : vector<1x256xf32>
    %c30_i32 = arith.constant 30 : i32
    %182 = tpu.dynamic_rotate %26 by %c30_i32 dim 1 : vector<1x256xf32>, i32 -> vector<1x256xf32>
    %c30_i32_59 = arith.constant 30 : i32
    %183 = tpu.dynamic_rotate %31 by %c30_i32_59 dim 1 : vector<1x256xf32>, i32 -> vector<1x256xf32>
    %c12 = arith.constant 12 : index
    %184 = memref.load %arg1[%c12] : memref<98xf32, #tpu.memory_space<smem>>
    %c61 = arith.constant 61 : index
    %185 = memref.load %arg1[%c61] : memref<98xf32, #tpu.memory_space<smem>>
    %186 = vector.broadcast %184 : f32 to vector<1x256xf32>
    %187 = arith.mulf %182, %186 : vector<1x256xf32>
    %188 = vector.broadcast %185 : f32 to vector<1x256xf32>
    %189 = arith.mulf %183, %188 : vector<1x256xf32>
    %190 = arith.addf %187, %189 : vector<1x256xf32>
    %c5_60 = arith.constant 5 : index
    %c0_61 = arith.constant 0 : index
    %191 = vector.load %arg4[%c5_60, %c0_61] : memref<7x256xf32, #tpu.memory_space<vmem>>, vector<1x256xf32>
    %192 = arith.mulf %190, %191 : vector<1x256xf32>
    %193 = arith.addf %181, %192 : vector<1x256xf32>
    %c29_i32 = arith.constant 29 : i32
    %194 = tpu.dynamic_rotate %26 by %c29_i32 dim 1 : vector<1x256xf32>, i32 -> vector<1x256xf32>
    %c29_i32_62 = arith.constant 29 : i32
    %195 = tpu.dynamic_rotate %31 by %c29_i32_62 dim 1 : vector<1x256xf32>, i32 -> vector<1x256xf32>
    %c13 = arith.constant 13 : index
    %196 = memref.load %arg1[%c13] : memref<98xf32, #tpu.memory_space<smem>>
    %c62 = arith.constant 62 : index
    %197 = memref.load %arg1[%c62] : memref<98xf32, #tpu.memory_space<smem>>
    %198 = vector.broadcast %196 : f32 to vector<1x256xf32>
    %199 = arith.mulf %194, %198 : vector<1x256xf32>
    %200 = vector.broadcast %197 : f32 to vector<1x256xf32>
    %201 = arith.mulf %195, %200 : vector<1x256xf32>
    %202 = arith.addf %199, %201 : vector<1x256xf32>
    %c6_63 = arith.constant 6 : index
    %c0_64 = arith.constant 0 : index
    %203 = vector.load %arg4[%c6_63, %c0_64] : memref<7x256xf32, #tpu.memory_space<vmem>>, vector<1x256xf32>
    %204 = arith.mulf %202, %203 : vector<1x256xf32>
    %205 = arith.addf %193, %204 : vector<1x256xf32>
    %c1_65 = arith.constant 1 : index
    %c0_66 = arith.constant 0 : index
    %206 = vector.load %arg3[%c1_65, %c0_66] : memref<7x256xf32, #tpu.memory_space<vmem>>, vector<1x256xf32>
    %207 = arith.mulf %205, %206 : vector<1x256xf32>
    %208 = arith.addf %120, %207 : vector<1x256xf32>
    %cst_67 = arith.constant 0.000000e+00 : f32
    %209 = vector.broadcast %cst_67 : f32 to vector<1x256xf32>
    %c19_i32 = arith.constant 19 : i32
    %210 = tpu.dynamic_rotate %26 by %c19_i32 dim 1 : vector<1x256xf32>, i32 -> vector<1x256xf32>
    %c19_i32_68 = arith.constant 19 : i32
    %211 = tpu.dynamic_rotate %31 by %c19_i32_68 dim 1 : vector<1x256xf32>, i32 -> vector<1x256xf32>
    %c14 = arith.constant 14 : index
    %212 = memref.load %arg1[%c14] : memref<98xf32, #tpu.memory_space<smem>>
    %c63 = arith.constant 63 : index
    %213 = memref.load %arg1[%c63] : memref<98xf32, #tpu.memory_space<smem>>
    %214 = vector.broadcast %212 : f32 to vector<1x256xf32>
    %215 = arith.mulf %210, %214 : vector<1x256xf32>
    %216 = vector.broadcast %213 : f32 to vector<1x256xf32>
    %217 = arith.mulf %211, %216 : vector<1x256xf32>
    %218 = arith.addf %215, %217 : vector<1x256xf32>
    %c0_69 = arith.constant 0 : index
    %c0_70 = arith.constant 0 : index
    %219 = vector.load %arg4[%c0_69, %c0_70] : memref<7x256xf32, #tpu.memory_space<vmem>>, vector<1x256xf32>
    %220 = arith.mulf %218, %219 : vector<1x256xf32>
    %221 = arith.addf %209, %220 : vector<1x256xf32>
    %c18_i32 = arith.constant 18 : i32
    %222 = tpu.dynamic_rotate %26 by %c18_i32 dim 1 : vector<1x256xf32>, i32 -> vector<1x256xf32>
    %c18_i32_71 = arith.constant 18 : i32
    %223 = tpu.dynamic_rotate %31 by %c18_i32_71 dim 1 : vector<1x256xf32>, i32 -> vector<1x256xf32>
    %c15 = arith.constant 15 : index
    %224 = memref.load %arg1[%c15] : memref<98xf32, #tpu.memory_space<smem>>
    %c64 = arith.constant 64 : index
    %225 = memref.load %arg1[%c64] : memref<98xf32, #tpu.memory_space<smem>>
    %226 = vector.broadcast %224 : f32 to vector<1x256xf32>
    %227 = arith.mulf %222, %226 : vector<1x256xf32>
    %228 = vector.broadcast %225 : f32 to vector<1x256xf32>
    %229 = arith.mulf %223, %228 : vector<1x256xf32>
    %230 = arith.addf %227, %229 : vector<1x256xf32>
    %c1_72 = arith.constant 1 : index
    %c0_73 = arith.constant 0 : index
    %231 = vector.load %arg4[%c1_72, %c0_73] : memref<7x256xf32, #tpu.memory_space<vmem>>, vector<1x256xf32>
    %232 = arith.mulf %230, %231 : vector<1x256xf32>
    %233 = arith.addf %221, %232 : vector<1x256xf32>
    %c17_i32 = arith.constant 17 : i32
    %234 = tpu.dynamic_rotate %26 by %c17_i32 dim 1 : vector<1x256xf32>, i32 -> vector<1x256xf32>
    %c17_i32_74 = arith.constant 17 : i32
    %235 = tpu.dynamic_rotate %31 by %c17_i32_74 dim 1 : vector<1x256xf32>, i32 -> vector<1x256xf32>
    %c16_75 = arith.constant 16 : index
    %236 = memref.load %arg1[%c16_75] : memref<98xf32, #tpu.memory_space<smem>>
    %c65 = arith.constant 65 : index
    %237 = memref.load %arg1[%c65] : memref<98xf32, #tpu.memory_space<smem>>
    %238 = vector.broadcast %236 : f32 to vector<1x256xf32>
    %239 = arith.mulf %234, %238 : vector<1x256xf32>
    %240 = vector.broadcast %237 : f32 to vector<1x256xf32>
    %241 = arith.mulf %235, %240 : vector<1x256xf32>
    %242 = arith.addf %239, %241 : vector<1x256xf32>
    %c2_76 = arith.constant 2 : index
    %c0_77 = arith.constant 0 : index
    %243 = vector.load %arg4[%c2_76, %c0_77] : memref<7x256xf32, #tpu.memory_space<vmem>>, vector<1x256xf32>
    %244 = arith.mulf %242, %243 : vector<1x256xf32>
    %245 = arith.addf %233, %244 : vector<1x256xf32>
    %c16_i32 = arith.constant 16 : i32
    %246 = tpu.dynamic_rotate %26 by %c16_i32 dim 1 : vector<1x256xf32>, i32 -> vector<1x256xf32>
    %c16_i32_78 = arith.constant 16 : i32
    %247 = tpu.dynamic_rotate %31 by %c16_i32_78 dim 1 : vector<1x256xf32>, i32 -> vector<1x256xf32>
    %c17 = arith.constant 17 : index
    %248 = memref.load %arg1[%c17] : memref<98xf32, #tpu.memory_space<smem>>
    %c66 = arith.constant 66 : index
    %249 = memref.load %arg1[%c66] : memref<98xf32, #tpu.memory_space<smem>>
    %250 = vector.broadcast %248 : f32 to vector<1x256xf32>
    %251 = arith.mulf %246, %250 : vector<1x256xf32>
    %252 = vector.broadcast %249 : f32 to vector<1x256xf32>
    %253 = arith.mulf %247, %252 : vector<1x256xf32>
    %254 = arith.addf %251, %253 : vector<1x256xf32>
    %c3_79 = arith.constant 3 : index
    %c0_80 = arith.constant 0 : index
    %255 = vector.load %arg4[%c3_79, %c0_80] : memref<7x256xf32, #tpu.memory_space<vmem>>, vector<1x256xf32>
    %256 = arith.mulf %254, %255 : vector<1x256xf32>
    %257 = arith.addf %245, %256 : vector<1x256xf32>
    %c15_i32 = arith.constant 15 : i32
    %258 = tpu.dynamic_rotate %26 by %c15_i32 dim 1 : vector<1x256xf32>, i32 -> vector<1x256xf32>
    %c15_i32_81 = arith.constant 15 : i32
    %259 = tpu.dynamic_rotate %31 by %c15_i32_81 dim 1 : vector<1x256xf32>, i32 -> vector<1x256xf32>
    %c18 = arith.constant 18 : index
    %260 = memref.load %arg1[%c18] : memref<98xf32, #tpu.memory_space<smem>>
    %c67 = arith.constant 67 : index
    %261 = memref.load %arg1[%c67] : memref<98xf32, #tpu.memory_space<smem>>
    %262 = vector.broadcast %260 : f32 to vector<1x256xf32>
    %263 = arith.mulf %258, %262 : vector<1x256xf32>
    %264 = vector.broadcast %261 : f32 to vector<1x256xf32>
    %265 = arith.mulf %259, %264 : vector<1x256xf32>
    %266 = arith.addf %263, %265 : vector<1x256xf32>
    %c4_82 = arith.constant 4 : index
    %c0_83 = arith.constant 0 : index
    %267 = vector.load %arg4[%c4_82, %c0_83] : memref<7x256xf32, #tpu.memory_space<vmem>>, vector<1x256xf32>
    %268 = arith.mulf %266, %267 : vector<1x256xf32>
    %269 = arith.addf %257, %268 : vector<1x256xf32>
    %c14_i32 = arith.constant 14 : i32
    %270 = tpu.dynamic_rotate %26 by %c14_i32 dim 1 : vector<1x256xf32>, i32 -> vector<1x256xf32>
    %c14_i32_84 = arith.constant 14 : i32
    %271 = tpu.dynamic_rotate %31 by %c14_i32_84 dim 1 : vector<1x256xf32>, i32 -> vector<1x256xf32>
    %c19 = arith.constant 19 : index
    %272 = memref.load %arg1[%c19] : memref<98xf32, #tpu.memory_space<smem>>
    %c68 = arith.constant 68 : index
    %273 = memref.load %arg1[%c68] : memref<98xf32, #tpu.memory_space<smem>>
    %274 = vector.broadcast %272 : f32 to vector<1x256xf32>
    %275 = arith.mulf %270, %274 : vector<1x256xf32>
    %276 = vector.broadcast %273 : f32 to vector<1x256xf32>
    %277 = arith.mulf %271, %276 : vector<1x256xf32>
    %278 = arith.addf %275, %277 : vector<1x256xf32>
    %c5_85 = arith.constant 5 : index
    %c0_86 = arith.constant 0 : index
    %279 = vector.load %arg4[%c5_85, %c0_86] : memref<7x256xf32, #tpu.memory_space<vmem>>, vector<1x256xf32>
    %280 = arith.mulf %278, %279 : vector<1x256xf32>
    %281 = arith.addf %269, %280 : vector<1x256xf32>
    %c13_i32 = arith.constant 13 : i32
    %282 = tpu.dynamic_rotate %26 by %c13_i32 dim 1 : vector<1x256xf32>, i32 -> vector<1x256xf32>
    %c13_i32_87 = arith.constant 13 : i32
    %283 = tpu.dynamic_rotate %31 by %c13_i32_87 dim 1 : vector<1x256xf32>, i32 -> vector<1x256xf32>
    %c20 = arith.constant 20 : index
    %284 = memref.load %arg1[%c20] : memref<98xf32, #tpu.memory_space<smem>>
    %c69 = arith.constant 69 : index
    %285 = memref.load %arg1[%c69] : memref<98xf32, #tpu.memory_space<smem>>
    %286 = vector.broadcast %284 : f32 to vector<1x256xf32>
    %287 = arith.mulf %282, %286 : vector<1x256xf32>
    %288 = vector.broadcast %285 : f32 to vector<1x256xf32>
    %289 = arith.mulf %283, %288 : vector<1x256xf32>
    %290 = arith.addf %287, %289 : vector<1x256xf32>
    %c6_88 = arith.constant 6 : index
    %c0_89 = arith.constant 0 : index
    %291 = vector.load %arg4[%c6_88, %c0_89] : memref<7x256xf32, #tpu.memory_space<vmem>>, vector<1x256xf32>
    %292 = arith.mulf %290, %291 : vector<1x256xf32>
    %293 = arith.addf %281, %292 : vector<1x256xf32>
    %c2_90 = arith.constant 2 : index
    %c0_91 = arith.constant 0 : index
    %294 = vector.load %arg3[%c2_90, %c0_91] : memref<7x256xf32, #tpu.memory_space<vmem>>, vector<1x256xf32>
    %295 = arith.mulf %293, %294 : vector<1x256xf32>
    %296 = arith.addf %208, %295 : vector<1x256xf32>
    %cst_92 = arith.constant 0.000000e+00 : f32
    %297 = vector.broadcast %cst_92 : f32 to vector<1x256xf32>
    %c3_i32 = arith.constant 3 : i32
    %298 = tpu.dynamic_rotate %26 by %c3_i32 dim 1 : vector<1x256xf32>, i32 -> vector<1x256xf32>
    %c3_i32_93 = arith.constant 3 : i32
    %299 = tpu.dynamic_rotate %31 by %c3_i32_93 dim 1 : vector<1x256xf32>, i32 -> vector<1x256xf32>
    %c21 = arith.constant 21 : index
    %300 = memref.load %arg1[%c21] : memref<98xf32, #tpu.memory_space<smem>>
    %c70 = arith.constant 70 : index
    %301 = memref.load %arg1[%c70] : memref<98xf32, #tpu.memory_space<smem>>
    %302 = vector.broadcast %300 : f32 to vector<1x256xf32>
    %303 = arith.mulf %298, %302 : vector<1x256xf32>
    %304 = vector.broadcast %301 : f32 to vector<1x256xf32>
    %305 = arith.mulf %299, %304 : vector<1x256xf32>
    %306 = arith.addf %303, %305 : vector<1x256xf32>
    %c0_94 = arith.constant 0 : index
    %c0_95 = arith.constant 0 : index
    %307 = vector.load %arg4[%c0_94, %c0_95] : memref<7x256xf32, #tpu.memory_space<vmem>>, vector<1x256xf32>
    %308 = arith.mulf %306, %307 : vector<1x256xf32>
    %309 = arith.addf %297, %308 : vector<1x256xf32>
    %c2_i32 = arith.constant 2 : i32
    %310 = tpu.dynamic_rotate %26 by %c2_i32 dim 1 : vector<1x256xf32>, i32 -> vector<1x256xf32>
    %c2_i32_96 = arith.constant 2 : i32
    %311 = tpu.dynamic_rotate %31 by %c2_i32_96 dim 1 : vector<1x256xf32>, i32 -> vector<1x256xf32>
    %c22 = arith.constant 22 : index
    %312 = memref.load %arg1[%c22] : memref<98xf32, #tpu.memory_space<smem>>
    %c71 = arith.constant 71 : index
    %313 = memref.load %arg1[%c71] : memref<98xf32, #tpu.memory_space<smem>>
    %314 = vector.broadcast %312 : f32 to vector<1x256xf32>
    %315 = arith.mulf %310, %314 : vector<1x256xf32>
    %316 = vector.broadcast %313 : f32 to vector<1x256xf32>
    %317 = arith.mulf %311, %316 : vector<1x256xf32>
    %318 = arith.addf %315, %317 : vector<1x256xf32>
    %c1_97 = arith.constant 1 : index
    %c0_98 = arith.constant 0 : index
    %319 = vector.load %arg4[%c1_97, %c0_98] : memref<7x256xf32, #tpu.memory_space<vmem>>, vector<1x256xf32>
    %320 = arith.mulf %318, %319 : vector<1x256xf32>
    %321 = arith.addf %309, %320 : vector<1x256xf32>
    %c1_i32 = arith.constant 1 : i32
    %322 = tpu.dynamic_rotate %26 by %c1_i32 dim 1 : vector<1x256xf32>, i32 -> vector<1x256xf32>
    %c1_i32_99 = arith.constant 1 : i32
    %323 = tpu.dynamic_rotate %31 by %c1_i32_99 dim 1 : vector<1x256xf32>, i32 -> vector<1x256xf32>
    %c23 = arith.constant 23 : index
    %324 = memref.load %arg1[%c23] : memref<98xf32, #tpu.memory_space<smem>>
    %c72 = arith.constant 72 : index
    %325 = memref.load %arg1[%c72] : memref<98xf32, #tpu.memory_space<smem>>
    %326 = vector.broadcast %324 : f32 to vector<1x256xf32>
    %327 = arith.mulf %322, %326 : vector<1x256xf32>
    %328 = vector.broadcast %325 : f32 to vector<1x256xf32>
    %329 = arith.mulf %323, %328 : vector<1x256xf32>
    %330 = arith.addf %327, %329 : vector<1x256xf32>
    %c2_100 = arith.constant 2 : index
    %c0_101 = arith.constant 0 : index
    %331 = vector.load %arg4[%c2_100, %c0_101] : memref<7x256xf32, #tpu.memory_space<vmem>>, vector<1x256xf32>
    %332 = arith.mulf %330, %331 : vector<1x256xf32>
    %333 = arith.addf %321, %332 : vector<1x256xf32>
    %c24_102 = arith.constant 24 : index
    %334 = memref.load %arg1[%c24_102] : memref<98xf32, #tpu.memory_space<smem>>
    %c73 = arith.constant 73 : index
    %335 = memref.load %arg1[%c73] : memref<98xf32, #tpu.memory_space<smem>>
    %336 = vector.broadcast %334 : f32 to vector<1x256xf32>
    %337 = arith.mulf %26, %336 : vector<1x256xf32>
    %338 = vector.broadcast %335 : f32 to vector<1x256xf32>
    %339 = arith.mulf %31, %338 : vector<1x256xf32>
    %340 = arith.addf %337, %339 : vector<1x256xf32>
    %c3_103 = arith.constant 3 : index
    %c0_104 = arith.constant 0 : index
    %341 = vector.load %arg4[%c3_103, %c0_104] : memref<7x256xf32, #tpu.memory_space<vmem>>, vector<1x256xf32>
    %342 = arith.mulf %340, %341 : vector<1x256xf32>
    %343 = arith.addf %333, %342 : vector<1x256xf32>
    %c255_i32 = arith.constant 255 : i32
    %344 = tpu.dynamic_rotate %26 by %c255_i32 dim 1 : vector<1x256xf32>, i32 -> vector<1x256xf32>
    %c255_i32_105 = arith.constant 255 : i32
    %345 = tpu.dynamic_rotate %31 by %c255_i32_105 dim 1 : vector<1x256xf32>, i32 -> vector<1x256xf32>
    %c25 = arith.constant 25 : index
    %346 = memref.load %arg1[%c25] : memref<98xf32, #tpu.memory_space<smem>>
    %c74 = arith.constant 74 : index
    %347 = memref.load %arg1[%c74] : memref<98xf32, #tpu.memory_space<smem>>
    %348 = vector.broadcast %346 : f32 to vector<1x256xf32>
    %349 = arith.mulf %344, %348 : vector<1x256xf32>
    %350 = vector.broadcast %347 : f32 to vector<1x256xf32>
    %351 = arith.mulf %345, %350 : vector<1x256xf32>
    %352 = arith.addf %349, %351 : vector<1x256xf32>
    %c4_106 = arith.constant 4 : index
    %c0_107 = arith.constant 0 : index
    %353 = vector.load %arg4[%c4_106, %c0_107] : memref<7x256xf32, #tpu.memory_space<vmem>>, vector<1x256xf32>
    %354 = arith.mulf %352, %353 : vector<1x256xf32>
    %355 = arith.addf %343, %354 : vector<1x256xf32>
    %c254_i32 = arith.constant 254 : i32
    %356 = tpu.dynamic_rotate %26 by %c254_i32 dim 1 : vector<1x256xf32>, i32 -> vector<1x256xf32>
    %c254_i32_108 = arith.constant 254 : i32
    %357 = tpu.dynamic_rotate %31 by %c254_i32_108 dim 1 : vector<1x256xf32>, i32 -> vector<1x256xf32>
    %c26 = arith.constant 26 : index
    %358 = memref.load %arg1[%c26] : memref<98xf32, #tpu.memory_space<smem>>
    %c75 = arith.constant 75 : index
    %359 = memref.load %arg1[%c75] : memref<98xf32, #tpu.memory_space<smem>>
    %360 = vector.broadcast %358 : f32 to vector<1x256xf32>
    %361 = arith.mulf %356, %360 : vector<1x256xf32>
    %362 = vector.broadcast %359 : f32 to vector<1x256xf32>
    %363 = arith.mulf %357, %362 : vector<1x256xf32>
    %364 = arith.addf %361, %363 : vector<1x256xf32>
    %c5_109 = arith.constant 5 : index
    %c0_110 = arith.constant 0 : index
    %365 = vector.load %arg4[%c5_109, %c0_110] : memref<7x256xf32, #tpu.memory_space<vmem>>, vector<1x256xf32>
    %366 = arith.mulf %364, %365 : vector<1x256xf32>
    %367 = arith.addf %355, %366 : vector<1x256xf32>
    %c253_i32 = arith.constant 253 : i32
    %368 = tpu.dynamic_rotate %26 by %c253_i32 dim 1 : vector<1x256xf32>, i32 -> vector<1x256xf32>
    %c253_i32_111 = arith.constant 253 : i32
    %369 = tpu.dynamic_rotate %31 by %c253_i32_111 dim 1 : vector<1x256xf32>, i32 -> vector<1x256xf32>
    %c27 = arith.constant 27 : index
    %370 = memref.load %arg1[%c27] : memref<98xf32, #tpu.memory_space<smem>>
    %c76 = arith.constant 76 : index
    %371 = memref.load %arg1[%c76] : memref<98xf32, #tpu.memory_space<smem>>
    %372 = vector.broadcast %370 : f32 to vector<1x256xf32>
    %373 = arith.mulf %368, %372 : vector<1x256xf32>
    %374 = vector.broadcast %371 : f32 to vector<1x256xf32>
    %375 = arith.mulf %369, %374 : vector<1x256xf32>
    %376 = arith.addf %373, %375 : vector<1x256xf32>
    %c6_112 = arith.constant 6 : index
    %c0_113 = arith.constant 0 : index
    %377 = vector.load %arg4[%c6_112, %c0_113] : memref<7x256xf32, #tpu.memory_space<vmem>>, vector<1x256xf32>
    %378 = arith.mulf %376, %377 : vector<1x256xf32>
    %379 = arith.addf %367, %378 : vector<1x256xf32>
    %c3_114 = arith.constant 3 : index
    %c0_115 = arith.constant 0 : index
    %380 = vector.load %arg3[%c3_114, %c0_115] : memref<7x256xf32, #tpu.memory_space<vmem>>, vector<1x256xf32>
    %381 = arith.mulf %379, %380 : vector<1x256xf32>
    %382 = arith.addf %296, %381 : vector<1x256xf32>
    %cst_116 = arith.constant 0.000000e+00 : f32
    %383 = vector.broadcast %cst_116 : f32 to vector<1x256xf32>
    %c243_i32 = arith.constant 243 : i32
    %384 = tpu.dynamic_rotate %26 by %c243_i32 dim 1 : vector<1x256xf32>, i32 -> vector<1x256xf32>
    %c243_i32_117 = arith.constant 243 : i32
    %385 = tpu.dynamic_rotate %31 by %c243_i32_117 dim 1 : vector<1x256xf32>, i32 -> vector<1x256xf32>
    %c28 = arith.constant 28 : index
    %386 = memref.load %arg1[%c28] : memref<98xf32, #tpu.memory_space<smem>>
    %c77 = arith.constant 77 : index
    %387 = memref.load %arg1[%c77] : memref<98xf32, #tpu.memory_space<smem>>
    %388 = vector.broadcast %386 : f32 to vector<1x256xf32>
    %389 = arith.mulf %384, %388 : vector<1x256xf32>
    %390 = vector.broadcast %387 : f32 to vector<1x256xf32>
    %391 = arith.mulf %385, %390 : vector<1x256xf32>
    %392 = arith.addf %389, %391 : vector<1x256xf32>
    %c0_118 = arith.constant 0 : index
    %c0_119 = arith.constant 0 : index
    %393 = vector.load %arg4[%c0_118, %c0_119] : memref<7x256xf32, #tpu.memory_space<vmem>>, vector<1x256xf32>
    %394 = arith.mulf %392, %393 : vector<1x256xf32>
    %395 = arith.addf %383, %394 : vector<1x256xf32>
    %c242_i32 = arith.constant 242 : i32
    %396 = tpu.dynamic_rotate %26 by %c242_i32 dim 1 : vector<1x256xf32>, i32 -> vector<1x256xf32>
    %c242_i32_120 = arith.constant 242 : i32
    %397 = tpu.dynamic_rotate %31 by %c242_i32_120 dim 1 : vector<1x256xf32>, i32 -> vector<1x256xf32>
    %c29 = arith.constant 29 : index
    %398 = memref.load %arg1[%c29] : memref<98xf32, #tpu.memory_space<smem>>
    %c78 = arith.constant 78 : index
    %399 = memref.load %arg1[%c78] : memref<98xf32, #tpu.memory_space<smem>>
    %400 = vector.broadcast %398 : f32 to vector<1x256xf32>
    %401 = arith.mulf %396, %400 : vector<1x256xf32>
    %402 = vector.broadcast %399 : f32 to vector<1x256xf32>
    %403 = arith.mulf %397, %402 : vector<1x256xf32>
    %404 = arith.addf %401, %403 : vector<1x256xf32>
    %c1_121 = arith.constant 1 : index
    %c0_122 = arith.constant 0 : index
    %405 = vector.load %arg4[%c1_121, %c0_122] : memref<7x256xf32, #tpu.memory_space<vmem>>, vector<1x256xf32>
    %406 = arith.mulf %404, %405 : vector<1x256xf32>
    %407 = arith.addf %395, %406 : vector<1x256xf32>
    %c241_i32 = arith.constant 241 : i32
    %408 = tpu.dynamic_rotate %26 by %c241_i32 dim 1 : vector<1x256xf32>, i32 -> vector<1x256xf32>
    %c241_i32_123 = arith.constant 241 : i32
    %409 = tpu.dynamic_rotate %31 by %c241_i32_123 dim 1 : vector<1x256xf32>, i32 -> vector<1x256xf32>
    %c30 = arith.constant 30 : index
    %410 = memref.load %arg1[%c30] : memref<98xf32, #tpu.memory_space<smem>>
    %c79 = arith.constant 79 : index
    %411 = memref.load %arg1[%c79] : memref<98xf32, #tpu.memory_space<smem>>
    %412 = vector.broadcast %410 : f32 to vector<1x256xf32>
    %413 = arith.mulf %408, %412 : vector<1x256xf32>
    %414 = vector.broadcast %411 : f32 to vector<1x256xf32>
    %415 = arith.mulf %409, %414 : vector<1x256xf32>
    %416 = arith.addf %413, %415 : vector<1x256xf32>
    %c2_124 = arith.constant 2 : index
    %c0_125 = arith.constant 0 : index
    %417 = vector.load %arg4[%c2_124, %c0_125] : memref<7x256xf32, #tpu.memory_space<vmem>>, vector<1x256xf32>
    %418 = arith.mulf %416, %417 : vector<1x256xf32>
    %419 = arith.addf %407, %418 : vector<1x256xf32>
    %c240_i32 = arith.constant 240 : i32
    %420 = tpu.dynamic_rotate %26 by %c240_i32 dim 1 : vector<1x256xf32>, i32 -> vector<1x256xf32>
    %c240_i32_126 = arith.constant 240 : i32
    %421 = tpu.dynamic_rotate %31 by %c240_i32_126 dim 1 : vector<1x256xf32>, i32 -> vector<1x256xf32>
    %c31 = arith.constant 31 : index
    %422 = memref.load %arg1[%c31] : memref<98xf32, #tpu.memory_space<smem>>
    %c80 = arith.constant 80 : index
    %423 = memref.load %arg1[%c80] : memref<98xf32, #tpu.memory_space<smem>>
    %424 = vector.broadcast %422 : f32 to vector<1x256xf32>
    %425 = arith.mulf %420, %424 : vector<1x256xf32>
    %426 = vector.broadcast %423 : f32 to vector<1x256xf32>
    %427 = arith.mulf %421, %426 : vector<1x256xf32>
    %428 = arith.addf %425, %427 : vector<1x256xf32>
    %c3_127 = arith.constant 3 : index
    %c0_128 = arith.constant 0 : index
    %429 = vector.load %arg4[%c3_127, %c0_128] : memref<7x256xf32, #tpu.memory_space<vmem>>, vector<1x256xf32>
    %430 = arith.mulf %428, %429 : vector<1x256xf32>
    %431 = arith.addf %419, %430 : vector<1x256xf32>
    %c239_i32 = arith.constant 239 : i32
    %432 = tpu.dynamic_rotate %26 by %c239_i32 dim 1 : vector<1x256xf32>, i32 -> vector<1x256xf32>
    %c239_i32_129 = arith.constant 239 : i32
    %433 = tpu.dynamic_rotate %31 by %c239_i32_129 dim 1 : vector<1x256xf32>, i32 -> vector<1x256xf32>
    %c32 = arith.constant 32 : index
    %434 = memref.load %arg1[%c32] : memref<98xf32, #tpu.memory_space<smem>>
    %c81 = arith.constant 81 : index
    %435 = memref.load %arg1[%c81] : memref<98xf32, #tpu.memory_space<smem>>
    %436 = vector.broadcast %434 : f32 to vector<1x256xf32>
    %437 = arith.mulf %432, %436 : vector<1x256xf32>
    %438 = vector.broadcast %435 : f32 to vector<1x256xf32>
    %439 = arith.mulf %433, %438 : vector<1x256xf32>
    %440 = arith.addf %437, %439 : vector<1x256xf32>
    %c4_130 = arith.constant 4 : index
    %c0_131 = arith.constant 0 : index
    %441 = vector.load %arg4[%c4_130, %c0_131] : memref<7x256xf32, #tpu.memory_space<vmem>>, vector<1x256xf32>
    %442 = arith.mulf %440, %441 : vector<1x256xf32>
    %443 = arith.addf %431, %442 : vector<1x256xf32>
    %c238_i32 = arith.constant 238 : i32
    %444 = tpu.dynamic_rotate %26 by %c238_i32 dim 1 : vector<1x256xf32>, i32 -> vector<1x256xf32>
    %c238_i32_132 = arith.constant 238 : i32
    %445 = tpu.dynamic_rotate %31 by %c238_i32_132 dim 1 : vector<1x256xf32>, i32 -> vector<1x256xf32>
    %c33 = arith.constant 33 : index
    %446 = memref.load %arg1[%c33] : memref<98xf32, #tpu.memory_space<smem>>
    %c82 = arith.constant 82 : index
    %447 = memref.load %arg1[%c82] : memref<98xf32, #tpu.memory_space<smem>>
    %448 = vector.broadcast %446 : f32 to vector<1x256xf32>
    %449 = arith.mulf %444, %448 : vector<1x256xf32>
    %450 = vector.broadcast %447 : f32 to vector<1x256xf32>
    %451 = arith.mulf %445, %450 : vector<1x256xf32>
    %452 = arith.addf %449, %451 : vector<1x256xf32>
    %c5_133 = arith.constant 5 : index
    %c0_134 = arith.constant 0 : index
    %453 = vector.load %arg4[%c5_133, %c0_134] : memref<7x256xf32, #tpu.memory_space<vmem>>, vector<1x256xf32>
    %454 = arith.mulf %452, %453 : vector<1x256xf32>
    %455 = arith.addf %443, %454 : vector<1x256xf32>
    %c237_i32 = arith.constant 237 : i32
    %456 = tpu.dynamic_rotate %26 by %c237_i32 dim 1 : vector<1x256xf32>, i32 -> vector<1x256xf32>
    %c237_i32_135 = arith.constant 237 : i32
    %457 = tpu.dynamic_rotate %31 by %c237_i32_135 dim 1 : vector<1x256xf32>, i32 -> vector<1x256xf32>
    %c34 = arith.constant 34 : index
    %458 = memref.load %arg1[%c34] : memref<98xf32, #tpu.memory_space<smem>>
    %c83 = arith.constant 83 : index
    %459 = memref.load %arg1[%c83] : memref<98xf32, #tpu.memory_space<smem>>
    %460 = vector.broadcast %458 : f32 to vector<1x256xf32>
    %461 = arith.mulf %456, %460 : vector<1x256xf32>
    %462 = vector.broadcast %459 : f32 to vector<1x256xf32>
    %463 = arith.mulf %457, %462 : vector<1x256xf32>
    %464 = arith.addf %461, %463 : vector<1x256xf32>
    %c6_136 = arith.constant 6 : index
    %c0_137 = arith.constant 0 : index
    %465 = vector.load %arg4[%c6_136, %c0_137] : memref<7x256xf32, #tpu.memory_space<vmem>>, vector<1x256xf32>
    %466 = arith.mulf %464, %465 : vector<1x256xf32>
    %467 = arith.addf %455, %466 : vector<1x256xf32>
    %c4_138 = arith.constant 4 : index
    %c0_139 = arith.constant 0 : index
    %468 = vector.load %arg3[%c4_138, %c0_139] : memref<7x256xf32, #tpu.memory_space<vmem>>, vector<1x256xf32>
    %469 = arith.mulf %467, %468 : vector<1x256xf32>
    %470 = arith.addf %382, %469 : vector<1x256xf32>
    %cst_140 = arith.constant 0.000000e+00 : f32
    %471 = vector.broadcast %cst_140 : f32 to vector<1x256xf32>
    %c227_i32 = arith.constant 227 : i32
    %472 = tpu.dynamic_rotate %26 by %c227_i32 dim 1 : vector<1x256xf32>, i32 -> vector<1x256xf32>
    %c227_i32_141 = arith.constant 227 : i32
    %473 = tpu.dynamic_rotate %31 by %c227_i32_141 dim 1 : vector<1x256xf32>, i32 -> vector<1x256xf32>
    %c35 = arith.constant 35 : index
    %474 = memref.load %arg1[%c35] : memref<98xf32, #tpu.memory_space<smem>>
    %c84 = arith.constant 84 : index
    %475 = memref.load %arg1[%c84] : memref<98xf32, #tpu.memory_space<smem>>
    %476 = vector.broadcast %474 : f32 to vector<1x256xf32>
    %477 = arith.mulf %472, %476 : vector<1x256xf32>
    %478 = vector.broadcast %475 : f32 to vector<1x256xf32>
    %479 = arith.mulf %473, %478 : vector<1x256xf32>
    %480 = arith.addf %477, %479 : vector<1x256xf32>
    %c0_142 = arith.constant 0 : index
    %c0_143 = arith.constant 0 : index
    %481 = vector.load %arg4[%c0_142, %c0_143] : memref<7x256xf32, #tpu.memory_space<vmem>>, vector<1x256xf32>
    %482 = arith.mulf %480, %481 : vector<1x256xf32>
    %483 = arith.addf %471, %482 : vector<1x256xf32>
    %c226_i32 = arith.constant 226 : i32
    %484 = tpu.dynamic_rotate %26 by %c226_i32 dim 1 : vector<1x256xf32>, i32 -> vector<1x256xf32>
    %c226_i32_144 = arith.constant 226 : i32
    %485 = tpu.dynamic_rotate %31 by %c226_i32_144 dim 1 : vector<1x256xf32>, i32 -> vector<1x256xf32>
    %c36 = arith.constant 36 : index
    %486 = memref.load %arg1[%c36] : memref<98xf32, #tpu.memory_space<smem>>
    %c85 = arith.constant 85 : index
    %487 = memref.load %arg1[%c85] : memref<98xf32, #tpu.memory_space<smem>>
    %488 = vector.broadcast %486 : f32 to vector<1x256xf32>
    %489 = arith.mulf %484, %488 : vector<1x256xf32>
    %490 = vector.broadcast %487 : f32 to vector<1x256xf32>
    %491 = arith.mulf %485, %490 : vector<1x256xf32>
    %492 = arith.addf %489, %491 : vector<1x256xf32>
    %c1_145 = arith.constant 1 : index
    %c0_146 = arith.constant 0 : index
    %493 = vector.load %arg4[%c1_145, %c0_146] : memref<7x256xf32, #tpu.memory_space<vmem>>, vector<1x256xf32>
    %494 = arith.mulf %492, %493 : vector<1x256xf32>
    %495 = arith.addf %483, %494 : vector<1x256xf32>
    %c225_i32 = arith.constant 225 : i32
    %496 = tpu.dynamic_rotate %26 by %c225_i32 dim 1 : vector<1x256xf32>, i32 -> vector<1x256xf32>
    %c225_i32_147 = arith.constant 225 : i32
    %497 = tpu.dynamic_rotate %31 by %c225_i32_147 dim 1 : vector<1x256xf32>, i32 -> vector<1x256xf32>
    %c37 = arith.constant 37 : index
    %498 = memref.load %arg1[%c37] : memref<98xf32, #tpu.memory_space<smem>>
    %c86 = arith.constant 86 : index
    %499 = memref.load %arg1[%c86] : memref<98xf32, #tpu.memory_space<smem>>
    %500 = vector.broadcast %498 : f32 to vector<1x256xf32>
    %501 = arith.mulf %496, %500 : vector<1x256xf32>
    %502 = vector.broadcast %499 : f32 to vector<1x256xf32>
    %503 = arith.mulf %497, %502 : vector<1x256xf32>
    %504 = arith.addf %501, %503 : vector<1x256xf32>
    %c2_148 = arith.constant 2 : index
    %c0_149 = arith.constant 0 : index
    %505 = vector.load %arg4[%c2_148, %c0_149] : memref<7x256xf32, #tpu.memory_space<vmem>>, vector<1x256xf32>
    %506 = arith.mulf %504, %505 : vector<1x256xf32>
    %507 = arith.addf %495, %506 : vector<1x256xf32>
    %c224_i32 = arith.constant 224 : i32
    %508 = tpu.dynamic_rotate %26 by %c224_i32 dim 1 : vector<1x256xf32>, i32 -> vector<1x256xf32>
    %c224_i32_150 = arith.constant 224 : i32
    %509 = tpu.dynamic_rotate %31 by %c224_i32_150 dim 1 : vector<1x256xf32>, i32 -> vector<1x256xf32>
    %c38 = arith.constant 38 : index
    %510 = memref.load %arg1[%c38] : memref<98xf32, #tpu.memory_space<smem>>
    %c87 = arith.constant 87 : index
    %511 = memref.load %arg1[%c87] : memref<98xf32, #tpu.memory_space<smem>>
    %512 = vector.broadcast %510 : f32 to vector<1x256xf32>
    %513 = arith.mulf %508, %512 : vector<1x256xf32>
    %514 = vector.broadcast %511 : f32 to vector<1x256xf32>
    %515 = arith.mulf %509, %514 : vector<1x256xf32>
    %516 = arith.addf %513, %515 : vector<1x256xf32>
    %c3_151 = arith.constant 3 : index
    %c0_152 = arith.constant 0 : index
    %517 = vector.load %arg4[%c3_151, %c0_152] : memref<7x256xf32, #tpu.memory_space<vmem>>, vector<1x256xf32>
    %518 = arith.mulf %516, %517 : vector<1x256xf32>
    %519 = arith.addf %507, %518 : vector<1x256xf32>
    %c223_i32 = arith.constant 223 : i32
    %520 = tpu.dynamic_rotate %26 by %c223_i32 dim 1 : vector<1x256xf32>, i32 -> vector<1x256xf32>
    %c223_i32_153 = arith.constant 223 : i32
    %521 = tpu.dynamic_rotate %31 by %c223_i32_153 dim 1 : vector<1x256xf32>, i32 -> vector<1x256xf32>
    %c39 = arith.constant 39 : index
    %522 = memref.load %arg1[%c39] : memref<98xf32, #tpu.memory_space<smem>>
    %c88 = arith.constant 88 : index
    %523 = memref.load %arg1[%c88] : memref<98xf32, #tpu.memory_space<smem>>
    %524 = vector.broadcast %522 : f32 to vector<1x256xf32>
    %525 = arith.mulf %520, %524 : vector<1x256xf32>
    %526 = vector.broadcast %523 : f32 to vector<1x256xf32>
    %527 = arith.mulf %521, %526 : vector<1x256xf32>
    %528 = arith.addf %525, %527 : vector<1x256xf32>
    %c4_154 = arith.constant 4 : index
    %c0_155 = arith.constant 0 : index
    %529 = vector.load %arg4[%c4_154, %c0_155] : memref<7x256xf32, #tpu.memory_space<vmem>>, vector<1x256xf32>
    %530 = arith.mulf %528, %529 : vector<1x256xf32>
    %531 = arith.addf %519, %530 : vector<1x256xf32>
    %c222_i32 = arith.constant 222 : i32
    %532 = tpu.dynamic_rotate %26 by %c222_i32 dim 1 : vector<1x256xf32>, i32 -> vector<1x256xf32>
    %c222_i32_156 = arith.constant 222 : i32
    %533 = tpu.dynamic_rotate %31 by %c222_i32_156 dim 1 : vector<1x256xf32>, i32 -> vector<1x256xf32>
    %c40 = arith.constant 40 : index
    %534 = memref.load %arg1[%c40] : memref<98xf32, #tpu.memory_space<smem>>
    %c89 = arith.constant 89 : index
    %535 = memref.load %arg1[%c89] : memref<98xf32, #tpu.memory_space<smem>>
    %536 = vector.broadcast %534 : f32 to vector<1x256xf32>
    %537 = arith.mulf %532, %536 : vector<1x256xf32>
    %538 = vector.broadcast %535 : f32 to vector<1x256xf32>
    %539 = arith.mulf %533, %538 : vector<1x256xf32>
    %540 = arith.addf %537, %539 : vector<1x256xf32>
    %c5_157 = arith.constant 5 : index
    %c0_158 = arith.constant 0 : index
    %541 = vector.load %arg4[%c5_157, %c0_158] : memref<7x256xf32, #tpu.memory_space<vmem>>, vector<1x256xf32>
    %542 = arith.mulf %540, %541 : vector<1x256xf32>
    %543 = arith.addf %531, %542 : vector<1x256xf32>
    %c221_i32 = arith.constant 221 : i32
    %544 = tpu.dynamic_rotate %26 by %c221_i32 dim 1 : vector<1x256xf32>, i32 -> vector<1x256xf32>
    %c221_i32_159 = arith.constant 221 : i32
    %545 = tpu.dynamic_rotate %31 by %c221_i32_159 dim 1 : vector<1x256xf32>, i32 -> vector<1x256xf32>
    %c41 = arith.constant 41 : index
    %546 = memref.load %arg1[%c41] : memref<98xf32, #tpu.memory_space<smem>>
    %c90 = arith.constant 90 : index
    %547 = memref.load %arg1[%c90] : memref<98xf32, #tpu.memory_space<smem>>
    %548 = vector.broadcast %546 : f32 to vector<1x256xf32>
    %549 = arith.mulf %544, %548 : vector<1x256xf32>
    %550 = vector.broadcast %547 : f32 to vector<1x256xf32>
    %551 = arith.mulf %545, %550 : vector<1x256xf32>
    %552 = arith.addf %549, %551 : vector<1x256xf32>
    %c6_160 = arith.constant 6 : index
    %c0_161 = arith.constant 0 : index
    %553 = vector.load %arg4[%c6_160, %c0_161] : memref<7x256xf32, #tpu.memory_space<vmem>>, vector<1x256xf32>
    %554 = arith.mulf %552, %553 : vector<1x256xf32>
    %555 = arith.addf %543, %554 : vector<1x256xf32>
    %c5_162 = arith.constant 5 : index
    %c0_163 = arith.constant 0 : index
    %556 = vector.load %arg3[%c5_162, %c0_163] : memref<7x256xf32, #tpu.memory_space<vmem>>, vector<1x256xf32>
    %557 = arith.mulf %555, %556 : vector<1x256xf32>
    %558 = arith.addf %470, %557 : vector<1x256xf32>
    %cst_164 = arith.constant 0.000000e+00 : f32
    %559 = vector.broadcast %cst_164 : f32 to vector<1x256xf32>
    %c211_i32 = arith.constant 211 : i32
    %560 = tpu.dynamic_rotate %26 by %c211_i32 dim 1 : vector<1x256xf32>, i32 -> vector<1x256xf32>
    %c211_i32_165 = arith.constant 211 : i32
    %561 = tpu.dynamic_rotate %31 by %c211_i32_165 dim 1 : vector<1x256xf32>, i32 -> vector<1x256xf32>
    %c42 = arith.constant 42 : index
    %562 = memref.load %arg1[%c42] : memref<98xf32, #tpu.memory_space<smem>>
    %c91 = arith.constant 91 : index
    %563 = memref.load %arg1[%c91] : memref<98xf32, #tpu.memory_space<smem>>
    %564 = vector.broadcast %562 : f32 to vector<1x256xf32>
    %565 = arith.mulf %560, %564 : vector<1x256xf32>
    %566 = vector.broadcast %563 : f32 to vector<1x256xf32>
    %567 = arith.mulf %561, %566 : vector<1x256xf32>
    %568 = arith.addf %565, %567 : vector<1x256xf32>
    %c0_166 = arith.constant 0 : index
    %c0_167 = arith.constant 0 : index
    %569 = vector.load %arg4[%c0_166, %c0_167] : memref<7x256xf32, #tpu.memory_space<vmem>>, vector<1x256xf32>
    %570 = arith.mulf %568, %569 : vector<1x256xf32>
    %571 = arith.addf %559, %570 : vector<1x256xf32>
    %c210_i32 = arith.constant 210 : i32
    %572 = tpu.dynamic_rotate %26 by %c210_i32 dim 1 : vector<1x256xf32>, i32 -> vector<1x256xf32>
    %c210_i32_168 = arith.constant 210 : i32
    %573 = tpu.dynamic_rotate %31 by %c210_i32_168 dim 1 : vector<1x256xf32>, i32 -> vector<1x256xf32>
    %c43 = arith.constant 43 : index
    %574 = memref.load %arg1[%c43] : memref<98xf32, #tpu.memory_space<smem>>
    %c92 = arith.constant 92 : index
    %575 = memref.load %arg1[%c92] : memref<98xf32, #tpu.memory_space<smem>>
    %576 = vector.broadcast %574 : f32 to vector<1x256xf32>
    %577 = arith.mulf %572, %576 : vector<1x256xf32>
    %578 = vector.broadcast %575 : f32 to vector<1x256xf32>
    %579 = arith.mulf %573, %578 : vector<1x256xf32>
    %580 = arith.addf %577, %579 : vector<1x256xf32>
    %c1_169 = arith.constant 1 : index
    %c0_170 = arith.constant 0 : index
    %581 = vector.load %arg4[%c1_169, %c0_170] : memref<7x256xf32, #tpu.memory_space<vmem>>, vector<1x256xf32>
    %582 = arith.mulf %580, %581 : vector<1x256xf32>
    %583 = arith.addf %571, %582 : vector<1x256xf32>
    %c209_i32 = arith.constant 209 : i32
    %584 = tpu.dynamic_rotate %26 by %c209_i32 dim 1 : vector<1x256xf32>, i32 -> vector<1x256xf32>
    %c209_i32_171 = arith.constant 209 : i32
    %585 = tpu.dynamic_rotate %31 by %c209_i32_171 dim 1 : vector<1x256xf32>, i32 -> vector<1x256xf32>
    %c44 = arith.constant 44 : index
    %586 = memref.load %arg1[%c44] : memref<98xf32, #tpu.memory_space<smem>>
    %c93 = arith.constant 93 : index
    %587 = memref.load %arg1[%c93] : memref<98xf32, #tpu.memory_space<smem>>
    %588 = vector.broadcast %586 : f32 to vector<1x256xf32>
    %589 = arith.mulf %584, %588 : vector<1x256xf32>
    %590 = vector.broadcast %587 : f32 to vector<1x256xf32>
    %591 = arith.mulf %585, %590 : vector<1x256xf32>
    %592 = arith.addf %589, %591 : vector<1x256xf32>
    %c2_172 = arith.constant 2 : index
    %c0_173 = arith.constant 0 : index
    %593 = vector.load %arg4[%c2_172, %c0_173] : memref<7x256xf32, #tpu.memory_space<vmem>>, vector<1x256xf32>
    %594 = arith.mulf %592, %593 : vector<1x256xf32>
    %595 = arith.addf %583, %594 : vector<1x256xf32>
    %c208_i32 = arith.constant 208 : i32
    %596 = tpu.dynamic_rotate %26 by %c208_i32 dim 1 : vector<1x256xf32>, i32 -> vector<1x256xf32>
    %c208_i32_174 = arith.constant 208 : i32
    %597 = tpu.dynamic_rotate %31 by %c208_i32_174 dim 1 : vector<1x256xf32>, i32 -> vector<1x256xf32>
    %c45 = arith.constant 45 : index
    %598 = memref.load %arg1[%c45] : memref<98xf32, #tpu.memory_space<smem>>
    %c94 = arith.constant 94 : index
    %599 = memref.load %arg1[%c94] : memref<98xf32, #tpu.memory_space<smem>>
    %600 = vector.broadcast %598 : f32 to vector<1x256xf32>
    %601 = arith.mulf %596, %600 : vector<1x256xf32>
    %602 = vector.broadcast %599 : f32 to vector<1x256xf32>
    %603 = arith.mulf %597, %602 : vector<1x256xf32>
    %604 = arith.addf %601, %603 : vector<1x256xf32>
    %c3_175 = arith.constant 3 : index
    %c0_176 = arith.constant 0 : index
    %605 = vector.load %arg4[%c3_175, %c0_176] : memref<7x256xf32, #tpu.memory_space<vmem>>, vector<1x256xf32>
    %606 = arith.mulf %604, %605 : vector<1x256xf32>
    %607 = arith.addf %595, %606 : vector<1x256xf32>
    %c207_i32 = arith.constant 207 : i32
    %608 = tpu.dynamic_rotate %26 by %c207_i32 dim 1 : vector<1x256xf32>, i32 -> vector<1x256xf32>
    %c207_i32_177 = arith.constant 207 : i32
    %609 = tpu.dynamic_rotate %31 by %c207_i32_177 dim 1 : vector<1x256xf32>, i32 -> vector<1x256xf32>
    %c46 = arith.constant 46 : index
    %610 = memref.load %arg1[%c46] : memref<98xf32, #tpu.memory_space<smem>>
    %c95 = arith.constant 95 : index
    %611 = memref.load %arg1[%c95] : memref<98xf32, #tpu.memory_space<smem>>
    %612 = vector.broadcast %610 : f32 to vector<1x256xf32>
    %613 = arith.mulf %608, %612 : vector<1x256xf32>
    %614 = vector.broadcast %611 : f32 to vector<1x256xf32>
    %615 = arith.mulf %609, %614 : vector<1x256xf32>
    %616 = arith.addf %613, %615 : vector<1x256xf32>
    %c4_178 = arith.constant 4 : index
    %c0_179 = arith.constant 0 : index
    %617 = vector.load %arg4[%c4_178, %c0_179] : memref<7x256xf32, #tpu.memory_space<vmem>>, vector<1x256xf32>
    %618 = arith.mulf %616, %617 : vector<1x256xf32>
    %619 = arith.addf %607, %618 : vector<1x256xf32>
    %c206_i32 = arith.constant 206 : i32
    %620 = tpu.dynamic_rotate %26 by %c206_i32 dim 1 : vector<1x256xf32>, i32 -> vector<1x256xf32>
    %c206_i32_180 = arith.constant 206 : i32
    %621 = tpu.dynamic_rotate %31 by %c206_i32_180 dim 1 : vector<1x256xf32>, i32 -> vector<1x256xf32>
    %c47 = arith.constant 47 : index
    %622 = memref.load %arg1[%c47] : memref<98xf32, #tpu.memory_space<smem>>
    %c96 = arith.constant 96 : index
    %623 = memref.load %arg1[%c96] : memref<98xf32, #tpu.memory_space<smem>>
    %624 = vector.broadcast %622 : f32 to vector<1x256xf32>
    %625 = arith.mulf %620, %624 : vector<1x256xf32>
    %626 = vector.broadcast %623 : f32 to vector<1x256xf32>
    %627 = arith.mulf %621, %626 : vector<1x256xf32>
    %628 = arith.addf %625, %627 : vector<1x256xf32>
    %c5_181 = arith.constant 5 : index
    %c0_182 = arith.constant 0 : index
    %629 = vector.load %arg4[%c5_181, %c0_182] : memref<7x256xf32, #tpu.memory_space<vmem>>, vector<1x256xf32>
    %630 = arith.mulf %628, %629 : vector<1x256xf32>
    %631 = arith.addf %619, %630 : vector<1x256xf32>
    %c205_i32 = arith.constant 205 : i32
    %632 = tpu.dynamic_rotate %26 by %c205_i32 dim 1 : vector<1x256xf32>, i32 -> vector<1x256xf32>
    %c205_i32_183 = arith.constant 205 : i32
    %633 = tpu.dynamic_rotate %31 by %c205_i32_183 dim 1 : vector<1x256xf32>, i32 -> vector<1x256xf32>
    %c48 = arith.constant 48 : index
    %634 = memref.load %arg1[%c48] : memref<98xf32, #tpu.memory_space<smem>>
    %c97 = arith.constant 97 : index
    %635 = memref.load %arg1[%c97] : memref<98xf32, #tpu.memory_space<smem>>
    %636 = vector.broadcast %634 : f32 to vector<1x256xf32>
    %637 = arith.mulf %632, %636 : vector<1x256xf32>
    %638 = vector.broadcast %635 : f32 to vector<1x256xf32>
    %639 = arith.mulf %633, %638 : vector<1x256xf32>
    %640 = arith.addf %637, %639 : vector<1x256xf32>
    %c6_184 = arith.constant 6 : index
    %c0_185 = arith.constant 0 : index
    %641 = vector.load %arg4[%c6_184, %c0_185] : memref<7x256xf32, #tpu.memory_space<vmem>>, vector<1x256xf32>
    %642 = arith.mulf %640, %641 : vector<1x256xf32>
    %643 = arith.addf %631, %642 : vector<1x256xf32>
    %c6_186 = arith.constant 6 : index
    %c0_187 = arith.constant 0 : index
    %644 = vector.load %arg3[%c6_186, %c0_187] : memref<7x256xf32, #tpu.memory_space<vmem>>, vector<1x256xf32>
    %645 = arith.mulf %643, %644 : vector<1x256xf32>
    %646 = arith.addf %558, %645 : vector<1x256xf32>
    %c0_188 = arith.constant 0 : index
    %647 = memref.load %arg2[%c0_188] : memref<2xf32, #tpu.memory_space<smem>>
    %648 = vector.broadcast %647 : f32 to vector<1x256xf32>
    %649 = arith.mulf %646, %648 : vector<1x256xf32>
    %c1_189 = arith.constant 1 : index
    %650 = memref.load %arg2[%c1_189] : memref<2xf32, #tpu.memory_space<smem>>
    %651 = vector.broadcast %650 : f32 to vector<1x256xf32>
    %652 = arith.addf %649, %651 : vector<1x256xf32>
    %cst_190 = arith.constant 0.000000e+00 : f32
    %653 = vector.broadcast %cst_190 : f32 to vector<1x256xf32>
    %654 = arith.subf %653, %652 : vector<1x256xf32>
    %655 = math.exp %654 : vector<1x256xf32>
    %cst_191 = arith.constant 1.000000e+00 : f32
    %656 = vector.broadcast %cst_191 : f32 to vector<1x256xf32>
    %657 = arith.addf %656, %655 : vector<1x256xf32>
    %658 = tpu.reciprocal %657 : vector<1x256xf32> -> vector<1x256xf32>
    %c0_192 = arith.constant 0 : index
    %c0_193 = arith.constant 0 : index
    %c0_194 = arith.constant 0 : index
    %659 = vector.load %arg5[%c0_192, %c0_193, %c0_194] : memref<1x32x256xf32, #tpu.memory_space<vmem>>, vector<1x32x256xf32>
    %660 = vector.shape_cast %659 : vector<1x32x256xf32> to vector<32x256xf32>
    %661 = vector.broadcast %658 : vector<1x256xf32> to vector<32x256xf32>
    %662 = arith.mulf %660, %661 : vector<32x256xf32>
    %c0_195 = arith.constant 0 : index
    %c0_196 = arith.constant 0 : index
    %c0_197 = arith.constant 0 : index
    %663 = vector.load %arg6[%c0_195, %c0_196, %c0_197] : memref<1x32x256xf32, #tpu.memory_space<vmem>>, vector<1x32x256xf32>
    %664 = vector.shape_cast %663 : vector<1x32x256xf32> to vector<32x256xf32>
    %665 = vector.shape_cast %662 : vector<32x256xf32> to vector<1x32x256xf32>
    tpu.vector_store %arg6[%c0_195, %c0_196, %c0_197], %665 {strides = array<i32>} : memref<1x32x256xf32, #tpu.memory_space<vmem>>, vector<1x32x256xf32>,
    return
  }
  func.func @transform_0(%arg0: i32) -> i32 {
    %c0_i32 = arith.constant 0 : i32
    %c0_i32_0 = arith.constant 0 : i32
    return %c0_i32 : i32
  }
  func.func @transform_1(%arg0: i32) -> i32 {
    %c0_i32 = arith.constant 0 : i32
    %c0_i32_0 = arith.constant 0 : i32
    return %c0_i32 : i32
  }
  func.func @transform_2(%arg0: i32) -> (i32, i32) {
    %c0_i32 = arith.constant 0 : i32
    %c0_i32_0 = arith.constant 0 : i32
    %c0_i32_1 = arith.constant 0 : i32
    return %c0_i32, %c0_i32_0 : i32, i32
  }
  func.func @transform_3(%arg0: i32) -> (i32, i32) {
    %c0_i32 = arith.constant 0 : i32
    %c0_i32_0 = arith.constant 0 : i32
    %c0_i32_1 = arith.constant 0 : i32
    return %c0_i32, %c0_i32_0 : i32, i32
  }
  func.func @transform_4(%arg0: i32) -> (i32, i32, i32) {
    %c0_i32 = arith.constant 0 : i32
    %c0_i32_0 = arith.constant 0 : i32
    %c0_i32_1 = arith.constant 0 : i32
    return %arg0, %c0_i32, %c0_i32_0 : i32, i32, i32
  }
  func.func @transform_5(%arg0: i32) -> (i32, i32, i32) {
    %c0_i32 = arith.constant 0 : i32
    %c0_i32_0 = arith.constant 0 : i32
    %c0_i32_1 = arith.constant 0 : i32
    return %arg0, %c0_i32, %c0_i32_0 : i32, i32, i32
  }
}

</mosaic_0001>

<llo_original>
// kernel: tpu_custom_call.1
$region0: #{tpu_custom_call.1}
  #allocation0 [shape = 'u32[]', space=smem, size = 0x4, offset = 0x4, fixed_abs, tag = 'smem constant byte address 0x4 - core index']
  #allocation1 [shape = 'u32[144,128]{1,0:T(1,128)}', space=vmem, size = 0x12000, scoped, tag = 'internal scratch']
  %s0 = inlined_call_operand.hbm [shape: f32[98], index: 0, kind: input, shape index: {}]
  %s1 = inlined_call_operand.vmem [shape: f32[2], index: 1, kind: input, shape index: {}]
  %s2 = inlined_call_operand.hbm [shape: f32[7,256], index: 2, kind: input, shape index: {}]
  %s3 = inlined_call_operand.hbm [shape: f32[7,256], index: 3, kind: input, shape index: {}]
  %s4 = inlined_call_operand.hbm [shape: f32[2,32,256], index: 4, kind: input, shape index: {}]
  %s5 = inlined_call_operand.hbm [shape: f32[2,32,256], index: 5, kind: output, shape index: {}]
  %s6 = sld [smem:[#allocation0]]
  $region73: #{tpu_custom_call.1} parent=0
    _
  %s8 = ssub.s32 1, %s6
  %s9 = scalar_select 0, %s8, %s6
  $region1: #{tpu_custom_call.1} parent=0
    #allocation2 [shape = 'u8[512]{0}', space=smem, size = 0x200, scoped, tag = 'input window, operand 0, single buffered']
    #allocation3 [shape = 's32[2]{0}', space=sflag, size = 0x8, scoped, tag = 'scoped memory for tpu_custom_call.1']
    #allocation4 [shape = 's32[2]{0}', space=sflag, size = 0x8, scoped, tag = 'scoped memory for tpu_custom_call.1']
    #allocation5 [shape = 's32[2]{0}', space=sflag, size = 0x8, scoped, tag = 'scoped memory for tpu_custom_call.1']
    #allocation6 [shape = 's32[2]{0}', space=sflag, size = 0x8, scoped, tag = 'scoped memory for tpu_custom_call.1']
    #allocation7 [shape = 'u8[512]{0}', space=smem, size = 0x200, scoped, tag = 'input window, operand 1, single buffered']
    #allocation8 [shape = 'u8[8192]{0}', space=vmem, size = 0x2000, scoped, tag = 'input window, operand 2, single buffered']
    #allocation9 [shape = 'u8[8192]{0}', space=vmem, size = 0x2000, scoped, tag = 'input window, operand 3, single buffered']
    #allocation10 [shape = 's32[1]{0}', space=sflag, size = 0x4, scoped, tag = 'scoped memory for tpu_custom_call.1']
    #allocation11 [shape = 'u8[65536]{0}', space=vmem, size = 0x10000, scoped, tag = 'input window, operand 4']
    #allocation12 [shape = 'u8[65536]{0}', space=vmem, size = 0x10000, scoped, tag = 'output window, operand 0']
    %10 = vsyncpa [#allocation5], 0
    %11 = vsyncpa [#allocation6], 0
    %12 = vsyncpa [#allocation3], 0
    %13 = vsyncpa [#allocation10], 0
    %14 = vsyncpa [#allocation4], 0
    %s15 = scalar_lea.sflag [#allocation4], 1
    %16 = vsyncpa %s15, 0
    loop: start=0, step=1, limit=4
    $region2: #{tpu_custom_call.1} parent=1 // loop_pre_header
      _
    $region3: #{tpu_custom_call.1} parent=1 // loop_header
      %s18 = sphi 0, %s22
      %p19 = scmp.ge.s32.totalorder %s18, 4
      %s26 = sphi 0, %s26
      %s28 = sphi 0, %s26
      %s29 = sphi 0, %s28
      %s43 = sphi 0, %s29
      %s47 = sphi 0, %s47
      %s49 = sphi 0, %s47
      %s50 = sphi 0, %s49
      %s64 = sphi 0, %s50
      %s68 = sphi 0, %s68
      %s70 = sphi 0, %s68
      %s71 = sphi 0, %s70
      %s85 = sphi 0, %s71
      %s89 = sphi 0, %s89
      %s91 = sphi 0, %s89
      %s92 = sphi 0, %s91
      %s106 = sphi 0, %s92
      %s112 = sphi 0, %s114
      %s115 = sphi 0, %s112
      %s116 = sphi 0, %s115
      %s132 = sphi 0, %s116
      %s138 = sphi 0, %s140
      %s141 = sphi 0, %s138
      %s142 = sphi 0, %s141
      %s158 = sphi 0, %s142
    $region4: #{tpu_custom_call.1} parent=1 // loop_header_branch
      %21 = sbr.rel (%p19) target = $region8
    $region5: #{tpu_custom_call.1} parent=1 // loop_body
      %s23 = ssub.s32 %s18, 1
      %s24 = ssub.s32 %s18, 2
      %s25 = sadd.s32 %s18, 1
      %s27 = sadd.s32 %s26, 1
      %p30 = scmp.eq.s32.totalorder %s18, 1
      %p31 = scmp.ne.s32.totalorder %s26, %s28
      %p32 = scmp.eq.s32.totalorder %s18, 0
      %p33 = por %p31, %p32
      %p34 = scmp.ne.s32.totalorder %s26, %s28
      %p35 = scmp.eq.s32.totalorder %s23, 1
      %p36 = por %p34, %p35
      %p37 = scmp.ne.s32.totalorder %s28, %s29
      %p38 = scmp.eq.s32.totalorder %s23, 0
      %p39 = por %p37, %p38
      %p40 = scmp.ne.s32.totalorder %s28, %s29
      %p41 = scmp.eq.s32.totalorder %s24, 1
      %p42 = por %p40, %p41
      %p44 = scmp.ne.s32.totalorder %s29, %s43
      %p45 = scmp.eq.s32.totalorder %s24, 0
      %p46 = por %p44, %p45
      %s48 = sadd.s32 %s47, 1
      %p51 = scmp.eq.s32.totalorder %s18, 1
      %p52 = scmp.ne.s32.totalorder %s47, %s49
      %p53 = scmp.eq.s32.totalorder %s18, 0
      %p54 = por %p52, %p53
      %p55 = scmp.ne.s32.totalorder %s47, %s49
      %p56 = scmp.eq.s32.totalorder %s23, 1
      %p57 = por %p55, %p56
      %p58 = scmp.ne.s32.totalorder %s49, %s50
      %p59 = scmp.eq.s32.totalorder %s23, 0
      %p60 = por %p58, %p59
      %p61 = scmp.ne.s32.totalorder %s49, %s50
      %p62 = scmp.eq.s32.totalorder %s24, 1
      %p63 = por %p61, %p62
      %p65 = scmp.ne.s32.totalorder %s50, %s64
      %p66 = scmp.eq.s32.totalorder %s24, 0
      %p67 = por %p65, %p66
      %s69 = sadd.s32 %s68, 1
      %p72 = scmp.eq.s32.totalorder %s18, 1
      %p73 = scmp.ne.s32.totalorder %s68, %s70
      %p74 = scmp.eq.s32.totalorder %s18, 0
      %p75 = por %p73, %p74
      %p76 = scmp.ne.s32.totalorder %s68, %s70
      %p77 = scmp.eq.s32.totalorder %s23, 1
      %p78 = por %p76, %p77
      %p79 = scmp.ne.s32.totalorder %s70, %s71
      %p80 = scmp.eq.s32.totalorder %s23, 0
      %p81 = por %p79, %p80
      %p82 = scmp.ne.s32.totalorder %s70, %s71
      %p83 = scmp.eq.s32.totalorder %s24, 1
      %p84 = por %p82, %p83
      %p86 = scmp.ne.s32.totalorder %s71, %s85
      %p87 = scmp.eq.s32.totalorder %s24, 0
      %p88 = por %p86, %p87
      %s90 = sadd.s32 %s89, 1
      %p93 = scmp.eq.s32.totalorder %s18, 1
      %p94 = scmp.ne.s32.totalorder %s89, %s91
      %p95 = scmp.eq.s32.totalorder %s18, 0
      %p96 = por %p94, %p95
      %p97 = scmp.ne.s32.totalorder %s89, %s91
      %p98 = scmp.eq.s32.totalorder %s23, 1
      %p99 = por %p97, %p98
      %p100 = scmp.ne.s32.totalorder %s91, %s92
      %p101 = scmp.eq.s32.totalorder %s23, 0
      %p102 = por %p100, %p101
      %p103 = scmp.ne.s32.totalorder %s91, %s92
      %p104 = scmp.eq.s32.totalorder %s24, 1
      %p105 = por %p103, %p104
      %p107 = scmp.ne.s32.totalorder %s92, %s106
      %p108 = scmp.eq.s32.totalorder %s24, 0
      %p109 = por %p107, %p108
      %s110 = ssub.s32 %s18, %s25
      %p111 = scmp.eq.s32.totalorder %s110, 0
      %s113 = sadd.s32 %s112, 1
      %s114 = scalar_select %p111, %s112, %s113
      %p117 = pneg %p111
      %p118 = scmp.eq.s32.totalorder %s18, 1
      %p119 = por %p117, %p118
      %p120 = scmp.ne.s32.totalorder %s112, %s115
      %p121 = scmp.eq.s32.totalorder %s18, 0
      %p122 = por %p120, %p121
      %p123 = scmp.ne.s32.totalorder %s112, %s115
      %p124 = scmp.eq.s32.totalorder %s23, 1
      %p125 = por %p123, %p124
      %p126 = scmp.ne.s32.totalorder %s115, %s116
      %p127 = scmp.eq.s32.totalorder %s23, 0
      %p128 = por %p126, %p127
      %p129 = scmp.ne.s32.totalorder %s115, %s116
      %p130 = scmp.eq.s32.totalorder %s24, 1
      %p131 = por %p129, %p130
      %p133 = scmp.ne.s32.totalorder %s116, %s132
      %p134 = scmp.eq.s32.totalorder %s24, 0
      %p135 = por %p133, %p134
      %s136 = ssub.s32 %s18, %s25
      %p137 = scmp.eq.s32.totalorder %s136, 0
      %s139 = sadd.s32 %s138, 1
      %s140 = scalar_select %p137, %s138, %s139
      %p143 = pneg %p137
      %p144 = scmp.eq.s32.totalorder %s18, 1
      %p145 = por %p143, %p144
      %p146 = scmp.ne.s32.totalorder %s138, %s141
      %p147 = scmp.eq.s32.totalorder %s18, 0
      %p148 = por %p146, %p147
      %p149 = scmp.ne.s32.totalorder %s138, %s141
      %p150 = scmp.eq.s32.totalorder %s23, 1
      %p151 = por %p149, %p150
      %p152 = scmp.ne.s32.totalorder %s141, %s142
      %p153 = scmp.eq.s32.totalorder %s23, 0
      %p154 = por %p152, %p153
      %p155 = scmp.ne.s32.totalorder %s141, %s142
      %p156 = scmp.eq.s32.totalorder %s24, 1
      %p157 = por %p155, %p156
      %p159 = scmp.ne.s32.totalorder %s142, %s158
      %p160 = scmp.eq.s32.totalorder %s24, 0
      %p161 = por %p159, %p160
      %p162 = scmp.le.s32.totalorder 1, %s18
      %p163 = scmp.lt.s32.totalorder %s18, 3
      %p164 = pnand %p162, %p163
      %p165 = pneg %p164
      // Predicated region
      $region9: #{tpu_custom_call.1} parent=5 // pred_check
        _
      $region10: #{tpu_custom_call.1} parent=5 // pred_check_branch
        %167 = sbr.rel (%p164) target = $region12
      $region11: #{tpu_custom_call.1} parent=5 // pred_region
        %s168 = ssub.s32 %s18, 1
        // Predicated region
        $region13: #{tpu_custom_call.1} parent=11 // pred_check
          %p169 = pneg %p39
        $region14: #{tpu_custom_call.1} parent=11 // pred_check_branch
          %171 = sbr.rel (%p169) target = $region16
        $region15: #{tpu_custom_call.1} parent=11 // pred_region
          %s173 = ssub.s32 16, 16
          %174 = vsyncadd [#allocation5], %s173
          %177 = dma.hbm_to_smem %s0, 16, [#allocation2], [#allocation5]
        $region16: #{tpu_custom_call.1} parent=11 // pred_fallthru
          _
        // Predicated region
        $region17: #{tpu_custom_call.1} parent=11 // pred_check
          %p178 = pneg %p60
        $region18: #{tpu_custom_call.1} parent=11 // pred_check_branch
          %180 = sbr.rel (%p178) target = $region20
        $region19: #{tpu_custom_call.1} parent=11 // pred_region
          %s182 = ssub.s32 16, 16
          %183 = vsyncadd [#allocation6], %s182
          %s185 = sshll.u32 %s1, 4
          %s186 = int_to_ptr.vmem [resolvable:$true] %s185
          %188 = dma.vmem_to_smem %s186, 16, [#allocation7], [#allocation6]
        $region20: #{tpu_custom_call.1} parent=11 // pred_fallthru
          _
        // Predicated region
        $region21: #{tpu_custom_call.1} parent=11 // pred_check
          %p189 = pneg %p81
        $region22: #{tpu_custom_call.1} parent=11 // pred_check_branch
          %191 = sbr.rel (%p189) target = $region24
        $region23: #{tpu_custom_call.1} parent=11 // pred_region
          %s193 = ssub.s32 256, 256
          %194 = vsyncadd [#allocation3], %s193
          %s196 = sshll.u32 [#allocation8], 4
          %s197 = int_to_ptr.vmem [resolvable:$true] %s196
          %199 = dma.hbm_to_vmem [thread:$0]  %s2, 256, %s197, [#allocation3]
        $region24: #{tpu_custom_call.1} parent=11 // pred_fallthru
          _
        // Predicated region
        $region25: #{tpu_custom_call.1} parent=11 // pred_check
          %p200 = pneg %p102
        $region26: #{tpu_custom_call.1} parent=11 // pred_check_branch
          %202 = sbr.rel (%p200) target = $region28
        $region27: #{tpu_custom_call.1} parent=11 // pred_region
          %s204 = ssub.s32 256, 256
          %205 = vsyncadd [#allocation10], %s204
          %s207 = sshll.u32 [#allocation9], 4
          %s208 = int_to_ptr.vmem [resolvable:$true] %s207
          %210 = dma.hbm_to_vmem [thread:$0]  %s3, 256, %s208, [#allocation10]
        $region28: #{tpu_custom_call.1} parent=11 // pred_fallthru
          _
      $region12: #{tpu_custom_call.1} parent=5 // pred_fallthru
        _
      %p211 = scmp.lt.s32.totalorder %s18, 2
      // Predicated region
      $region29: #{tpu_custom_call.1} parent=5 // pred_check
        %p212 = pneg %p211
      $region30: #{tpu_custom_call.1} parent=5 // pred_check_branch
        %214 = sbr.rel (%p212) target = $region32
      $region31: #{tpu_custom_call.1} parent=5 // pred_region
        // Predicated region
        $region33: #{tpu_custom_call.1} parent=31 // pred_check
          %p215 = pneg %p122
        $region34: #{tpu_custom_call.1} parent=31 // pred_check_branch
          %217 = sbr.rel (%p215) target = $region36
        $region35: #{tpu_custom_call.1} parent=31 // pred_region
          %s218 = sand.u32 %s18, 1
          %s219 = scalar_lea.sflag [#allocation3], %s218
          %s220 = sand.u32 %s112, 1
          %s221 = smul.addr %s220, 64
          %s222 = scalar_lea.vmem [#allocation11], %s221
          %s224 = ssub.s32 1024, 1024
          %225 = vsyncadd %s219, %s224
          %s226 = smul.addr %s18, 8
          %s227 = smul.addr %s226, 128
          %s228 = scalar_lea.hbm %s4, %s227
          %s229 = sshll.u32 %s222, 4
          %s230 = int_to_ptr.vmem [resolvable:$true] %s229
          %235 = dma.hbm_to_vmem [thread:$0]  %s228, 1024, %s230, %s219, 256, 256, 16
        $region36: #{tpu_custom_call.1} parent=31 // pred_fallthru
          _
      $region32: #{tpu_custom_call.1} parent=5 // pred_fallthru
        _
      %p236 = scmp.le.s32.totalorder 1, %s18
      %p237 = scmp.lt.s32.totalorder %s18, 3
      %p238 = pnand %p236, %p237
      %p239 = pneg %p238
      // Predicated region
      $region37: #{tpu_custom_call.1} parent=5 // pred_check
        _
      $region38: #{tpu_custom_call.1} parent=5 // pred_check_branch
        %241 = sbr.rel (%p238) target = $region40
      $region39: #{tpu_custom_call.1} parent=5 // pred_region
        %s242 = ssub.s32 %s18, 1
        // Predicated region
        $region41: #{tpu_custom_call.1} parent=39 // pred_check
          %p243 = pneg %p39
        $region42: #{tpu_custom_call.1} parent=39 // pred_check_branch
          %245 = sbr.rel (%p243) target = $region44
        $region43: #{tpu_custom_call.1} parent=39 // pred_region
          %246 = dma.done [#allocation5], 16
        $region44: #{tpu_custom_call.1} parent=39 // pred_fallthru
          _
        // Predicated region
        $region45: #{tpu_custom_call.1} parent=39 // pred_check
          %p247 = pneg %p60
        $region46: #{tpu_custom_call.1} parent=39 // pred_check_branch
          %249 = sbr.rel (%p247) target = $region48
        $region47: #{tpu_custom_call.1} parent=39 // pred_region
          %250 = dma.done [#allocation6], 16
        $region48: #{tpu_custom_call.1} parent=39 // pred_fallthru
          _
        // Predicated region
        $region49: #{tpu_custom_call.1} parent=39 // pred_check
          %p251 = pneg %p81
        $region50: #{tpu_custom_call.1} parent=39 // pred_check_branch
          %253 = sbr.rel (%p251) target = $region52
        $region51: #{tpu_custom_call.1} parent=39 // pred_region
          %254 = dma.done [#allocation3], 256
        $region52: #{tpu_custom_call.1} parent=39 // pred_fallthru
          _
        // Predicated region
        $region53: #{tpu_custom_call.1} parent=39 // pred_check
          %p255 = pneg %p102
        $region54: #{tpu_custom_call.1} parent=39 // pred_check_branch
          %257 = sbr.rel (%p255) target = $region56
        $region55: #{tpu_custom_call.1} parent=39 // pred_region
          %258 = dma.done [#allocation10], 256
        $region56: #{tpu_custom_call.1} parent=39 // pred_fallthru
          _
        %s259 = sand.u32 %s23, 1
        %s260 = scalar_lea.sflag [#allocation3], %s259
        %s261 = sand.u32 %s115, 1
        %s262 = smul.addr %s261, 64
        %s263 = scalar_lea.vmem [#allocation11], %s262
        // Predicated region
        $region57: #{tpu_custom_call.1} parent=39 // pred_check
          %p264 = pneg %p128
        $region58: #{tpu_custom_call.1} parent=39 // pred_check_branch
          %266 = sbr.rel (%p264) target = $region60
        $region59: #{tpu_custom_call.1} parent=39 // pred_region
          %267 = dma.done %s260, 1024
        $region60: #{tpu_custom_call.1} parent=39 // pred_fallthru
          _
        %268 = sfence
        %p269 = pneg %p39
        %p270 = pneg %p36
        %p271 = pneg %p60
        %p272 = pneg %p57
        %p273 = pneg %p81
        %p274 = pneg %p78
        %p275 = pneg %p102
        %p276 = pneg %p99
        %s277 = sand.u32 %s23, 1
        %s278 = scalar_lea.sflag [#allocation3], %s277
        %s279 = sand.u32 %s115, 1
        %s280 = smul.addr %s279, 64
        %s281 = scalar_lea.vmem [#allocation11], %s280
        %p282 = pneg %p128
        %p283 = pneg %p125
        %p284 = pneg %p154
        %p285 = pneg %p151
        %s286 = sand.u32 %s141, 1
        %s287 = scalar_lea.sflag [#allocation4], %s286
        %s288 = sand.u32 %s141, 1
        %s289 = smul.addr %s288, 64
        %s290 = scalar_lea.vmem [#allocation12], %s289
        %v291 = vld [vmem:[%s263] sm:$0xff]
        %v292 = vld [vmem:[%s263 + $0x8] sm:$0xff]
        %v293 = vrot.slane %v291, 4
        %v294 = vmax.f32 %v291, %v293
        %v295 = vrot.slane %v294, 2
        %v296 = vmax.f32 %v294, %v295
        %v297 = vrot.slane %v296, 1
        %v298 = vmax.f32 %v296, %v297
        %v299 = vrot.slane %v292, 4
        %v300 = vmax.f32 %v292, %v299
        %v301 = vrot.slane %v300, 2
        %v302 = vmax.f32 %v300, %v301
        %v303 = vrot.slane %v302, 1
        %v304 = vmax.f32 %v302, %v303
        %v305 = vrot.slane %v291, 4
        %v306 = vadd.f32 %v291, %v305
        %v307 = vrot.slane %v306, 2
        %v308 = vadd.f32 %v306, %v307
        %v309 = vrot.slane %v308, 1
        %v310 = vadd.f32 %v308, %v309
        %v311 = vrot.slane %v292, 4
        %v312 = vadd.f32 %v292, %v311
        %v313 = vrot.slane %v312, 2
        %v314 = vadd.f32 %v312, %v313
        %v315 = vrot.slane %v314, 1
        %v316 = vadd.f32 %v314, %v315
        %v317 = vld [vmem:[%s263 + $0x10] sm:$0xff]
        %v318 = vld [vmem:[%s263 + $0x18] sm:$0xff]
        %v319 = vrot.slane %v317, 4
        %v320 = vmax.f32 %v317, %v319
        %v321 = vrot.slane %v320, 2
        %v322 = vmax.f32 %v320, %v321
        %v323 = vrot.slane %v322, 1
        %v324 = vmax.f32 %v322, %v323
        %v325 = vrot.slane %v318, 4
        %v326 = vmax.f32 %v318, %v325
        %v327 = vrot.slane %v326, 2
        %v328 = vmax.f32 %v326, %v327
        %v329 = vrot.slane %v328, 1
        %v330 = vmax.f32 %v328, %v329
        %v331 = vmax.f32 %v298, %v324
        %v332 = vmax.f32 %v304, %v330
        %v333 = vrot.slane %v317, 4
        %v334 = vadd.f32 %v317, %v333
        %v335 = vrot.slane %v334, 2
        %v336 = vadd.f32 %v334, %v335
        %v337 = vrot.slane %v336, 1
        %v338 = vadd.f32 %v336, %v337
        %v339 = vrot.slane %v318, 4
        %v340 = vadd.f32 %v318, %v339
        %v341 = vrot.slane %v340, 2
        %v342 = vadd.f32 %v340, %v341
        %v343 = vrot.slane %v342, 1
        %v344 = vadd.f32 %v342, %v343
        %v345 = vadd.f32 %v310, %v338
        %v346 = vadd.f32 %v316, %v344
        %v347 = vld [vmem:[%s263 + $0x20] sm:$0xff]
        %v348 = vld [vmem:[%s263 + $0x28] sm:$0xff]
        %v349 = vrot.slane %v347, 4
        %v350 = vmax.f32 %v347, %v349
        %v351 = vrot.slane %v350, 2
        %v352 = vmax.f32 %v350, %v351
        %v353 = vrot.slane %v352, 1
        %v354 = vmax.f32 %v352, %v353
        %v355 = vrot.slane %v348, 4
        %v356 = vmax.f32 %v348, %v355
        %v357 = vrot.slane %v356, 2
        %v358 = vmax.f32 %v356, %v357
        %v359 = vrot.slane %v358, 1
        %v360 = vmax.f32 %v358, %v359
        %v361 = vmax.f32 %v331, %v354
        %v362 = vmax.f32 %v332, %v360
        %v363 = vrot.slane %v347, 4
        %v364 = vadd.f32 %v347, %v363
        %v365 = vrot.slane %v364, 2
        %v366 = vadd.f32 %v364, %v365
        %v367 = vrot.slane %v366, 1
        %v368 = vadd.f32 %v366, %v367
        %v369 = vrot.slane %v348, 4
        %v370 = vadd.f32 %v348, %v369
        %v371 = vrot.slane %v370, 2
        %v372 = vadd.f32 %v370, %v371
        %v373 = vrot.slane %v372, 1
        %v374 = vadd.f32 %v372, %v373
        %v375 = vadd.f32 %v345, %v368
        %v376 = vadd.f32 %v346, %v374
        %v377 = vld [vmem:[%s263 + $0x30] sm:$0xff]
        %v378 = vld [vmem:[%s263 + $0x38] sm:$0xff]
        %v379 = vrot.slane %v377, 4
        %v380 = vmax.f32 %v377, %v379
        %v381 = vrot.slane %v380, 2
        %v382 = vmax.f32 %v380, %v381
        %v383 = vrot.slane %v382, 1
        %v384 = vmax.f32 %v382, %v383
        %v385 = vrot.slane %v378, 4
        %v386 = vmax.f32 %v378, %v385
        %v387 = vrot.slane %v386, 2
        %v388 = vmax.f32 %v386, %v387
        %v389 = vrot.slane %v388, 1
        %v390 = vmax.f32 %v388, %v389
        %v391 = vmax.f32 %v361, %v384
        %v392 = vmax.f32 %v362, %v390
        %v393 = vrot.slane %v377, 4
        %v394 = vadd.f32 %v377, %v393
        %v395 = vrot.slane %v394, 2
        %v396 = vadd.f32 %v394, %v395
        %v397 = vrot.slane %v396, 1
        %v398 = vadd.f32 %v396, %v397
        %v399 = vrot.slane %v378, 4
        %v400 = vadd.f32 %v378, %v399
        %v401 = vrot.slane %v400, 2
        %v402 = vadd.f32 %v400, %v401
        %v403 = vrot.slane %v402, 1
        %v404 = vadd.f32 %v402, %v403
        %v405 = vadd.f32 %v375, %v398
        %v406 = vadd.f32 %v376, %v404
        %v407 = vmul.f32 %v405, 0.03125
        %v408 = vmul.f32 %v406, 0.03125
        %409 = vrot.lane.b32.xlu0 %v391, 51
        %v410 = vpop.permute.xlu0 %409
        %411 = vrot.lane.b32.xlu0 %v392, 51
        %v412 = vpop.permute.xlu0 %411
        %v413 = vlaneseq
        %v414 = vand.u32 %v413, 127
        %vm415 = vcmp.lt.s32.totalorder %v414, 51
        %v416 = vsel %vm415, %v410, %v412
        %v417 = vsel %vm415, %v412, %v410
        %418 = vrot.lane.b32.xlu0 %v407, 51
        %v419 = vpop.permute.xlu0 %418
        %420 = vrot.lane.b32.xlu0 %v408, 51
        %v421 = vpop.permute.xlu0 %420
        %v422 = vsel %vm415, %v419, %v421
        %v423 = vsel %vm415, %v421, %v419
        %s424 = sld [smem:[#allocation2]]
        %s425 = sld [smem:[#allocation2 + $0x31]]
        %v426 = vstv %s424
        %v427 = vmul.f32 %v417, %v426
        %v428 = vmul.f32 %v416, %v426
        %v429 = vstv %s425
        %v430 = vmul.f32 %v423, %v429
        %v431 = vmul.f32 %v422, %v429
        %v432 = vadd.f32 %v427, %v430
        %v433 = vadd.f32 %v428, %v431
        %v434 = vld [vmem:[#allocation9] ss:$8 sm:$0x3]
        %v436 = vlaneseq
        %v437 = vshrl.u32 %v436, 7
        %v438 = vsub.s32 0, %v437
        %v439 = vrot.slane %v434, %v438
        %v440 = vlaneseq
        %v441 = vshrl.u32 %v440, 7
        %v442 = vsub.s32 1, %v441
        %v443 = vrot.slane %v434, %v442
        %v446 = vmul.f32 %v432, %v439
        %v447 = vmul.f32 %v433, %v443
        %v448 = vadd.f32 %v446, 0.0
        %v449 = vadd.f32 %v447, 0.0
        %450 = vrot.lane.b32.xlu0 %v391, 50
        %v451 = vpop.permute.xlu0 %450
        %452 = vrot.lane.b32.xlu0 %v392, 50
        %v453 = vpop.permute.xlu0 %452
        %vm454 = vcmp.lt.s32.totalorder %v414, 50
        %v455 = vsel %vm454, %v451, %v453
        %v456 = vsel %vm454, %v453, %v451
        %457 = vrot.lane.b32.xlu0 %v407, 50
        %v458 = vpop.permute.xlu0 %457
        %459 = vrot.lane.b32.xlu0 %v408, 50
        %v460 = vpop.permute.xlu0 %459
        %v461 = vsel %vm454, %v458, %v460
        %v462 = vsel %vm454, %v460, %v458
        %s463 = sld [smem:[#allocation2 + $0x1]]
        %s464 = sld [smem:[#allocation2 + $0x32]]
        %v465 = vstv %s463
        %v466 = vmul.f32 %v456, %v465
        %v467 = vmul.f32 %v455, %v465
        %v468 = vstv %s464
        %v469 = vmul.f32 %v462, %v468
        %v470 = vmul.f32 %v461, %v468
        %v471 = vadd.f32 %v466, %v469
        %v472 = vadd.f32 %v467, %v470
        %s473 = scalar_lea.vmem [#allocation9], 1
        %v474 = vld [vmem:[%s473] ss:$8 sm:$0x3]
        %v476 = vlaneseq
        %v477 = vshrl.u32 %v476, 7
        %v478 = vsub.s32 0, %v477
        %v479 = vrot.slane %v474, %v478
        %v480 = vlaneseq
        %v481 = vshrl.u32 %v480, 7
        %v482 = vsub.s32 1, %v481
        %v483 = vrot.slane %v474, %v482
        %v486 = vmul.f32 %v471, %v479
        %v487 = vmul.f32 %v472, %v483
        %v488 = vadd.f32 %v448, %v486
        %v489 = vadd.f32 %v449, %v487
        %490 = vrot.lane.b32.xlu0 %v391, 49
        %v491 = vpop.permute.xlu0 %490
        %492 = vrot.lane.b32.xlu0 %v392, 49
        %v493 = vpop.permute.xlu0 %492
        %vm494 = vcmp.lt.s32.totalorder %v414, 49
        %v495 = vsel %vm494, %v491, %v493
        %v496 = vsel %vm494, %v493, %v491
        %497 = vrot.lane.b32.xlu0 %v407, 49
        %v498 = vpop.permute.xlu0 %497
        %499 = vrot.lane.b32.xlu0 %v408, 49
        %v500 = vpop.permute.xlu0 %499
        %v501 = vsel %vm494, %v498, %v500
        %v502 = vsel %vm494, %v500, %v498
        %s503 = sld [smem:[#allocation2 + $0x2]]
        %s504 = sld [smem:[#allocation2 + $0x33]]
        %v505 = vstv %s503
        %v506 = vmul.f32 %v496, %v505
        %v507 = vmul.f32 %v495, %v505
        %v508 = vstv %s504
        %v509 = vmul.f32 %v502, %v508
        %v510 = vmul.f32 %v501, %v508
        %v511 = vadd.f32 %v506, %v509
        %v512 = vadd.f32 %v507, %v510
        %s513 = scalar_lea.vmem [#allocation9], 2
        %v514 = vld [vmem:[%s513] ss:$8 sm:$0x3]
        %v516 = vlaneseq
        %v517 = vshrl.u32 %v516, 7
        %v518 = vsub.s32 0, %v517
        %v519 = vrot.slane %v514, %v518
        %v520 = vlaneseq
        %v521 = vshrl.u32 %v520, 7
        %v522 = vsub.s32 1, %v521
        %v523 = vrot.slane %v514, %v522
        %v526 = vmul.f32 %v511, %v519
        %v527 = vmul.f32 %v512, %v523
        %v528 = vadd.f32 %v488, %v526
        %v529 = vadd.f32 %v489, %v527
        %530 = vrot.lane.b32.xlu0 %v391, 48
        %v531 = vpop.permute.xlu0 %530
        %532 = vrot.lane.b32.xlu0 %v392, 48
        %v533 = vpop.permute.xlu0 %532
        %vm534 = vcmp.lt.s32.totalorder %v414, 48
        %v535 = vsel %vm534, %v531, %v533
        %v536 = vsel %vm534, %v533, %v531
        %537 = vrot.lane.b32.xlu0 %v407, 48
        %v538 = vpop.permute.xlu0 %537
        %539 = vrot.lane.b32.xlu0 %v408, 48
        %v540 = vpop.permute.xlu0 %539
        %v541 = vsel %vm534, %v538, %v540
        %v542 = vsel %vm534, %v540, %v538
        %s543 = sld [smem:[#allocation2 + $0x3]]
        %s544 = sld [smem:[#allocation2 + $0x34]]
        %v545 = vstv %s543
        %v546 = vmul.f32 %v536, %v545
        %v547 = vmul.f32 %v535, %v545
        %v548 = vstv %s544
        %v549 = vmul.f32 %v542, %v548
        %v550 = vmul.f32 %v541, %v548
        %v551 = vadd.f32 %v546, %v549
        %v552 = vadd.f32 %v547, %v550
        %s553 = scalar_lea.vmem [#allocation9], 3
        %v554 = vld [vmem:[%s553] ss:$8 sm:$0x3]
        %v556 = vlaneseq
        %v557 = vshrl.u32 %v556, 7
        %v558 = vsub.s32 0, %v557
        %v559 = vrot.slane %v554, %v558
        %v560 = vlaneseq
        %v561 = vshrl.u32 %v560, 7
        %v562 = vsub.s32 1, %v561
        %v563 = vrot.slane %v554, %v562
        %v566 = vmul.f32 %v551, %v559
        %v567 = vmul.f32 %v552, %v563
        %v568 = vadd.f32 %v528, %v566
        %v569 = vadd.f32 %v529, %v567
        %570 = vrot.lane.b32.xlu0 %v391, 47
        %v571 = vpop.permute.xlu0 %570
        %572 = vrot.lane.b32.xlu0 %v392, 47
        %v573 = vpop.permute.xlu0 %572
        %vm574 = vcmp.lt.s32.totalorder %v414, 47
        %v575 = vsel %vm574, %v571, %v573
        %v576 = vsel %vm574, %v573, %v571
        %577 = vrot.lane.b32.xlu0 %v407, 47
        %v578 = vpop.permute.xlu0 %577
        %579 = vrot.lane.b32.xlu0 %v408, 47
        %v580 = vpop.permute.xlu0 %579
        %v581 = vsel %vm574, %v578, %v580
        %v582 = vsel %vm574, %v580, %v578
        %s583 = sld [smem:[#allocation2 + $0x4]]
        %s584 = sld [smem:[#allocation2 + $0x35]]
        %v585 = vstv %s583
        %v586 = vmul.f32 %v576, %v585
        %v587 = vmul.f32 %v575, %v585
        %v588 = vstv %s584
        %v589 = vmul.f32 %v582, %v588
        %v590 = vmul.f32 %v581, %v588
        %v591 = vadd.f32 %v586, %v589
        %v592 = vadd.f32 %v587, %v590
        %s593 = scalar_lea.vmem [#allocation9], 4
        %v594 = vld [vmem:[%s593] ss:$8 sm:$0x3]
        %v596 = vlaneseq
        %v597 = vshrl.u32 %v596, 7
        %v598 = vsub.s32 0, %v597
        %v599 = vrot.slane %v594, %v598
        %v600 = vlaneseq
        %v601 = vshrl.u32 %v600, 7
        %v602 = vsub.s32 1, %v601
        %v603 = vrot.slane %v594, %v602
        %v606 = vmul.f32 %v591, %v599
        %v607 = vmul.f32 %v592, %v603
        %v608 = vadd.f32 %v568, %v606
        %v609 = vadd.f32 %v569, %v607
        %610 = vrot.lane.b32.xlu0 %v391, 46
        %v611 = vpop.permute.xlu0 %610
        %612 = vrot.lane.b32.xlu0 %v392, 46
        %v613 = vpop.permute.xlu0 %612
        %vm614 = vcmp.lt.s32.totalorder %v414, 46
        %v615 = vsel %vm614, %v611, %v613
        %v616 = vsel %vm614, %v613, %v611
        %617 = vrot.lane.b32.xlu0 %v407, 46
        %v618 = vpop.permute.xlu0 %617
        %619 = vrot.lane.b32.xlu0 %v408, 46
        %v620 = vpop.permute.xlu0 %619
        %v621 = vsel %vm614, %v618, %v620
        %v622 = vsel %vm614, %v620, %v618
        %s623 = sld [smem:[#allocation2 + $0x5]]
        %s624 = sld [smem:[#allocation2 + $0x36]]
        %v625 = vstv %s623
        %v626 = vmul.f32 %v616, %v625
        %v627 = vmul.f32 %v615, %v625
        %v628 = vstv %s624
        %v629 = vmul.f32 %v622, %v628
        %v630 = vmul.f32 %v621, %v628
        %v631 = vadd.f32 %v626, %v629
        %v632 = vadd.f32 %v627, %v630
        %s633 = scalar_lea.vmem [#allocation9], 5
        %v634 = vld [vmem:[%s633] ss:$8 sm:$0x3]
        %v636 = vlaneseq
        %v637 = vshrl.u32 %v636, 7
        %v638 = vsub.s32 0, %v637
        %v639 = vrot.slane %v634, %v638
        %v640 = vlaneseq
        %v641 = vshrl.u32 %v640, 7
        %v642 = vsub.s32 1, %v641
        %v643 = vrot.slane %v634, %v642
        %v646 = vmul.f32 %v631, %v639
        %v647 = vmul.f32 %v632, %v643
        %v648 = vadd.f32 %v608, %v646
        %v649 = vadd.f32 %v609, %v647
        %650 = vrot.lane.b32.xlu0 %v391, 45
        %v651 = vpop.permute.xlu0 %650
        %652 = vrot.lane.b32.xlu0 %v392, 45
        %v653 = vpop.permute.xlu0 %652
        %vm654 = vcmp.lt.s32.totalorder %v414, 45
        %v655 = vsel %vm654, %v651, %v653
        %v656 = vsel %vm654, %v653, %v651
        %657 = vrot.lane.b32.xlu0 %v407, 45
        %v658 = vpop.permute.xlu0 %657
        %659 = vrot.lane.b32.xlu0 %v408, 45
        %v660 = vpop.permute.xlu0 %659
        %v661 = vsel %vm654, %v658, %v660
        %v662 = vsel %vm654, %v660, %v658
        %s663 = sld [smem:[#allocation2 + $0x6]]
        %s664 = sld [smem:[#allocation2 + $0x37]]
        %v665 = vstv %s663
        %v666 = vmul.f32 %v656, %v665
        %v667 = vmul.f32 %v655, %v665
        %v668 = vstv %s664
        %v669 = vmul.f32 %v662, %v668
        %v670 = vmul.f32 %v661, %v668
        %v671 = vadd.f32 %v666, %v669
        %v672 = vadd.f32 %v667, %v670
        %s673 = scalar_lea.vmem [#allocation9], 6
        %v674 = vld [vmem:[%s673] ss:$8 sm:$0x3]
        %v676 = vlaneseq
        %v677 = vshrl.u32 %v676, 7
        %v678 = vsub.s32 0, %v677
        %v679 = vrot.slane %v674, %v678
        %v680 = vlaneseq
        %v681 = vshrl.u32 %v680, 7
        %v682 = vsub.s32 1, %v681
        %v683 = vrot.slane %v674, %v682
        %v686 = vmul.f32 %v671, %v679
        %v687 = vmul.f32 %v672, %v683
        %v688 = vadd.f32 %v648, %v686
        %v689 = vadd.f32 %v649, %v687
        %v690 = vld [vmem:[#allocation8] ss:$8 sm:$0x3]
        %v692 = vlaneseq
        %v693 = vshrl.u32 %v692, 7
        %v694 = vsub.s32 0, %v693
        %v695 = vrot.slane %v690, %v694
        %v696 = vlaneseq
        %v697 = vshrl.u32 %v696, 7
        %v698 = vsub.s32 1, %v697
        %v699 = vrot.slane %v690, %v698
        %v702 = vmul.f32 %v688, %v695
        %v703 = vmul.f32 %v689, %v699
        %v704 = vadd.f32 %v702, 0.0
        %v705 = vadd.f32 %v703, 0.0
        %706 = vrot.lane.b32.xlu0 %v391, 35
        %v707 = vpop.permute.xlu0 %706
        %708 = vrot.lane.b32.xlu0 %v392, 35
        %v709 = vpop.permute.xlu0 %708
        %vm710 = vcmp.lt.s32.totalorder %v414, 35
        %v711 = vsel %vm710, %v707, %v709
        %v712 = vsel %vm710, %v709, %v707
        %713 = vrot.lane.b32.xlu0 %v407, 35
        %v714 = vpop.permute.xlu0 %713
        %715 = vrot.lane.b32.xlu0 %v408, 35
        %v716 = vpop.permute.xlu0 %715
        %v717 = vsel %vm710, %v714, %v716
        %v718 = vsel %vm710, %v716, %v714
        %s719 = sld [smem:[#allocation2 + $0x7]]
        %s720 = sld [smem:[#allocation2 + $0x38]]
        %v721 = vstv %s719
        %v722 = vmul.f32 %v712, %v721
        %v723 = vmul.f32 %v711, %v721
        %v724 = vstv %s720
        %v725 = vmul.f32 %v718, %v724
        %v726 = vmul.f32 %v717, %v724
        %v727 = vadd.f32 %v722, %v725
        %v728 = vadd.f32 %v723, %v726
        %v729 = vmul.f32 %v727, %v439
        %v730 = vmul.f32 %v728, %v443
        %v731 = vadd.f32 %v729, 0.0
        %v732 = vadd.f32 %v730, 0.0
        %733 = vrot.lane.b32.xlu0 %v391, 34
        %v734 = vpop.permute.xlu0 %733
        %735 = vrot.lane.b32.xlu0 %v392, 34
        %v736 = vpop.permute.xlu0 %735
        %vm737 = vcmp.lt.s32.totalorder %v414, 34
        %v738 = vsel %vm737, %v734, %v736
        %v739 = vsel %vm737, %v736, %v734
        %740 = vrot.lane.b32.xlu0 %v407, 34
        %v741 = vpop.permute.xlu0 %740
        %742 = vrot.lane.b32.xlu0 %v408, 34
        %v743 = vpop.permute.xlu0 %742
        %v744 = vsel %vm737, %v741, %v743
        %v745 = vsel %vm737, %v743, %v741
        %s746 = sld [smem:[#allocation2 + $0x8]]
        %s747 = sld [smem:[#allocation2 + $0x39]]
        %v748 = vstv %s746
        %v749 = vmul.f32 %v739, %v748
        %v750 = vmul.f32 %v738, %v748
        %v751 = vstv %s747
        %v752 = vmul.f32 %v745, %v751
        %v753 = vmul.f32 %v744, %v751
        %v754 = vadd.f32 %v749, %v752
        %v755 = vadd.f32 %v750, %v753
        %v756 = vmul.f32 %v754, %v479
        %v757 = vmul.f32 %v755, %v483
        %v758 = vadd.f32 %v731, %v756
        %v759 = vadd.f32 %v732, %v757
        %760 = vrot.lane.b32.xlu0 %v391, 33
        %v761 = vpop.permute.xlu0 %760
        %762 = vrot.lane.b32.xlu0 %v392, 33
        %v763 = vpop.permute.xlu0 %762
        %vm764 = vcmp.lt.s32.totalorder %v414, 33
        %v765 = vsel %vm764, %v761, %v763
        %v766 = vsel %vm764, %v763, %v761
        %767 = vrot.lane.b32.xlu0 %v407, 33
        %v768 = vpop.permute.xlu0 %767
        %769 = vrot.lane.b32.xlu0 %v408, 33
        %v770 = vpop.permute.xlu0 %769
        %v771 = vsel %vm764, %v768, %v770
        %v772 = vsel %vm764, %v770, %v768
        %s773 = sld [smem:[#allocation2 + $0x9]]
        %s774 = sld [smem:[#allocation2 + $0x3a]]
        %v775 = vstv %s773
        %v776 = vmul.f32 %v766, %v775
        %v777 = vmul.f32 %v765, %v775
        %v778 = vstv %s774
        %v779 = vmul.f32 %v772, %v778
        %v780 = vmul.f32 %v771, %v778
        %v781 = vadd.f32 %v776, %v779
        %v782 = vadd.f32 %v777, %v780
        %v783 = vmul.f32 %v781, %v519
        %v784 = vmul.f32 %v782, %v523
        %v785 = vadd.f32 %v758, %v783
        %v786 = vadd.f32 %v759, %v784
        %787 = vrot.lane.b32.xlu0 %v391, 32
        %v788 = vpop.permute.xlu0 %787
        %789 = vrot.lane.b32.xlu0 %v392, 32
        %v790 = vpop.permute.xlu0 %789
        %vm791 = vcmp.lt.s32.totalorder %v414, 32
        %v792 = vsel %vm791, %v788, %v790
        %v793 = vsel %vm791, %v790, %v788
        %794 = vrot.lane.b32.xlu0 %v407, 32
        %v795 = vpop.permute.xlu0 %794
        %796 = vrot.lane.b32.xlu0 %v408, 32
        %v797 = vpop.permute.xlu0 %796
        %v798 = vsel %vm791, %v795, %v797
        %v799 = vsel %vm791, %v797, %v795
        %s800 = sld [smem:[#allocation2 + $0xa]]
        %s801 = sld [smem:[#allocation2 + $0x3b]]
        %v802 = vstv %s800
        %v803 = vmul.f32 %v793, %v802
        %v804 = vmul.f32 %v792, %v802
        %v805 = vstv %s801
        %v806 = vmul.f32 %v799, %v805
        %v807 = vmul.f32 %v798, %v805
        %v808 = vadd.f32 %v803, %v806
        %v809 = vadd.f32 %v804, %v807
        %v810 = vmul.f32 %v808, %v559
        %v811 = vmul.f32 %v809, %v563
        %v812 = vadd.f32 %v785, %v810
        %v813 = vadd.f32 %v786, %v811
        %814 = vrot.lane.b32.xlu0 %v391, 31
        %v815 = vpop.permute.xlu0 %814
        %816 = vrot.lane.b32.xlu0 %v392, 31
        %v817 = vpop.permute.xlu0 %816
        %vm818 = vcmp.lt.s32.totalorder %v414, 31
        %v819 = vsel %vm818, %v815, %v817
        %v820 = vsel %vm818, %v817, %v815
        %821 = vrot.lane.b32.xlu0 %v407, 31
        %v822 = vpop.permute.xlu0 %821
        %823 = vrot.lane.b32.xlu0 %v408, 31
        %v824 = vpop.permute.xlu0 %823
        %v825 = vsel %vm818, %v822, %v824
        %v826 = vsel %vm818, %v824, %v822
        %s827 = sld [smem:[#allocation2 + $0xb]]
        %s828 = sld [smem:[#allocation2 + $0x3c]]
        %v829 = vstv %s827
        %v830 = vmul.f32 %v820, %v829
        %v831 = vmul.f32 %v819, %v829
        %v832 = vstv %s828
        %v833 = vmul.f32 %v826, %v832
        %v834 = vmul.f32 %v825, %v832
        %v835 = vadd.f32 %v830, %v833
        %v836 = vadd.f32 %v831, %v834
        %v837 = vmul.f32 %v835, %v599
        %v838 = vmul.f32 %v836, %v603
        %v839 = vadd.f32 %v812, %v837
        %v840 = vadd.f32 %v813, %v838
        %841 = vrot.lane.b32.xlu0 %v391, 30
        %v842 = vpop.permute.xlu0 %841
        %843 = vrot.lane.b32.xlu0 %v392, 30
        %v844 = vpop.permute.xlu0 %843
        %vm845 = vcmp.lt.s32.totalorder %v414, 30
        %v846 = vsel %vm845, %v842, %v844
        %v847 = vsel %vm845, %v844, %v842
        %848 = vrot.lane.b32.xlu0 %v407, 30
        %v849 = vpop.permute.xlu0 %848
        %850 = vrot.lane.b32.xlu0 %v408, 30
        %v851 = vpop.permute.xlu0 %850
        %v852 = vsel %vm845, %v849, %v851
        %v853 = vsel %vm845, %v851, %v849
        %s854 = sld [smem:[#allocation2 + $0xc]]
        %s855 = sld [smem:[#allocation2 + $0x3d]]
        %v856 = vstv %s854
        %v857 = vmul.f32 %v847, %v856
        %v858 = vmul.f32 %v846, %v856
        %v859 = vstv %s855
        %v860 = vmul.f32 %v853, %v859
        %v861 = vmul.f32 %v852, %v859
        %v862 = vadd.f32 %v857, %v860
        %v863 = vadd.f32 %v858, %v861
        %v864 = vmul.f32 %v862, %v639
        %v865 = vmul.f32 %v863, %v643
        %v866 = vadd.f32 %v839, %v864
        %v867 = vadd.f32 %v840, %v865
        %868 = vrot.lane.b32.xlu0 %v391, 29
        %v869 = vpop.permute.xlu0 %868
        %870 = vrot.lane.b32.xlu0 %v392, 29
        %v871 = vpop.permute.xlu0 %870
        %vm872 = vcmp.lt.s32.totalorder %v414, 29
        %v873 = vsel %vm872, %v869, %v871
        %v874 = vsel %vm872, %v871, %v869
        %875 = vrot.lane.b32.xlu0 %v407, 29
        %v876 = vpop.permute.xlu0 %875
        %877 = vrot.lane.b32.xlu0 %v408, 29
        %v878 = vpop.permute.xlu0 %877
        %v879 = vsel %vm872, %v876, %v878
        %v880 = vsel %vm872, %v878, %v876
        %s881 = sld [smem:[#allocation2 + $0xd]]
        %s882 = sld [smem:[#allocation2 + $0x3e]]
        %v883 = vstv %s881
        %v884 = vmul.f32 %v874, %v883
        %v885 = vmul.f32 %v873, %v883
        %v886 = vstv %s882
        %v887 = vmul.f32 %v880, %v886
        %v888 = vmul.f32 %v879, %v886
        %v889 = vadd.f32 %v884, %v887
        %v890 = vadd.f32 %v885, %v888
        %v891 = vmul.f32 %v889, %v679
        %v892 = vmul.f32 %v890, %v683
        %v893 = vadd.f32 %v866, %v891
        %v894 = vadd.f32 %v867, %v892
        %s895 = scalar_lea.vmem [#allocation8], 1
        %v896 = vld [vmem:[%s895] ss:$8 sm:$0x3]
        %v898 = vlaneseq
        %v899 = vshrl.u32 %v898, 7
        %v900 = vsub.s32 0, %v899
        %v901 = vrot.slane %v896, %v900
        %v902 = vlaneseq
        %v903 = vshrl.u32 %v902, 7
        %v904 = vsub.s32 1, %v903
        %v905 = vrot.slane %v896, %v904
        %v908 = vmul.f32 %v893, %v901
        %v909 = vmul.f32 %v894, %v905
        %v910 = vadd.f32 %v704, %v908
        %v911 = vadd.f32 %v705, %v909
        %912 = vrot.lane.b32.xlu0 %v391, 19
        %v913 = vpop.permute.xlu0 %912
        %914 = vrot.lane.b32.xlu0 %v392, 19
        %v915 = vpop.permute.xlu0 %914
        %vm916 = vcmp.lt.s32.totalorder %v414, 19
        %v917 = vsel %vm916, %v913, %v915
        %v918 = vsel %vm916, %v915, %v913
        %919 = vrot.lane.b32.xlu0 %v407, 19
        %v920 = vpop.permute.xlu0 %919
        %921 = vrot.lane.b32.xlu0 %v408, 19
        %v922 = vpop.permute.xlu0 %921
        %v923 = vsel %vm916, %v920, %v922
        %v924 = vsel %vm916, %v922, %v920
        %s925 = sld [smem:[#allocation2 + $0xe]]
        %s926 = sld [smem:[#allocation2 + $0x3f]]
        %v927 = vstv %s925
        %v928 = vmul.f32 %v918, %v927
        %v929 = vmul.f32 %v917, %v927
        %v930 = vstv %s926
        %v931 = vmul.f32 %v924, %v930
        %v932 = vmul.f32 %v923, %v930
        %v933 = vadd.f32 %v928, %v931
        %v934 = vadd.f32 %v929, %v932
        %v935 = vmul.f32 %v933, %v439
        %v936 = vmul.f32 %v934, %v443
        %v937 = vadd.f32 %v935, 0.0
        %v938 = vadd.f32 %v936, 0.0
        %939 = vrot.lane.b32.xlu0 %v391, 18
        %v940 = vpop.permute.xlu0 %939
        %941 = vrot.lane.b32.xlu0 %v392, 18
        %v942 = vpop.permute.xlu0 %941
        %vm943 = vcmp.lt.s32.totalorder %v414, 18
        %v944 = vsel %vm943, %v940, %v942
        %v945 = vsel %vm943, %v942, %v940
        %946 = vrot.lane.b32.xlu0 %v407, 18
        %v947 = vpop.permute.xlu0 %946
        %948 = vrot.lane.b32.xlu0 %v408, 18
        %v949 = vpop.permute.xlu0 %948
        %v950 = vsel %vm943, %v947, %v949
        %v951 = vsel %vm943, %v949, %v947
        %s952 = sld [smem:[#allocation2 + $0xf]]
        %s953 = sld [smem:[#allocation2 + $0x40]]
        %v954 = vstv %s952
        %v955 = vmul.f32 %v945, %v954
        %v956 = vmul.f32 %v944, %v954
        %v957 = vstv %s953
        %v958 = vmul.f32 %v951, %v957
        %v959 = vmul.f32 %v950, %v957
        %v960 = vadd.f32 %v955, %v958
        %v961 = vadd.f32 %v956, %v959
        %v962 = vmul.f32 %v960, %v479
        %v963 = vmul.f32 %v961, %v483
        %v964 = vadd.f32 %v937, %v962
        %v965 = vadd.f32 %v938, %v963
        %966 = vrot.lane.b32.xlu0 %v391, 17
        %v967 = vpop.permute.xlu0 %966
        %968 = vrot.lane.b32.xlu0 %v392, 17
        %v969 = vpop.permute.xlu0 %968
        %vm970 = vcmp.lt.s32.totalorder %v414, 17
        %v971 = vsel %vm970, %v967, %v969
        %v972 = vsel %vm970, %v969, %v967
        %973 = vrot.lane.b32.xlu0 %v407, 17
        %v974 = vpop.permute.xlu0 %973
        %975 = vrot.lane.b32.xlu0 %v408, 17
        %v976 = vpop.permute.xlu0 %975
        %v977 = vsel %vm970, %v974, %v976
        %v978 = vsel %vm970, %v976, %v974
        %s979 = sld [smem:[#allocation2 + $0x10]]
        %s980 = sld [smem:[#allocation2 + $0x41]]
        %v981 = vstv %s979
        %v982 = vmul.f32 %v972, %v981
        %v983 = vmul.f32 %v971, %v981
        %v984 = vstv %s980
        %v985 = vmul.f32 %v978, %v984
        %v986 = vmul.f32 %v977, %v984
        %v987 = vadd.f32 %v982, %v985
        %v988 = vadd.f32 %v983, %v986
        %v989 = vmul.f32 %v987, %v519
        %v990 = vmul.f32 %v988, %v523
        %v991 = vadd.f32 %v964, %v989
        %v992 = vadd.f32 %v965, %v990
        %993 = vrot.lane.b32.xlu0 %v391, 16
        %v994 = vpop.permute.xlu0 %993
        %995 = vrot.lane.b32.xlu0 %v392, 16
        %v996 = vpop.permute.xlu0 %995
        %vm997 = vcmp.lt.s32.totalorder %v414, 16
        %v998 = vsel %vm997, %v994, %v996
        %v999 = vsel %vm997, %v996, %v994
        %1000 = vrot.lane.b32.xlu0 %v407, 16
        %v1001 = vpop.permute.xlu0 %1000
        %1002 = vrot.lane.b32.xlu0 %v408, 16
        %v1003 = vpop.permute.xlu0 %1002
        %v1004 = vsel %vm997, %v1001, %v1003
        %v1005 = vsel %vm997, %v1003, %v1001
        %s1006 = sld [smem:[#allocation2 + $0x11]]
        %s1007 = sld [smem:[#allocation2 + $0x42]]
        %v1008 = vstv %s1006
        %v1009 = vmul.f32 %v999, %v1008
        %v1010 = vmul.f32 %v998, %v1008
        %v1011 = vstv %s1007
        %v1012 = vmul.f32 %v1005, %v1011
        %v1013 = vmul.f32 %v1004, %v1011
        %v1014 = vadd.f32 %v1009, %v1012
        %v1015 = vadd.f32 %v1010, %v1013
        %v1016 = vmul.f32 %v1014, %v559
        %v1017 = vmul.f32 %v1015, %v563
        %v1018 = vadd.f32 %v991, %v1016
        %v1019 = vadd.f32 %v992, %v1017
        %1020 = vrot.lane.b32.xlu0 %v391, 15
        %v1021 = vpop.permute.xlu0 %1020
        %1022 = vrot.lane.b32.xlu0 %v392, 15
        %v1023 = vpop.permute.xlu0 %1022
        %vm1024 = vcmp.lt.s32.totalorder %v414, 15
        %v1025 = vsel %vm1024, %v1021, %v1023
        %v1026 = vsel %vm1024, %v1023, %v1021
        %1027 = vrot.lane.b32.xlu0 %v407, 15
        %v1028 = vpop.permute.xlu0 %1027
        %1029 = vrot.lane.b32.xlu0 %v408, 15
        %v1030 = vpop.permute.xlu0 %1029
        %v1031 = vsel %vm1024, %v1028, %v1030
        %v1032 = vsel %vm1024, %v1030, %v1028
        %s1033 = sld [smem:[#allocation2 + $0x12]]
        %s1034 = sld [smem:[#allocation2 + $0x43]]
        %v1035 = vstv %s1033
        %v1036 = vmul.f32 %v1026, %v1035
        %v1037 = vmul.f32 %v1025, %v1035
        %v1038 = vstv %s1034
        %v1039 = vmul.f32 %v1032, %v1038
        %v1040 = vmul.f32 %v1031, %v1038
        %v1041 = vadd.f32 %v1036, %v1039
        %v1042 = vadd.f32 %v1037, %v1040
        %v1043 = vmul.f32 %v1041, %v599
        %v1044 = vmul.f32 %v1042, %v603
        %v1045 = vadd.f32 %v1018, %v1043
        %v1046 = vadd.f32 %v1019, %v1044
        %1047 = vrot.lane.b32.xlu0 %v391, 14
        %v1048 = vpop.permute.xlu0 %1047
        %1049 = vrot.lane.b32.xlu0 %v392, 14
        %v1050 = vpop.permute.xlu0 %1049
        %vm1051 = vcmp.lt.s32.totalorder %v414, 14
        %v1052 = vsel %vm1051, %v1048, %v1050
        %v1053 = vsel %vm1051, %v1050, %v1048
        %1054 = vrot.lane.b32.xlu0 %v407, 14
        %v1055 = vpop.permute.xlu0 %1054
        %1056 = vrot.lane.b32.xlu0 %v408, 14
        %v1057 = vpop.permute.xlu0 %1056
        %v1058 = vsel %vm1051, %v1055, %v1057
        %v1059 = vsel %vm1051, %v1057, %v1055
        %s1060 = sld [smem:[#allocation2 + $0x13]]
        %s1061 = sld [smem:[#allocation2 + $0x44]]
        %v1062 = vstv %s1060
        %v1063 = vmul.f32 %v1053, %v1062
        %v1064 = vmul.f32 %v1052, %v1062
        %v1065 = vstv %s1061
        %v1066 = vmul.f32 %v1059, %v1065
        %v1067 = vmul.f32 %v1058, %v1065
        %v1068 = vadd.f32 %v1063, %v1066
        %v1069 = vadd.f32 %v1064, %v1067
        %v1070 = vmul.f32 %v1068, %v639
        %v1071 = vmul.f32 %v1069, %v643
        %v1072 = vadd.f32 %v1045, %v1070
        %v1073 = vadd.f32 %v1046, %v1071
        %1074 = vrot.lane.b32.xlu0 %v391, 13
        %v1075 = vpop.permute.xlu0 %1074
        %1076 = vrot.lane.b32.xlu0 %v392, 13
        %v1077 = vpop.permute.xlu0 %1076
        %vm1078 = vcmp.lt.s32.totalorder %v414, 13
        %v1079 = vsel %vm1078, %v1075, %v1077
        %v1080 = vsel %vm1078, %v1077, %v1075
        %1081 = vrot.lane.b32.xlu0 %v407, 13
        %v1082 = vpop.permute.xlu0 %1081
        %1083 = vrot.lane.b32.xlu0 %v408, 13
        %v1084 = vpop.permute.xlu0 %1083
        %v1085 = vsel %vm1078, %v1082, %v1084
        %v1086 = vsel %vm1078, %v1084, %v1082
        %s1087 = sld [smem:[#allocation2 + $0x14]]
        %s1088 = sld [smem:[#allocation2 + $0x45]]
        %v1089 = vstv %s1087
        %v1090 = vmul.f32 %v1080, %v1089
        %v1091 = vmul.f32 %v1079, %v1089
        %v1092 = vstv %s1088
        %v1093 = vmul.f32 %v1086, %v1092
        %v1094 = vmul.f32 %v1085, %v1092
        %v1095 = vadd.f32 %v1090, %v1093
        %v1096 = vadd.f32 %v1091, %v1094
        %v1097 = vmul.f32 %v1095, %v679
        %v1098 = vmul.f32 %v1096, %v683
        %v1099 = vadd.f32 %v1072, %v1097
        %v1100 = vadd.f32 %v1073, %v1098
        %s1101 = scalar_lea.vmem [#allocation8], 2
        %v1102 = vld [vmem:[%s1101] ss:$8 sm:$0x3]
        %v1104 = vlaneseq
        %v1105 = vshrl.u32 %v1104, 7
        %v1106 = vsub.s32 0, %v1105
        %v1107 = vrot.slane %v1102, %v1106
        %v1108 = vlaneseq
        %v1109 = vshrl.u32 %v1108, 7
        %v1110 = vsub.s32 1, %v1109
        %v1111 = vrot.slane %v1102, %v1110
        %v1114 = vmul.f32 %v1099, %v1107
        %v1115 = vmul.f32 %v1100, %v1111
        %v1116 = vadd.f32 %v910, %v1114
        %v1117 = vadd.f32 %v911, %v1115
        %1118 = vrot.lane.b32.xlu0 %v391, 3
        %v1119 = vpop.permute.xlu0 %1118
        %1120 = vrot.lane.b32.xlu0 %v392, 3
        %v1121 = vpop.permute.xlu0 %1120
        %vm1122 = vcmp.lt.s32.totalorder %v414, 3
        %v1123 = vsel %vm1122, %v1119, %v1121
        %v1124 = vsel %vm1122, %v1121, %v1119
        %1125 = vrot.lane.b32.xlu0 %v407, 3
        %v1126 = vpop.permute.xlu0 %1125
        %1127 = vrot.lane.b32.xlu0 %v408, 3
        %v1128 = vpop.permute.xlu0 %1127
        %v1129 = vsel %vm1122, %v1126, %v1128
        %v1130 = vsel %vm1122, %v1128, %v1126
        %s1131 = sld [smem:[#allocation2 + $0x15]]
        %s1132 = sld [smem:[#allocation2 + $0x46]]
        %v1133 = vstv %s1131
        %v1134 = vmul.f32 %v1124, %v1133
        %v1135 = vmul.f32 %v1123, %v1133
        %v1136 = vstv %s1132
        %v1137 = vmul.f32 %v1130, %v1136
        %v1138 = vmul.f32 %v1129, %v1136
        %v1139 = vadd.f32 %v1134, %v1137
        %v1140 = vadd.f32 %v1135, %v1138
        %v1141 = vmul.f32 %v1139, %v439
        %v1142 = vmul.f32 %v1140, %v443
        %v1143 = vadd.f32 %v1141, 0.0
        %v1144 = vadd.f32 %v1142, 0.0
        %1145 = vrot.lane.b32.xlu0 %v391, 2
        %v1146 = vpop.permute.xlu0 %1145
        %1147 = vrot.lane.b32.xlu0 %v392, 2
        %v1148 = vpop.permute.xlu0 %1147
        %vm1149 = vcmp.lt.s32.totalorder %v414, 2
        %v1150 = vsel %vm1149, %v1146, %v1148
        %v1151 = vsel %vm1149, %v1148, %v1146
        %1152 = vrot.lane.b32.xlu0 %v407, 2
        %v1153 = vpop.permute.xlu0 %1152
        %1154 = vrot.lane.b32.xlu0 %v408, 2
        %v1155 = vpop.permute.xlu0 %1154
        %v1156 = vsel %vm1149, %v1153, %v1155
        %v1157 = vsel %vm1149, %v1155, %v1153
        %s1158 = sld [smem:[#allocation2 + $0x16]]
        %s1159 = sld [smem:[#allocation2 + $0x47]]
        %v1160 = vstv %s1158
        %v1161 = vmul.f32 %v1151, %v1160
        %v1162 = vmul.f32 %v1150, %v1160
        %v1163 = vstv %s1159
        %v1164 = vmul.f32 %v1157, %v1163
        %v1165 = vmul.f32 %v1156, %v1163
        %v1166 = vadd.f32 %v1161, %v1164
        %v1167 = vadd.f32 %v1162, %v1165
        %v1168 = vmul.f32 %v1166, %v479
        %v1169 = vmul.f32 %v1167, %v483
        %v1170 = vadd.f32 %v1143, %v1168
        %v1171 = vadd.f32 %v1144, %v1169
        %1172 = vrot.lane.b32.xlu0 %v391, 1
        %v1173 = vpop.permute.xlu0 %1172
        %1174 = vrot.lane.b32.xlu0 %v392, 1
        %v1175 = vpop.permute.xlu0 %1174
        %vm1176 = vcmp.lt.s32.totalorder %v414, 1
        %v1177 = vsel %vm1176, %v1173, %v1175
        %v1178 = vsel %vm1176, %v1175, %v1173
        %1179 = vrot.lane.b32.xlu0 %v407, 1
        %v1180 = vpop.permute.xlu0 %1179
        %1181 = vrot.lane.b32.xlu0 %v408, 1
        %v1182 = vpop.permute.xlu0 %1181
        %v1183 = vsel %vm1176, %v1180, %v1182
        %v1184 = vsel %vm1176, %v1182, %v1180
        %s1185 = sld [smem:[#allocation2 + $0x17]]
        %s1186 = sld [smem:[#allocation2 + $0x48]]
        %v1187 = vstv %s1185
        %v1188 = vmul.f32 %v1178, %v1187
        %v1189 = vmul.f32 %v1177, %v1187
        %v1190 = vstv %s1186
        %v1191 = vmul.f32 %v1184, %v1190
        %v1192 = vmul.f32 %v1183, %v1190
        %v1193 = vadd.f32 %v1188, %v1191
        %v1194 = vadd.f32 %v1189, %v1192
        %v1195 = vmul.f32 %v1193, %v519
        %v1196 = vmul.f32 %v1194, %v523
        %v1197 = vadd.f32 %v1170, %v1195
        %v1198 = vadd.f32 %v1171, %v1196
        %s1199 = sld [smem:[#allocation2 + $0x18]]
        %s1200 = sld [smem:[#allocation2 + $0x49]]
        %v1201 = vstv %s1199
        %v1202 = vmul.f32 %v391, %v1201
        %v1203 = vmul.f32 %v392, %v1201
        %v1204 = vstv %s1200
        %v1205 = vmul.f32 %v407, %v1204
        %v1206 = vmul.f32 %v408, %v1204
        %v1207 = vadd.f32 %v1202, %v1205
        %v1208 = vadd.f32 %v1203, %v1206
        %v1209 = vmul.f32 %v1207, %v559
        %v1210 = vmul.f32 %v1208, %v563
        %v1211 = vadd.f32 %v1197, %v1209
        %v1212 = vadd.f32 %v1198, %v1210
        %1213 = vrot.lane.b32.xlu0 %v391, 127
        %v1214 = vpop.permute.xlu0 %1213
        %1215 = vrot.lane.b32.xlu0 %v392, 127
        %v1216 = vpop.permute.xlu0 %1215
        %vm1217 = vcmp.lt.s32.totalorder %v414, 127
        %v1218 = vsel %vm1217, %v1214, %v1216
        %v1219 = vsel %vm1217, %v1216, %v1214
        %1220 = vrot.lane.b32.xlu0 %v407, 127
        %v1221 = vpop.permute.xlu0 %1220
        %1222 = vrot.lane.b32.xlu0 %v408, 127
        %v1223 = vpop.permute.xlu0 %1222
        %v1224 = vsel %vm1217, %v1221, %v1223
        %v1225 = vsel %vm1217, %v1223, %v1221
        %s1226 = sld [smem:[#allocation2 + $0x19]]
        %s1227 = sld [smem:[#allocation2 + $0x4a]]
        %v1228 = vstv %s1226
        %v1229 = vmul.f32 %v1218, %v1228
        %v1230 = vmul.f32 %v1219, %v1228
        %v1231 = vstv %s1227
        %v1232 = vmul.f32 %v1224, %v1231
        %v1233 = vmul.f32 %v1225, %v1231
        %v1234 = vadd.f32 %v1229, %v1232
        %v1235 = vadd.f32 %v1230, %v1233
        %v1236 = vmul.f32 %v1234, %v599
        %v1237 = vmul.f32 %v1235, %v603
        %v1238 = vadd.f32 %v1211, %v1236
        %v1239 = vadd.f32 %v1212, %v1237
        %1240 = vrot.lane.b32.xlu0 %v391, 126
        %v1241 = vpop.permute.xlu0 %1240
        %1242 = vrot.lane.b32.xlu0 %v392, 126
        %v1243 = vpop.permute.xlu0 %1242
        %vm1244 = vcmp.lt.s32.totalorder %v414, 126
        %v1245 = vsel %vm1244, %v1241, %v1243
        %v1246 = vsel %vm1244, %v1243, %v1241
        %1247 = vrot.lane.b32.xlu0 %v407, 126
        %v1248 = vpop.permute.xlu0 %1247
        %1249 = vrot.lane.b32.xlu0 %v408, 126
        %v1250 = vpop.permute.xlu0 %1249
        %v1251 = vsel %vm1244, %v1248, %v1250
        %v1252 = vsel %vm1244, %v1250, %v1248
        %s1253 = sld [smem:[#allocation2 + $0x1a]]
        %s1254 = sld [smem:[#allocation2 + $0x4b]]
        %v1255 = vstv %s1253
        %v1256 = vmul.f32 %v1245, %v1255
        %v1257 = vmul.f32 %v1246, %v1255
        %v1258 = vstv %s1254
        %v1259 = vmul.f32 %v1251, %v1258
        %v1260 = vmul.f32 %v1252, %v1258
        %v1261 = vadd.f32 %v1256, %v1259
        %v1262 = vadd.f32 %v1257, %v1260
        %v1263 = vmul.f32 %v1261, %v639
        %v1264 = vmul.f32 %v1262, %v643
        %v1265 = vadd.f32 %v1238, %v1263
        %v1266 = vadd.f32 %v1239, %v1264
        %1267 = vrot.lane.b32.xlu0 %v391, 125
        %v1268 = vpop.permute.xlu0 %1267
        %1269 = vrot.lane.b32.xlu0 %v392, 125
        %v1270 = vpop.permute.xlu0 %1269
        %vm1271 = vcmp.lt.s32.totalorder %v414, 125
        %v1272 = vsel %vm1271, %v1268, %v1270
        %v1273 = vsel %vm1271, %v1270, %v1268
        %1274 = vrot.lane.b32.xlu0 %v407, 125
        %v1275 = vpop.permute.xlu0 %1274
        %1276 = vrot.lane.b32.xlu0 %v408, 125
        %v1277 = vpop.permute.xlu0 %1276
        %v1278 = vsel %vm1271, %v1275, %v1277
        %v1279 = vsel %vm1271, %v1277, %v1275
        %s1280 = sld [smem:[#allocation2 + $0x1b]]
        %s1281 = sld [smem:[#allocation2 + $0x4c]]
        %v1282 = vstv %s1280
        %v1283 = vmul.f32 %v1272, %v1282
        %v1284 = vmul.f32 %v1273, %v1282
        %v1285 = vstv %s1281
        %v1286 = vmul.f32 %v1278, %v1285
        %v1287 = vmul.f32 %v1279, %v1285
        %v1288 = vadd.f32 %v1283, %v1286
        %v1289 = vadd.f32 %v1284, %v1287
        %v1290 = vmul.f32 %v1288, %v679
        %v1291 = vmul.f32 %v1289, %v683
        %v1292 = vadd.f32 %v1265, %v1290
        %v1293 = vadd.f32 %v1266, %v1291
        %s1294 = scalar_lea.vmem [#allocation8], 3
        %v1295 = vld [vmem:[%s1294] ss:$8 sm:$0x3]
        %v1297 = vlaneseq
        %v1298 = vshrl.u32 %v1297, 7
        %v1299 = vsub.s32 0, %v1298
        %v1300 = vrot.slane %v1295, %v1299
        %v1301 = vlaneseq
        %v1302 = vshrl.u32 %v1301, 7
        %v1303 = vsub.s32 1, %v1302
        %v1304 = vrot.slane %v1295, %v1303
        %v1307 = vmul.f32 %v1292, %v1300
        %v1308 = vmul.f32 %v1293, %v1304
        %v1309 = vadd.f32 %v1116, %v1307
        %v1310 = vadd.f32 %v1117, %v1308
        %1311 = vrot.lane.b32.xlu0 %v391, 115
        %v1312 = vpop.permute.xlu0 %1311
        %1313 = vrot.lane.b32.xlu0 %v392, 115
        %v1314 = vpop.permute.xlu0 %1313
        %vm1315 = vcmp.lt.s32.totalorder %v414, 115
        %v1316 = vsel %vm1315, %v1312, %v1314
        %v1317 = vsel %vm1315, %v1314, %v1312
        %1318 = vrot.lane.b32.xlu0 %v407, 115
        %v1319 = vpop.permute.xlu0 %1318
        %1320 = vrot.lane.b32.xlu0 %v408, 115
        %v1321 = vpop.permute.xlu0 %1320
        %v1322 = vsel %vm1315, %v1319, %v1321
        %v1323 = vsel %vm1315, %v1321, %v1319
        %s1324 = sld [smem:[#allocation2 + $0x1c]]
        %s1325 = sld [smem:[#allocation2 + $0x4d]]
        %v1326 = vstv %s1324
        %v1327 = vmul.f32 %v1316, %v1326
        %v1328 = vmul.f32 %v1317, %v1326
        %v1329 = vstv %s1325
        %v1330 = vmul.f32 %v1322, %v1329
        %v1331 = vmul.f32 %v1323, %v1329
        %v1332 = vadd.f32 %v1327, %v1330
        %v1333 = vadd.f32 %v1328, %v1331
        %v1334 = vmul.f32 %v1332, %v439
        %v1335 = vmul.f32 %v1333, %v443
        %v1336 = vadd.f32 %v1334, 0.0
        %v1337 = vadd.f32 %v1335, 0.0
        %1338 = vrot.lane.b32.xlu0 %v391, 114
        %v1339 = vpop.permute.xlu0 %1338
        %1340 = vrot.lane.b32.xlu0 %v392, 114
        %v1341 = vpop.permute.xlu0 %1340
        %vm1342 = vcmp.lt.s32.totalorder %v414, 114
        %v1343 = vsel %vm1342, %v1339, %v1341
        %v1344 = vsel %vm1342, %v1341, %v1339
        %1345 = vrot.lane.b32.xlu0 %v407, 114
        %v1346 = vpop.permute.xlu0 %1345
        %1347 = vrot.lane.b32.xlu0 %v408, 114
        %v1348 = vpop.permute.xlu0 %1347
        %v1349 = vsel %vm1342, %v1346, %v1348
        %v1350 = vsel %vm1342, %v1348, %v1346
        %s1351 = sld [smem:[#allocation2 + $0x1d]]
        %s1352 = sld [smem:[#allocation2 + $0x4e]]
        %v1353 = vstv %s1351
        %v1354 = vmul.f32 %v1343, %v1353
        %v1355 = vmul.f32 %v1344, %v1353
        %v1356 = vstv %s1352
        %v1357 = vmul.f32 %v1349, %v1356
        %v1358 = vmul.f32 %v1350, %v1356
        %v1359 = vadd.f32 %v1354, %v1357
        %v1360 = vadd.f32 %v1355, %v1358
        %v1361 = vmul.f32 %v1359, %v479
        %v1362 = vmul.f32 %v1360, %v483
        %v1363 = vadd.f32 %v1336, %v1361
        %v1364 = vadd.f32 %v1337, %v1362
        %1365 = vrot.lane.b32.xlu0 %v391, 113
        %v1366 = vpop.permute.xlu0 %1365
        %1367 = vrot.lane.b32.xlu0 %v392, 113
        %v1368 = vpop.permute.xlu0 %1367
        %vm1369 = vcmp.lt.s32.totalorder %v414, 113
        %v1370 = vsel %vm1369, %v1366, %v1368
        %v1371 = vsel %vm1369, %v1368, %v1366
        %1372 = vrot.lane.b32.xlu0 %v407, 113
        %v1373 = vpop.permute.xlu0 %1372
        %1374 = vrot.lane.b32.xlu0 %v408, 113
        %v1375 = vpop.permute.xlu0 %1374
        %v1376 = vsel %vm1369, %v1373, %v1375
        %v1377 = vsel %vm1369, %v1375, %v1373
        %s1378 = sld [smem:[#allocation2 + $0x1e]]
        %s1379 = sld [smem:[#allocation2 + $0x4f]]
        %v1380 = vstv %s1378
        %v1381 = vmul.f32 %v1370, %v1380
        %v1382 = vmul.f32 %v1371, %v1380
        %v1383 = vstv %s1379
        %v1384 = vmul.f32 %v1376, %v1383
        %v1385 = vmul.f32 %v1377, %v1383
        %v1386 = vadd.f32 %v1381, %v1384
        %v1387 = vadd.f32 %v1382, %v1385
        %v1388 = vmul.f32 %v1386, %v519
        %v1389 = vmul.f32 %v1387, %v523
        %v1390 = vadd.f32 %v1363, %v1388
        %v1391 = vadd.f32 %v1364, %v1389
        %1392 = vrot.lane.b32.xlu0 %v391, 112
        %v1393 = vpop.permute.xlu0 %1392
        %1394 = vrot.lane.b32.xlu0 %v392, 112
        %v1395 = vpop.permute.xlu0 %1394
        %vm1396 = vcmp.lt.s32.totalorder %v414, 112
        %v1397 = vsel %vm1396, %v1393, %v1395
        %v1398 = vsel %vm1396, %v1395, %v1393
        %1399 = vrot.lane.b32.xlu0 %v407, 112
        %v1400 = vpop.permute.xlu0 %1399
        %1401 = vrot.lane.b32.xlu0 %v408, 112
        %v1402 = vpop.permute.xlu0 %1401
        %v1403 = vsel %vm1396, %v1400, %v1402
        %v1404 = vsel %vm1396, %v1402, %v1400
        %s1405 = sld [smem:[#allocation2 + $0x1f]]
        %s1406 = sld [smem:[#allocation2 + $0x50]]
        %v1407 = vstv %s1405
        %v1408 = vmul.f32 %v1397, %v1407
        %v1409 = vmul.f32 %v1398, %v1407
        %v1410 = vstv %s1406
        %v1411 = vmul.f32 %v1403, %v1410
        %v1412 = vmul.f32 %v1404, %v1410
        %v1413 = vadd.f32 %v1408, %v1411
        %v1414 = vadd.f32 %v1409, %v1412
        %v1415 = vmul.f32 %v1413, %v559
        %v1416 = vmul.f32 %v1414, %v563
        %v1417 = vadd.f32 %v1390, %v1415
        %v1418 = vadd.f32 %v1391, %v1416
        %1419 = vrot.lane.b32.xlu0 %v391, 111
        %v1420 = vpop.permute.xlu0 %1419
        %1421 = vrot.lane.b32.xlu0 %v392, 111
        %v1422 = vpop.permute.xlu0 %1421
        %vm1423 = vcmp.lt.s32.totalorder %v414, 111
        %v1424 = vsel %vm1423, %v1420, %v1422
        %v1425 = vsel %vm1423, %v1422, %v1420
        %1426 = vrot.lane.b32.xlu0 %v407, 111
        %v1427 = vpop.permute.xlu0 %1426
        %1428 = vrot.lane.b32.xlu0 %v408, 111
        %v1429 = vpop.permute.xlu0 %1428
        %v1430 = vsel %vm1423, %v1427, %v1429
        %v1431 = vsel %vm1423, %v1429, %v1427
        %s1432 = sld [smem:[#allocation2 + $0x20]]
        %s1433 = sld [smem:[#allocation2 + $0x51]]
        %v1434 = vstv %s1432
        %v1435 = vmul.f32 %v1424, %v1434
        %v1436 = vmul.f32 %v1425, %v1434
        %v1437 = vstv %s1433
        %v1438 = vmul.f32 %v1430, %v1437
        %v1439 = vmul.f32 %v1431, %v1437
        %v1440 = vadd.f32 %v1435, %v1438
        %v1441 = vadd.f32 %v1436, %v1439
        %v1442 = vmul.f32 %v1440, %v599
        %v1443 = vmul.f32 %v1441, %v603
        %v1444 = vadd.f32 %v1417, %v1442
        %v1445 = vadd.f32 %v1418, %v1443
        %1446 = vrot.lane.b32.xlu0 %v391, 110
        %v1447 = vpop.permute.xlu0 %1446
        %1448 = vrot.lane.b32.xlu0 %v392, 110
        %v1449 = vpop.permute.xlu0 %1448
        %vm1450 = vcmp.lt.s32.totalorder %v414, 110
        %v1451 = vsel %vm1450, %v1447, %v1449
        %v1452 = vsel %vm1450, %v1449, %v1447
        %1453 = vrot.lane.b32.xlu0 %v407, 110
        %v1454 = vpop.permute.xlu0 %1453
        %1455 = vrot.lane.b32.xlu0 %v408, 110
        %v1456 = vpop.permute.xlu0 %1455
        %v1457 = vsel %vm1450, %v1454, %v1456
        %v1458 = vsel %vm1450, %v1456, %v1454
        %s1459 = sld [smem:[#allocation2 + $0x21]]
        %s1460 = sld [smem:[#allocation2 + $0x52]]
        %v1461 = vstv %s1459
        %v1462 = vmul.f32 %v1451, %v1461
        %v1463 = vmul.f32 %v1452, %v1461
        %v1464 = vstv %s1460
        %v1465 = vmul.f32 %v1457, %v1464
        %v1466 = vmul.f32 %v1458, %v1464
        %v1467 = vadd.f32 %v1462, %v1465
        %v1468 = vadd.f32 %v1463, %v1466
        %v1469 = vmul.f32 %v1467, %v639
        %v1470 = vmul.f32 %v1468, %v643
        %v1471 = vadd.f32 %v1444, %v1469
        %v1472 = vadd.f32 %v1445, %v1470
        %1473 = vrot.lane.b32.xlu0 %v391, 109
        %v1474 = vpop.permute.xlu0 %1473
        %1475 = vrot.lane.b32.xlu0 %v392, 109
        %v1476 = vpop.permute.xlu0 %1475
        %vm1477 = vcmp.lt.s32.totalorder %v414, 109
        %v1478 = vsel %vm1477, %v1474, %v1476
        %v1479 = vsel %vm1477, %v1476, %v1474
        %1480 = vrot.lane.b32.xlu0 %v407, 109
        %v1481 = vpop.permute.xlu0 %1480
        %1482 = vrot.lane.b32.xlu0 %v408, 109
        %v1483 = vpop.permute.xlu0 %1482
        %v1484 = vsel %vm1477, %v1481, %v1483
        %v1485 = vsel %vm1477, %v1483, %v1481
        %s1486 = sld [smem:[#allocation2 + $0x22]]
        %s1487 = sld [smem:[#allocation2 + $0x53]]
        %v1488 = vstv %s1486
        %v1489 = vmul.f32 %v1478, %v1488
        %v1490 = vmul.f32 %v1479, %v1488
        %v1491 = vstv %s1487
        %v1492 = vmul.f32 %v1484, %v1491
        %v1493 = vmul.f32 %v1485, %v1491
        %v1494 = vadd.f32 %v1489, %v1492
        %v1495 = vadd.f32 %v1490, %v1493
        %v1496 = vmul.f32 %v1494, %v679
        %v1497 = vmul.f32 %v1495, %v683
        %v1498 = vadd.f32 %v1471, %v1496
        %v1499 = vadd.f32 %v1472, %v1497
        %s1500 = scalar_lea.vmem [#allocation8], 4
        %v1501 = vld [vmem:[%s1500] ss:$8 sm:$0x3]
        %v1503 = vlaneseq
        %v1504 = vshrl.u32 %v1503, 7
        %v1505 = vsub.s32 0, %v1504
        %v1506 = vrot.slane %v1501, %v1505
        %v1507 = vlaneseq
        %v1508 = vshrl.u32 %v1507, 7
        %v1509 = vsub.s32 1, %v1508
        %v1510 = vrot.slane %v1501, %v1509
        %v1513 = vmul.f32 %v1498, %v1506
        %v1514 = vmul.f32 %v1499, %v1510
        %v1515 = vadd.f32 %v1309, %v1513
        %v1516 = vadd.f32 %v1310, %v1514
        %1517 = vrot.lane.b32.xlu0 %v391, 99
        %v1518 = vpop.permute.xlu0 %1517
        %1519 = vrot.lane.b32.xlu0 %v392, 99
        %v1520 = vpop.permute.xlu0 %1519
        %vm1521 = vcmp.lt.s32.totalorder %v414, 99
        %v1522 = vsel %vm1521, %v1518, %v1520
        %v1523 = vsel %vm1521, %v1520, %v1518
        %1524 = vrot.lane.b32.xlu0 %v407, 99
        %v1525 = vpop.permute.xlu0 %1524
        %1526 = vrot.lane.b32.xlu0 %v408, 99
        %v1527 = vpop.permute.xlu0 %1526
        %v1528 = vsel %vm1521, %v1525, %v1527
        %v1529 = vsel %vm1521, %v1527, %v1525
        %s1530 = sld [smem:[#allocation2 + $0x23]]
        %s1531 = sld [smem:[#allocation2 + $0x54]]
        %v1532 = vstv %s1530
        %v1533 = vmul.f32 %v1522, %v1532
        %v1534 = vmul.f32 %v1523, %v1532
        %v1535 = vstv %s1531
        %v1536 = vmul.f32 %v1528, %v1535
        %v1537 = vmul.f32 %v1529, %v1535
        %v1538 = vadd.f32 %v1533, %v1536
        %v1539 = vadd.f32 %v1534, %v1537
        %v1540 = vmul.f32 %v1538, %v439
        %v1541 = vmul.f32 %v1539, %v443
        %v1542 = vadd.f32 %v1540, 0.0
        %v1543 = vadd.f32 %v1541, 0.0
        %1544 = vrot.lane.b32.xlu0 %v391, 98
        %v1545 = vpop.permute.xlu0 %1544
        %1546 = vrot.lane.b32.xlu0 %v392, 98
        %v1547 = vpop.permute.xlu0 %1546
        %vm1548 = vcmp.lt.s32.totalorder %v414, 98
        %v1549 = vsel %vm1548, %v1545, %v1547
        %v1550 = vsel %vm1548, %v1547, %v1545
        %1551 = vrot.lane.b32.xlu0 %v407, 98
        %v1552 = vpop.permute.xlu0 %1551
        %1553 = vrot.lane.b32.xlu0 %v408, 98
        %v1554 = vpop.permute.xlu0 %1553
        %v1555 = vsel %vm1548, %v1552, %v1554
        %v1556 = vsel %vm1548, %v1554, %v1552
        %s1557 = sld [smem:[#allocation2 + $0x24]]
        %s1558 = sld [smem:[#allocation2 + $0x55]]
        %v1559 = vstv %s1557
        %v1560 = vmul.f32 %v1549, %v1559
        %v1561 = vmul.f32 %v1550, %v1559
        %v1562 = vstv %s1558
        %v1563 = vmul.f32 %v1555, %v1562
        %v1564 = vmul.f32 %v1556, %v1562
        %v1565 = vadd.f32 %v1560, %v1563
        %v1566 = vadd.f32 %v1561, %v1564
        %v1567 = vmul.f32 %v1565, %v479
        %v1568 = vmul.f32 %v1566, %v483
        %v1569 = vadd.f32 %v1542, %v1567
        %v1570 = vadd.f32 %v1543, %v1568
        %1571 = vrot.lane.b32.xlu0 %v391, 97
        %v1572 = vpop.permute.xlu0 %1571
        %1573 = vrot.lane.b32.xlu0 %v392, 97
        %v1574 = vpop.permute.xlu0 %1573
        %vm1575 = vcmp.lt.s32.totalorder %v414, 97
        %v1576 = vsel %vm1575, %v1572, %v1574
        %v1577 = vsel %vm1575, %v1574, %v1572
        %1578 = vrot.lane.b32.xlu0 %v407, 97
        %v1579 = vpop.permute.xlu0 %1578
        %1580 = vrot.lane.b32.xlu0 %v408, 97
        %v1581 = vpop.permute.xlu0 %1580
        %v1582 = vsel %vm1575, %v1579, %v1581
        %v1583 = vsel %vm1575, %v1581, %v1579
        %s1584 = sld [smem:[#allocation2 + $0x25]]
        %s1585 = sld [smem:[#allocation2 + $0x56]]
        %v1586 = vstv %s1584
        %v1587 = vmul.f32 %v1576, %v1586
        %v1588 = vmul.f32 %v1577, %v1586
        %v1589 = vstv %s1585
        %v1590 = vmul.f32 %v1582, %v1589
        %v1591 = vmul.f32 %v1583, %v1589
        %v1592 = vadd.f32 %v1587, %v1590
        %v1593 = vadd.f32 %v1588, %v1591
        %v1594 = vmul.f32 %v1592, %v519
        %v1595 = vmul.f32 %v1593, %v523
        %v1596 = vadd.f32 %v1569, %v1594
        %v1597 = vadd.f32 %v1570, %v1595
        %1598 = vrot.lane.b32.xlu0 %v391, 96
        %v1599 = vpop.permute.xlu0 %1598
        %1600 = vrot.lane.b32.xlu0 %v392, 96
        %v1601 = vpop.permute.xlu0 %1600
        %vm1602 = vcmp.lt.s32.totalorder %v414, 96
        %v1603 = vsel %vm1602, %v1599, %v1601
        %v1604 = vsel %vm1602, %v1601, %v1599
        %1605 = vrot.lane.b32.xlu0 %v407, 96
        %v1606 = vpop.permute.xlu0 %1605
        %1607 = vrot.lane.b32.xlu0 %v408, 96
        %v1608 = vpop.permute.xlu0 %1607
        %v1609 = vsel %vm1602, %v1606, %v1608
        %v1610 = vsel %vm1602, %v1608, %v1606
        %s1611 = sld [smem:[#allocation2 + $0x26]]
        %s1612 = sld [smem:[#allocation2 + $0x57]]
        %v1613 = vstv %s1611
        %v1614 = vmul.f32 %v1603, %v1613
        %v1615 = vmul.f32 %v1604, %v1613
        %v1616 = vstv %s1612
        %v1617 = vmul.f32 %v1609, %v1616
        %v1618 = vmul.f32 %v1610, %v1616
        %v1619 = vadd.f32 %v1614, %v1617
        %v1620 = vadd.f32 %v1615, %v1618
        %v1621 = vmul.f32 %v1619, %v559
        %v1622 = vmul.f32 %v1620, %v563
        %v1623 = vadd.f32 %v1596, %v1621
        %v1624 = vadd.f32 %v1597, %v1622
        %1625 = vrot.lane.b32.xlu0 %v391, 95
        %v1626 = vpop.permute.xlu0 %1625
        %1627 = vrot.lane.b32.xlu0 %v392, 95
        %v1628 = vpop.permute.xlu0 %1627
        %vm1629 = vcmp.lt.s32.totalorder %v414, 95
        %v1630 = vsel %vm1629, %v1626, %v1628
        %v1631 = vsel %vm1629, %v1628, %v1626
        %1632 = vrot.lane.b32.xlu0 %v407, 95
        %v1633 = vpop.permute.xlu0 %1632
        %1634 = vrot.lane.b32.xlu0 %v408, 95
        %v1635 = vpop.permute.xlu0 %1634
        %v1636 = vsel %vm1629, %v1633, %v1635
        %v1637 = vsel %vm1629, %v1635, %v1633
        %s1638 = sld [smem:[#allocation2 + $0x27]]
        %s1639 = sld [smem:[#allocation2 + $0x58]]
        %v1640 = vstv %s1638
        %v1641 = vmul.f32 %v1630, %v1640
        %v1642 = vmul.f32 %v1631, %v1640
        %v1643 = vstv %s1639
        %v1644 = vmul.f32 %v1636, %v1643
        %v1645 = vmul.f32 %v1637, %v1643
        %v1646 = vadd.f32 %v1641, %v1644
        %v1647 = vadd.f32 %v1642, %v1645
        %v1648 = vmul.f32 %v1646, %v599
        %v1649 = vmul.f32 %v1647, %v603
        %v1650 = vadd.f32 %v1623, %v1648
        %v1651 = vadd.f32 %v1624, %v1649
        %1652 = vrot.lane.b32.xlu0 %v391, 94
        %v1653 = vpop.permute.xlu0 %1652
        %1654 = vrot.lane.b32.xlu0 %v392, 94
        %v1655 = vpop.permute.xlu0 %1654
        %vm1656 = vcmp.lt.s32.totalorder %v414, 94
        %v1657 = vsel %vm1656, %v1653, %v1655
        %v1658 = vsel %vm1656, %v1655, %v1653
        %1659 = vrot.lane.b32.xlu0 %v407, 94
        %v1660 = vpop.permute.xlu0 %1659
        %1661 = vrot.lane.b32.xlu0 %v408, 94
        %v1662 = vpop.permute.xlu0 %1661
        %v1663 = vsel %vm1656, %v1660, %v1662
        %v1664 = vsel %vm1656, %v1662, %v1660
        %s1665 = sld [smem:[#allocation2 + $0x28]]
        %s1666 = sld [smem:[#allocation2 + $0x59]]
        %v1667 = vstv %s1665
        %v1668 = vmul.f32 %v1657, %v1667
        %v1669 = vmul.f32 %v1658, %v1667
        %v1670 = vstv %s1666
        %v1671 = vmul.f32 %v1663, %v1670
        %v1672 = vmul.f32 %v1664, %v1670
        %v1673 = vadd.f32 %v1668, %v1671
        %v1674 = vadd.f32 %v1669, %v1672
        %v1675 = vmul.f32 %v1673, %v639
        %v1676 = vmul.f32 %v1674, %v643
        %v1677 = vadd.f32 %v1650, %v1675
        %v1678 = vadd.f32 %v1651, %v1676
        %1679 = vrot.lane.b32.xlu0 %v391, 93
        %v1680 = vpop.permute.xlu0 %1679
        %1681 = vrot.lane.b32.xlu0 %v392, 93
        %v1682 = vpop.permute.xlu0 %1681
        %vm1683 = vcmp.lt.s32.totalorder %v414, 93
        %v1684 = vsel %vm1683, %v1680, %v1682
        %v1685 = vsel %vm1683, %v1682, %v1680
        %1686 = vrot.lane.b32.xlu0 %v407, 93
        %v1687 = vpop.permute.xlu0 %1686
        %1688 = vrot.lane.b32.xlu0 %v408, 93
        %v1689 = vpop.permute.xlu0 %1688
        %v1690 = vsel %vm1683, %v1687, %v1689
        %v1691 = vsel %vm1683, %v1689, %v1687
        %s1692 = sld [smem:[#allocation2 + $0x29]]
        %s1693 = sld [smem:[#allocation2 + $0x5a]]
        %v1694 = vstv %s1692
        %v1695 = vmul.f32 %v1684, %v1694
        %v1696 = vmul.f32 %v1685, %v1694
        %v1697 = vstv %s1693
        %v1698 = vmul.f32 %v1690, %v1697
        %v1699 = vmul.f32 %v1691, %v1697
        %v1700 = vadd.f32 %v1695, %v1698
        %v1701 = vadd.f32 %v1696, %v1699
        %v1702 = vmul.f32 %v1700, %v679
        %v1703 = vmul.f32 %v1701, %v683
        %v1704 = vadd.f32 %v1677, %v1702
        %v1705 = vadd.f32 %v1678, %v1703
        %s1706 = scalar_lea.vmem [#allocation8], 5
        %v1707 = vld [vmem:[%s1706] ss:$8 sm:$0x3]
        %v1709 = vlaneseq
        %v1710 = vshrl.u32 %v1709, 7
        %v1711 = vsub.s32 0, %v1710
        %v1712 = vrot.slane %v1707, %v1711
        %v1713 = vlaneseq
        %v1714 = vshrl.u32 %v1713, 7
        %v1715 = vsub.s32 1, %v1714
        %v1716 = vrot.slane %v1707, %v1715
        %v1719 = vmul.f32 %v1704, %v1712
        %v1720 = vmul.f32 %v1705, %v1716
        %v1721 = vadd.f32 %v1515, %v1719
        %v1722 = vadd.f32 %v1516, %v1720
        %1723 = vrot.lane.b32.xlu0 %v391, 83
        %v1724 = vpop.permute.xlu0 %1723
        %1725 = vrot.lane.b32.xlu0 %v392, 83
        %v1726 = vpop.permute.xlu0 %1725
        %vm1727 = vcmp.lt.s32.totalorder %v414, 83
        %v1728 = vsel %vm1727, %v1724, %v1726
        %v1729 = vsel %vm1727, %v1726, %v1724
        %1730 = vrot.lane.b32.xlu0 %v407, 83
        %v1731 = vpop.permute.xlu0 %1730
        %1732 = vrot.lane.b32.xlu0 %v408, 83
        %v1733 = vpop.permute.xlu0 %1732
        %v1734 = vsel %vm1727, %v1731, %v1733
        %v1735 = vsel %vm1727, %v1733, %v1731
        %s1736 = sld [smem:[#allocation2 + $0x2a]]
        %s1737 = sld [smem:[#allocation2 + $0x5b]]
        %v1738 = vstv %s1736
        %v1739 = vmul.f32 %v1728, %v1738
        %v1740 = vmul.f32 %v1729, %v1738
        %v1741 = vstv %s1737
        %v1742 = vmul.f32 %v1734, %v1741
        %v1743 = vmul.f32 %v1735, %v1741
        %v1744 = vadd.f32 %v1739, %v1742
        %v1745 = vadd.f32 %v1740, %v1743
        %v1746 = vmul.f32 %v1744, %v439
        %v1747 = vmul.f32 %v1745, %v443
        %v1748 = vadd.f32 %v1746, 0.0
        %v1749 = vadd.f32 %v1747, 0.0
        %1750 = vrot.lane.b32.xlu0 %v391, 82
        %v1751 = vpop.permute.xlu0 %1750
        %1752 = vrot.lane.b32.xlu0 %v392, 82
        %v1753 = vpop.permute.xlu0 %1752
        %vm1754 = vcmp.lt.s32.totalorder %v414, 82
        %v1755 = vsel %vm1754, %v1751, %v1753
        %v1756 = vsel %vm1754, %v1753, %v1751
        %1757 = vrot.lane.b32.xlu0 %v407, 82
        %v1758 = vpop.permute.xlu0 %1757
        %1759 = vrot.lane.b32.xlu0 %v408, 82
        %v1760 = vpop.permute.xlu0 %1759
        %v1761 = vsel %vm1754, %v1758, %v1760
        %v1762 = vsel %vm1754, %v1760, %v1758
        %s1763 = sld [smem:[#allocation2 + $0x2b]]
        %s1764 = sld [smem:[#allocation2 + $0x5c]]
        %v1765 = vstv %s1763
        %v1766 = vmul.f32 %v1755, %v1765
        %v1767 = vmul.f32 %v1756, %v1765
        %v1768 = vstv %s1764
        %v1769 = vmul.f32 %v1761, %v1768
        %v1770 = vmul.f32 %v1762, %v1768
        %v1771 = vadd.f32 %v1766, %v1769
        %v1772 = vadd.f32 %v1767, %v1770
        %v1773 = vmul.f32 %v1771, %v479
        %v1774 = vmul.f32 %v1772, %v483
        %v1775 = vadd.f32 %v1748, %v1773
        %v1776 = vadd.f32 %v1749, %v1774
        %1777 = vrot.lane.b32.xlu0 %v391, 81
        %v1778 = vpop.permute.xlu0 %1777
        %1779 = vrot.lane.b32.xlu0 %v392, 81
        %v1780 = vpop.permute.xlu0 %1779
        %vm1781 = vcmp.lt.s32.totalorder %v414, 81
        %v1782 = vsel %vm1781, %v1778, %v1780
        %v1783 = vsel %vm1781, %v1780, %v1778
        %1784 = vrot.lane.b32.xlu0 %v407, 81
        %v1785 = vpop.permute.xlu0 %1784
        %1786 = vrot.lane.b32.xlu0 %v408, 81
        %v1787 = vpop.permute.xlu0 %1786
        %v1788 = vsel %vm1781, %v1785, %v1787
        %v1789 = vsel %vm1781, %v1787, %v1785
        %s1790 = sld [smem:[#allocation2 + $0x2c]]
        %s1791 = sld [smem:[#allocation2 + $0x5d]]
        %v1792 = vstv %s1790
        %v1793 = vmul.f32 %v1782, %v1792
        %v1794 = vmul.f32 %v1783, %v1792
        %v1795 = vstv %s1791
        %v1796 = vmul.f32 %v1788, %v1795
        %v1797 = vmul.f32 %v1789, %v1795
        %v1798 = vadd.f32 %v1793, %v1796
        %v1799 = vadd.f32 %v1794, %v1797
        %v1800 = vmul.f32 %v1798, %v519
        %v1801 = vmul.f32 %v1799, %v523
        %v1802 = vadd.f32 %v1775, %v1800
        %v1803 = vadd.f32 %v1776, %v1801
        %1804 = vrot.lane.b32.xlu0 %v391, 80
        %v1805 = vpop.permute.xlu0 %1804
        %1806 = vrot.lane.b32.xlu0 %v392, 80
        %v1807 = vpop.permute.xlu0 %1806
        %vm1808 = vcmp.lt.s32.totalorder %v414, 80
        %v1809 = vsel %vm1808, %v1805, %v1807
        %v1810 = vsel %vm1808, %v1807, %v1805
        %1811 = vrot.lane.b32.xlu0 %v407, 80
        %v1812 = vpop.permute.xlu0 %1811
        %1813 = vrot.lane.b32.xlu0 %v408, 80
        %v1814 = vpop.permute.xlu0 %1813
        %v1815 = vsel %vm1808, %v1812, %v1814
        %v1816 = vsel %vm1808, %v1814, %v1812
        %s1817 = sld [smem:[#allocation2 + $0x2d]]
        %s1818 = sld [smem:[#allocation2 + $0x5e]]
        %v1819 = vstv %s1817
        %v1820 = vmul.f32 %v1809, %v1819
        %v1821 = vmul.f32 %v1810, %v1819
        %v1822 = vstv %s1818
        %v1823 = vmul.f32 %v1815, %v1822
        %v1824 = vmul.f32 %v1816, %v1822
        %v1825 = vadd.f32 %v1820, %v1823
        %v1826 = vadd.f32 %v1821, %v1824
        %v1827 = vmul.f32 %v1825, %v559
        %v1828 = vmul.f32 %v1826, %v563
        %v1829 = vadd.f32 %v1802, %v1827
        %v1830 = vadd.f32 %v1803, %v1828
        %1831 = vrot.lane.b32.xlu0 %v391, 79
        %v1832 = vpop.permute.xlu0 %1831
        %1833 = vrot.lane.b32.xlu0 %v392, 79
        %v1834 = vpop.permute.xlu0 %1833
        %vm1835 = vcmp.lt.s32.totalorder %v414, 79
        %v1836 = vsel %vm1835, %v1832, %v1834
        %v1837 = vsel %vm1835, %v1834, %v1832
        %1838 = vrot.lane.b32.xlu0 %v407, 79
        %v1839 = vpop.permute.xlu0 %1838
        %1840 = vrot.lane.b32.xlu0 %v408, 79
        %v1841 = vpop.permute.xlu0 %1840
        %v1842 = vsel %vm1835, %v1839, %v1841
        %v1843 = vsel %vm1835, %v1841, %v1839
        %s1844 = sld [smem:[#allocation2 + $0x2e]]
        %s1845 = sld [smem:[#allocation2 + $0x5f]]
        %v1846 = vstv %s1844
        %v1847 = vmul.f32 %v1836, %v1846
        %v1848 = vmul.f32 %v1837, %v1846
        %v1849 = vstv %s1845
        %v1850 = vmul.f32 %v1842, %v1849
        %v1851 = vmul.f32 %v1843, %v1849
        %v1852 = vadd.f32 %v1847, %v1850
        %v1853 = vadd.f32 %v1848, %v1851
        %v1854 = vmul.f32 %v1852, %v599
        %v1855 = vmul.f32 %v1853, %v603
        %v1856 = vadd.f32 %v1829, %v1854
        %v1857 = vadd.f32 %v1830, %v1855
        %1858 = vrot.lane.b32.xlu0 %v391, 78
        %v1859 = vpop.permute.xlu0 %1858
        %1860 = vrot.lane.b32.xlu0 %v392, 78
        %v1861 = vpop.permute.xlu0 %1860
        %vm1862 = vcmp.lt.s32.totalorder %v414, 78
        %v1863 = vsel %vm1862, %v1859, %v1861
        %v1864 = vsel %vm1862, %v1861, %v1859
        %1865 = vrot.lane.b32.xlu0 %v407, 78
        %v1866 = vpop.permute.xlu0 %1865
        %1867 = vrot.lane.b32.xlu0 %v408, 78
        %v1868 = vpop.permute.xlu0 %1867
        %v1869 = vsel %vm1862, %v1866, %v1868
        %v1870 = vsel %vm1862, %v1868, %v1866
        %s1871 = sld [smem:[#allocation2 + $0x2f]]
        %s1872 = sld [smem:[#allocation2 + $0x60]]
        %v1873 = vstv %s1871
        %v1874 = vmul.f32 %v1863, %v1873
        %v1875 = vmul.f32 %v1864, %v1873
        %v1876 = vstv %s1872
        %v1877 = vmul.f32 %v1869, %v1876
        %v1878 = vmul.f32 %v1870, %v1876
        %v1879 = vadd.f32 %v1874, %v1877
        %v1880 = vadd.f32 %v1875, %v1878
        %v1881 = vmul.f32 %v1879, %v639
        %v1882 = vmul.f32 %v1880, %v643
        %v1883 = vadd.f32 %v1856, %v1881
        %v1884 = vadd.f32 %v1857, %v1882
        %1885 = vrot.lane.b32.xlu0 %v391, 77
        %v1886 = vpop.permute.xlu0 %1885
        %1887 = vrot.lane.b32.xlu0 %v392, 77
        %v1888 = vpop.permute.xlu0 %1887
        %vm1889 = vcmp.lt.s32.totalorder %v414, 77
        %v1890 = vsel %vm1889, %v1886, %v1888
        %v1891 = vsel %vm1889, %v1888, %v1886
        %1892 = vrot.lane.b32.xlu0 %v407, 77
        %v1893 = vpop.permute.xlu0 %1892
        %1894 = vrot.lane.b32.xlu0 %v408, 77
        %v1895 = vpop.permute.xlu0 %1894
        %v1896 = vsel %vm1889, %v1893, %v1895
        %v1897 = vsel %vm1889, %v1895, %v1893
        %s1898 = sld [smem:[#allocation2 + $0x30]]
        %s1899 = sld [smem:[#allocation2 + $0x61]]
        %v1900 = vstv %s1898
        %v1901 = vmul.f32 %v1890, %v1900
        %v1902 = vmul.f32 %v1891, %v1900
        %v1903 = vstv %s1899
        %v1904 = vmul.f32 %v1896, %v1903
        %v1905 = vmul.f32 %v1897, %v1903
        %v1906 = vadd.f32 %v1901, %v1904
        %v1907 = vadd.f32 %v1902, %v1905
        %v1908 = vmul.f32 %v1906, %v679
        %v1909 = vmul.f32 %v1907, %v683
        %v1910 = vadd.f32 %v1883, %v1908
        %v1911 = vadd.f32 %v1884, %v1909
        %s1912 = scalar_lea.vmem [#allocation8], 6
        %v1913 = vld [vmem:[%s1912] ss:$8 sm:$0x3]
        %v1915 = vlaneseq
        %v1916 = vshrl.u32 %v1915, 7
        %v1917 = vsub.s32 0, %v1916
        %v1918 = vrot.slane %v1913, %v1917
        %v1919 = vlaneseq
        %v1920 = vshrl.u32 %v1919, 7
        %v1921 = vsub.s32 1, %v1920
        %v1922 = vrot.slane %v1913, %v1921
        %v1925 = vmul.f32 %v1910, %v1918
        %v1926 = vmul.f32 %v1911, %v1922
        %v1927 = vadd.f32 %v1721, %v1925
        %v1928 = vadd.f32 %v1722, %v1926
        %s1929 = sld [smem:[#allocation7]]
        %v1930 = vstv %s1929
        %v1931 = vmul.f32 %v1927, %v1930
        %v1932 = vmul.f32 %v1928, %v1930
        %s1933 = sld [smem:[#allocation7 + $0x1]]
        %v1934 = vstv %s1933
        %v1935 = vadd.f32 %v1931, %v1934
        %v1936 = vadd.f32 %v1932, %v1934
        %v1937 = vsub.f32 0.0, %v1935
        %v1938 = vsub.f32 0.0, %v1936
        %v1939 = vmul.f32 %v1937, 1.442695
        %v1940 = vpow.pop %v1939
        %v1941 = vmul.f32 %v1938, 1.442695
        %v1942 = vpow.pop %v1941
        %v1943 = vadd.f32 %v1940, 1.0
        %v1944 = vadd.f32 %v1942, 1.0
        %v1945 = vrcp.pop %v1943
        %v1946 = vrcp.pop %v1944
        %v1947 = vld [vmem:[%s263] sm:$0xff]
        %v1948 = vld [vmem:[%s263 + $0x8] sm:$0xff]
        %v1949 = vld [vmem:[%s263 + $0x10] sm:$0xff]
        %v1950 = vld [vmem:[%s263 + $0x18] sm:$0xff]
        %v1951 = vld [vmem:[%s263 + $0x20] sm:$0xff]
        %v1952 = vld [vmem:[%s263 + $0x28] sm:$0xff]
        %v1953 = vlaneseq
        %v1954 = vshrl.u32 %v1953, 7
        %v1955 = vsub.s32 0, %v1954
        %v1956 = vrot.slane %v1945, %v1955
        %v1957 = vlaneseq
        %v1958 = vshrl.u32 %v1957, 7
        %v1959 = vsub.s32 0, %v1958
        %v1960 = vrot.slane %v1946, %v1959
        %v1961 = vmul.f32 %v1947, %v1956
        %v1962 = vmul.f32 %v1948, %v1960
        %v1963 = vmul.f32 %v1949, %v1956
        %v1964 = vmul.f32 %v1950, %v1960
        %v1965 = vmul.f32 %v1951, %v1956
        %v1966 = vmul.f32 %v1952, %v1960
        %v1967 = vmul.f32 %v377, %v1956
        %v1968 = vmul.f32 %v378, %v1960
        %1969 = vst [vmem:[%s290] sm:$0xff] %v1961
        %1970 = vst [vmem:[%s290 + $0x8] sm:$0xff] %v1962
        %1971 = vst [vmem:[%s290 + $0x10] sm:$0xff] %v1963
        %1972 = vst [vmem:[%s290 + $0x18] sm:$0xff] %v1964
        %1973 = vst [vmem:[%s290 + $0x20] sm:$0xff] %v1965
        %1974 = vst [vmem:[%s290 + $0x28] sm:$0xff] %v1966
        %1975 = vst [vmem:[%s290 + $0x30] sm:$0xff] %v1967
        %1976 = vst [vmem:[%s290 + $0x38] sm:$0xff] %v1968
        %s1977 = sand.u32 %s141, 1
        %s1978 = scalar_lea.sflag [#allocation4], %s1977
        %s1979 = sand.u32 %s141, 1
        %s1980 = smul.addr %s1979, 64
        %s1981 = scalar_lea.vmem [#allocation12], %s1980
        // Predicated region
        $region61: #{tpu_custom_call.1} parent=39 // pred_check
          %p1982 = pneg %p151
        $region62: #{tpu_custom_call.1} parent=39 // pred_check_branch
          %1984 = sbr.rel (%p1982) target = $region64
        $region63: #{tpu_custom_call.1} parent=39 // pred_region
          %s1986 = ssub.s32 1024, 1024
          %1987 = vsyncadd %s1978, %s1986
          %s1988 = smul.addr %s23, 8
          %s1989 = smul.addr %s1988, 128
          %s1990 = scalar_lea.hbm %s5, %s1989
          %s1991 = sshll.u32 %s1981, 4
          %s1992 = int_to_ptr.vmem [resolvable:$true] %s1991
          %1997 = dma.vmem_to_hbm [thread:$0]  %s1992, 1024, %s1990, %s1978, 256, 256, 16
        $region64: #{tpu_custom_call.1} parent=39 // pred_fallthru
          _
      $region40: #{tpu_custom_call.1} parent=5 // pred_fallthru
        _
      %p1998 = scmp.le.s32.totalorder 2, %s18
      // Predicated region
      $region65: #{tpu_custom_call.1} parent=5 // pred_check
        %p1999 = pneg %p1998
      $region66: #{tpu_custom_call.1} parent=5 // pred_check_branch
        %2001 = sbr.rel (%p1999) target = $region68
      $region67: #{tpu_custom_call.1} parent=5 // pred_region
        %s2002 = ssub.s32 %s18, 2
        // Predicated region
        $region69: #{tpu_custom_call.1} parent=67 // pred_check
          %p2003 = pneg %p157
        $region70: #{tpu_custom_call.1} parent=67 // pred_check_branch
          %2005 = sbr.rel (%p2003) target = $region72
        $region71: #{tpu_custom_call.1} parent=67 // pred_region
          %s2006 = sand.u32 %s142, 1
          %s2007 = scalar_lea.sflag [#allocation4], %s2006
          %s2008 = sand.u32 %s142, 1
          %s2009 = smul.addr %s2008, 64
          %s2010 = scalar_lea.vmem [#allocation12], %s2009
          %2011 = dma.done %s2007, 1024
        $region72: #{tpu_custom_call.1} parent=67 // pred_fallthru
          _
      $region68: #{tpu_custom_call.1} parent=5 // pred_fallthru
        _
    $region6: #{tpu_custom_call.1} parent=1 // loop_footer
      %s22 = sadd.s32 1, %s18
    $region7: #{tpu_custom_call.1} parent=1 // loop_footer_branch
      %17 = sbr.rel target = $region3
    $region8: #{tpu_custom_call.1} parent=1 // loop_exit
      _
    %2012 = vsyncpa [#allocation3], 1
    %s2013 = scalar_lea.sflag [#allocation3], 1
    %2014 = vsyncpa %s2013, 1
    %2015 = vsyncpa [#allocation10], 1
    %2016 = vsyncpa [#allocation4], 1
    %s2017 = scalar_lea.sflag [#allocation4], 1
    %2018 = vsyncpa %s2017, 1
    %2019 = vsyncpa [#allocation5], 1
    %s2020 = scalar_lea.sflag [#allocation5], 1
    %2021 = vsyncpa %s2020, 1
    %2022 = vsyncpa [#allocation6], 1
    %s2023 = scalar_lea.sflag [#allocation6], 1
    %2024 = vsyncpa %s2023, 1

</llo_original>
